<compile_context>
chip_gen: v7x
topology: tpu7x:2x2x1
jax: 0.10.0
libtpu: 0.0.40
codegen_flags: <defaults>
</compile_context>

<pallas_src>
import functools

import jax
import jax.numpy as jnp
from jax import lax
from jax.experimental import pallas as pl
from jax.experimental.pallas import tpu as pltpu


def _round_up(x, m):
    return (x + m - 1) // m * m


# ------------------------------ fused kernel ---------------------------------
def _gru_fused_kernel(
    x_ref,          # (T*Bp, D)       time-major, batch padded to Bp (row = t*Bp + b)
    w_ih0_ref,      # (D, 3*Hp)       layer-0 input weights, gates fused on lanes
    w_hh0_ref,      # (Hp, 3*Hp)
    b_pre0_ref,     # (1, 3*Hp)       b_ih + [b_hh_r, b_hh_z, 0]
    b_hn0_ref,      # (1, Hp)         b_hh_n (kept separate: multiplied by r)
    w_ih_r_ref,     # (L-1, Hp, 3*Hp) layers >= 1
    w_hh_r_ref,     # (L-1, Hp, 3*Hp)
    b_pre_r_ref,    # (L-1, 1, 3*Hp)
    b_hn_r_ref,     # (L-1, 1, Hp)
    w_fc_ref,       # (Hp, O)
    b_fc_ref,       # (1, O)
    out_ref,        # (Bp, O)
    gi_ref,         # scratch (T*Bp, 3*Hp): hoisted input projections of current layer
    seq_ref,        # scratch (T*Bp, Hp):   output sequence of current layer
    *,
    seq_len,
    batch_pad,
    num_layers,
):
    Hp = w_hh0_ref.shape[0]
    Bp = batch_pad
    T = seq_len

    def run_layer(w_hh, b_hn, write_seq):
        """Recurrent part of one layer; gi_ref already holds x @ W_ih + bias."""

        def step(t, h):
            start = t * Bp                                   # multiple of 8 (Bp=8)
            gi_t = gi_ref[pl.ds(start, Bp), :]               # (Bp, 3Hp)
            gh = jnp.dot(h, w_hh, preferred_element_type=jnp.float32)  # (Bp, 3Hp)
            r = jax.nn.sigmoid(gi_t[:, 0:Hp] + gh[:, 0:Hp])
            z = jax.nn.sigmoid(gi_t[:, Hp:2 * Hp] + gh[:, Hp:2 * Hp])
            n = jnp.tanh(gi_t[:, 2 * Hp:] + r * (gh[:, 2 * Hp:] + b_hn))
            h_new = (1.0 - z) * n + z * h
            if write_seq:
                seq_ref[pl.ds(start, Bp), :] = h_new
            return h_new

        h0 = jnp.zeros((Bp, Hp), jnp.float32)
        return lax.fori_loop(0, T, step, h0, unroll=True)

    # ---- layer 0: one big hoisted input-projection matmul, then the recurrence.
    gi_ref[...] = (
        jnp.dot(x_ref[...], w_ih0_ref[...], preferred_element_type=jnp.float32)
        + b_pre0_ref[...]
    )
    h = run_layer(w_hh0_ref[...], b_hn0_ref[...], write_seq=(num_layers > 1))

    # ---- layers 1..L-1 (static Python loop; reads previous layer's sequence from VMEM).
    for l in range(num_layers - 1):
        gi_ref[...] = (
            jnp.dot(seq_ref[...], w_ih_r_ref[l], preferred_element_type=jnp.float32)
            + b_pre_r_ref[l]
        )
        last = (l == num_layers - 2)
        h = run_layer(w_hh_r_ref[l], b_hn_r_ref[l], write_seq=not last)

    # ---- fc head on the last timestep's hidden state (only HBM write of the kernel).
    out_ref[...] = (
        jnp.dot(h, w_fc_ref[...], preferred_element_type=jnp.float32) + b_fc_ref[...]
    ).astype(out_ref.dtype)


def _vmem_spec(shape):
    nd = len(shape)
    return pl.BlockSpec(shape, lambda *args, _nd=nd: (0,) * _nd)


# ------------------------------ forward wrapper -------------------------------
@functools.partial(jax.jit, static_argnames=("num_layers",))
def gru_forward(x_bf, packed, num_layers):
    """x_bf: (B, T, input_dim) batch_first. Returns (B, output_dim)."""
    B, T, D = x_bf.shape
    Hp = packed["w_hh0"].shape[0]
    O = packed["w_fc"].shape[1]
    Bp = _round_up(max(B, 1), 8)

    # time-major, batch padded to a full sublane tile, flattened so row = t*Bp + b
    x_tm = jnp.transpose(x_bf, (1, 0, 2)).astype(jnp.float32)     # (T, B, D)
    x_tm = jnp.pad(x_tm, ((0, 0), (0, Bp - B), (0, 0)))
    x2d = x_tm.reshape(T * Bp, D)

    kernel = functools.partial(
        _gru_fused_kernel, seq_len=T, batch_pad=Bp, num_layers=num_layers)

    args = (
        x2d,
        packed["w_ih0"], packed["w_hh0"], packed["b_pre0"], packed["b_hn0"],
        packed["w_ih_rest"], packed["w_hh_rest"],
        packed["b_pre_rest"], packed["b_hn_rest"],
        packed["w_fc"], packed["b_fc"],
    )

    out = pl.pallas_call(
        kernel,
        out_shape=jax.ShapeDtypeStruct((Bp, O), jnp.float32),
        grid=(),
        in_specs=[_vmem_spec(a.shape) for a in args],
        out_specs=_vmem_spec((Bp, O)),
        scratch_shapes=[
            pltpu.VMEM((T * Bp, 3 * Hp), jnp.float32),   # gi (hoisted projections)
            pltpu.VMEM((T * Bp, Hp), jnp.float32),       # per-layer output sequence
        ],
    )(*args)
    return out[:B]


# ------------------------------ parameter packing ------------------------------
def _pack_gate_matrix(w_nat, h, hp, in_dim, in_pad):
    """w_nat: (3h, in_dim) PyTorch (r,z,n) rows -> (in_pad, 3*hp) for x @ W."""
    w = w_nat.T                                              # (in_dim, 3h)
    gates = [w[:, g * h:(g + 1) * h] for g in range(3)]
    gates = [jnp.pad(g_, ((0, in_pad - in_dim), (0, hp - h))) for g_ in gates]
    return jnp.concatenate(gates, axis=1)


def _pack_bias_pre(b_ih, b_hh, h, hp):
    """b_ih + [b_hh_r, b_hh_z, 0], padded per gate -> (1, 3*hp)."""
    pieces = []
    for g in range(3):
        b = b_ih[g * h:(g + 1) * h]
        if g < 2:
            b = b + b_hh[g * h:(g + 1) * h]
        pieces.append(jnp.pad(b, (0, hp - h)))
    return jnp.concatenate(pieces)[None, :]


def _pack_bias_hn(b_hh, h, hp):
    return jnp.pad(b_hh[2 * h:3 * h], (0, hp - h))[None, :]


def pack_params(nat, lane=128):
    gru = nat["gru"]
    L = len(gru)
    H = gru[0]["w_hh"].shape[1]
    Hp = _round_up(H, lane)
    D = gru[0]["w_ih"].shape[1]

    def pack_layer(p, in_dim, in_pad):
        return (
            _pack_gate_matrix(p["w_ih"], H, Hp, in_dim, in_pad),
            _pack_gate_matrix(p["w_hh"], H, Hp, H, Hp),
            _pack_bias_pre(p["b_ih"], p["b_hh"], H, Hp),
            _pack_bias_hn(p["b_hh"], H, Hp),
        )

    w_ih0, w_hh0, b_pre0, b_hn0 = pack_layer(gru[0], D, D)

    if L > 1:
        rest = [pack_layer(p, H, Hp) for p in gru[1:]]
        w_ih_rest = jnp.stack([r[0] for r in rest])
        w_hh_rest = jnp.stack([r[1] for r in rest])
        b_pre_rest = jnp.stack([r[2] for r in rest])
        b_hn_rest = jnp.stack([r[3] for r in rest])
    else:  # dummies (unused when num_layers == 1)
        w_ih_rest = jnp.zeros((1, Hp, 3 * Hp), jnp.float32)
        w_hh_rest = jnp.zeros((1, Hp, 3 * Hp), jnp.float32)
        b_pre_rest = jnp.zeros((1, 1, 3 * Hp), jnp.float32)
        b_hn_rest = jnp.zeros((1, 1, Hp), jnp.float32)

    w_fc = jnp.pad(nat["fc"]["w"].T, ((0, Hp - H), (0, 0)))   # (Hp, O), padded rows = 0
    b_fc = nat["fc"]["b"][None, :]                            # (1, O)

    return dict(w_ih0=w_ih0, w_hh0=w_hh0, b_pre0=b_pre0, b_hn0=b_hn0,
                w_ih_rest=w_ih_rest, w_hh_rest=w_hh_rest,
                b_pre_rest=b_pre_rest, b_hn_rest=b_hn_rest,
                w_fc=w_fc, b_fc=b_fc)


# ------------------------------ parameter init ---------------------------------
def init_params(key, input_dim, hidden_dim, output_dim, num_layers):
    """PyTorch-style natural params: w_ih (3H, D_in), w_hh (3H, H), biases (3H,)."""
    bound = 1.0 / (hidden_dim ** 0.5)
    gru = []
    for layer in range(num_layers):
        d_in = input_dim if layer == 0 else hidden_dim
        key, k1, k2, k3, k4 = jax.random.split(key, 5)
        gru.append({
            "w_ih": jax.random.uniform(k1, (3 * hidden_dim, d_in), jnp.float32, -bound, bound),
            "w_hh": jax.random.uniform(k2, (3 * hidden_dim, hidden_dim), jnp.float32, -bound, bound),
            "b_ih": jax.random.uniform(k3, (3 * hidden_dim,), jnp.float32, -bound, bound),
            "b_hh": jax.random.uniform(k4, (3 * hidden_dim,), jnp.float32, -bound, bound),
        })
    key, k5, k6 = jax.random.split(key, 3)
    fc = {
        "w": jax.random.uniform(k5, (output_dim, hidden_dim), jnp.float32, -bound, bound),
        "b": jax.random.uniform(k6, (output_dim,), jnp.float32, -bound, bound),
    }
    return {"gru": gru, "fc": fc}


# ------------------------------ pure-JAX reference ------------------------------
def gru_reference(x, nat):
    """Standard PyTorch GRU equations on the natural (unpacked) parameters."""
    B, T, _ = x.shape
    seq = x
    for p in nat["gru"]:
        H = p["w_hh"].shape[1]
        h = jnp.zeros((B, H), jnp.float32)
        outs = []
        for t in range(T):
            x_t = seq[:, t, :]
            gi = x_t @ p["w_ih"].T + p["b_ih"]
            gh = h @ p["w_hh"].T + p["b_hh"]
            i_r, i_z, i_n = jnp.split(gi, 3, axis=1)
            h_r, h_z, h_n = jnp.split(gh, 3, axis=1)
            r = jax.nn.sigmoid(i_r + h_r)
            z = jax.nn.sigmoid(i_z + h_z)
            n = jnp.tanh(i_n + r * h_n)
            h = (1.0 - z) * n + z * h
            outs.append(h)
        seq = jnp.stack(outs, axis=1)
    return seq[:, -1, :] @ nat["fc"]["w"].T + nat["fc"]["b"]


# ------------------------------------ main --------------------------------------
if __name__ == "__main__":
    # config: input_dim=16, hidden_dim=32, num_layers=2, output_dim=4
    B, T = 2, 8
    INPUT_DIM, HIDDEN_DIM, NUM_LAYERS, OUTPUT_DIM = 16, 32, 2, 4

    key = jax.random.PRNGKey(0)
    key, kx = jax.random.split(key)
    x = jax.random.normal(kx, (B, T, INPUT_DIM), jnp.float32)   # batch_first

    nat_params = init_params(key, INPUT_DIM, HIDDEN_DIM, OUTPUT_DIM, NUM_LAYERS)
    packed = pack_params(nat_params)

    out = gru_forward(x, packed, NUM_LAYERS)
    out = jax.block_until_ready(out)
    assert out.shape == (B, OUTPUT_DIM)

    ref = gru_reference(x, nat_params)
    assert jnp.allclose(out, ref, atol=1e-4, rtol=1e-4), (
        f"mismatch vs reference: max abs diff = {jnp.max(jnp.abs(out - ref))}")

    print("KERNEL_OK")
</pallas_src>

<mosaic_0001>
module attributes {stable_mosaic.version = 11 : i64} {
  func.func @_gru_fused_kernel(%arg0: memref<64x16xf32, #tpu.memory_space<vmem>>, %arg1: memref<16x384xf32, #tpu.memory_space<vmem>>, %arg2: memref<128x384xf32, #tpu.memory_space<vmem>>, %arg3: memref<1x384xf32, #tpu.memory_space<vmem>>, %arg4: memref<1x128xf32, #tpu.memory_space<vmem>>, %arg5: memref<1x128x384xf32, #tpu.memory_space<vmem>>, %arg6: memref<1x128x384xf32, #tpu.memory_space<vmem>>, %arg7: memref<1x1x384xf32, #tpu.memory_space<vmem>>, %arg8: memref<1x1x128xf32, #tpu.memory_space<vmem>>, %arg9: memref<128x4xf32, #tpu.memory_space<vmem>>, %arg10: memref<1x4xf32, #tpu.memory_space<vmem>>, %arg11: memref<8x4xf32, #tpu.memory_space<vmem>>, %arg12: memref<64x384xf32, #tpu.memory_space<vmem>>, %arg13: memref<64x128xf32, #tpu.memory_space<vmem>>) attributes {dimension_semantics = [], scalar_prefetch = 0 : i64, scratch_operands = 2 : i64, tpu.core_type = #tpu.core_type<tc>} {
    %c0 = arith.constant 0 : index
    %c0_0 = arith.constant 0 : index
    %0 = vector.load %arg0[%c0, %c0_0] : memref<64x16xf32, #tpu.memory_space<vmem>>, vector<64x16xf32>
    %c0_1 = arith.constant 0 : index
    %c0_2 = arith.constant 0 : index
    %1 = vector.load %arg1[%c0_1, %c0_2] : memref<16x384xf32, #tpu.memory_space<vmem>>, vector<16x384xf32>
    %cst = arith.constant dense<0.000000e+00> : vector<64x384xf32>
    %2 = tpu.matmul %0, %1, %cst {dimension_numbers = #tpu.dot_dimension_numbers<[1], [0], [0], [1], [0, 0, 1, 1], [], []>} : vector<64x16xf32>, vector<16x384xf32>, vector<64x384xf32> -> vector<64x384xf32>
    %c0_3 = arith.constant 0 : index
    %c0_4 = arith.constant 0 : index
    %3 = vector.load %arg3[%c0_3, %c0_4] : memref<1x384xf32, #tpu.memory_space<vmem>>, vector<1x384xf32>
    %4 = vector.broadcast %3 : vector<1x384xf32> to vector<64x384xf32>
    %5 = arith.addf %2, %4 : vector<64x384xf32>
    %c0_5 = arith.constant 0 : index
    %c0_6 = arith.constant 0 : index
    %6 = vector.load %arg12[%c0_5, %c0_6] : memref<64x384xf32, #tpu.memory_space<vmem>>, vector<64x384xf32>
    tpu.vector_store %arg12[%c0_5, %c0_6], %5 {strides = array<i32>} : memref<64x384xf32, #tpu.memory_space<vmem>>, vector<64x384xf32>,
    %c0_7 = arith.constant 0 : index
    %c0_8 = arith.constant 0 : index
    %7 = vector.load %arg2[%c0_7, %c0_8] : memref<128x384xf32, #tpu.memory_space<vmem>>, vector<128x384xf32>
    %c0_9 = arith.constant 0 : index
    %c0_10 = arith.constant 0 : index
    %8 = vector.load %arg4[%c0_9, %c0_10] : memref<1x128xf32, #tpu.memory_space<vmem>>, vector<1x128xf32>
    %cst_11 = arith.constant 0.000000e+00 : f32
    %9 = vector.broadcast %cst_11 : f32 to vector<8x128xf32>
    %c0_i32 = arith.constant 0 : i32
    %c8_i32 = arith.constant 8 : i32
    %10 = arith.muli %c0_i32, %c8_i32 : i32
    %11 = arith.index_cast %10 : i32 to index
    %c0_12 = arith.constant 0 : index
    %12 = vector.load %arg12[%11, %c0_12] : memref<64x384xf32, #tpu.memory_space<vmem>>, vector<8x384xf32>
    %cst_13 = arith.constant dense<0.000000e+00> : vector<8x384xf32>
    %13 = tpu.matmul %9, %7, %cst_13 {dimension_numbers = #tpu.dot_dimension_numbers<[1], [0], [0], [1], [0, 0, 1, 1], [], []>} : vector<8x128xf32>, vector<128x384xf32>, vector<8x384xf32> -> vector<8x384xf32>
    %14 = vector.extract_strided_slice %12 {offsets = [0, 0], sizes = [8, 128], strides = [1, 1]} : vector<8x384xf32> to vector<8x128xf32>
    %15 = vector.extract_strided_slice %13 {offsets = [0, 0], sizes = [8, 128], strides = [1, 1]} : vector<8x384xf32> to vector<8x128xf32>
    %16 = arith.addf %14, %15 : vector<8x128xf32>
    %17 = arith.negf %16 : vector<8x128xf32>
    %18 = math.exp %17 : vector<8x128xf32>
    %cst_14 = arith.constant 1.000000e+00 : f32
    %19 = vector.broadcast %cst_14 : f32 to vector<8x128xf32>
    %20 = arith.addf %19, %18 : vector<8x128xf32>
    %21 = arith.divf %19, %20 : vector<8x128xf32>
    %22 = vector.extract_strided_slice %12 {offsets = [0, 128], sizes = [8, 128], strides = [1, 1]} : vector<8x384xf32> to vector<8x128xf32>
    %23 = vector.extract_strided_slice %13 {offsets = [0, 128], sizes = [8, 128], strides = [1, 1]} : vector<8x384xf32> to vector<8x128xf32>
    %24 = arith.addf %22, %23 : vector<8x128xf32>
    %25 = arith.negf %24 : vector<8x128xf32>
    %26 = math.exp %25 : vector<8x128xf32>
    %cst_15 = arith.constant 1.000000e+00 : f32
    %27 = vector.broadcast %cst_15 : f32 to vector<8x128xf32>
    %28 = arith.addf %27, %26 : vector<8x128xf32>
    %29 = arith.divf %27, %28 : vector<8x128xf32>
    %30 = vector.extract_strided_slice %12 {offsets = [0, 256], sizes = [8, 128], strides = [1, 1]} : vector<8x384xf32> to vector<8x128xf32>
    %31 = vector.extract_strided_slice %13 {offsets = [0, 256], sizes = [8, 128], strides = [1, 1]} : vector<8x384xf32> to vector<8x128xf32>
    %32 = vector.broadcast %8 : vector<1x128xf32> to vector<8x128xf32>
    %33 = arith.addf %31, %32 : vector<8x128xf32>
    %34 = arith.mulf %21, %33 : vector<8x128xf32>
    %35 = arith.addf %30, %34 : vector<8x128xf32>
    %36 = math.tanh %35 : vector<8x128xf32>
    %cst_16 = arith.constant 1.000000e+00 : f32
    %37 = vector.broadcast %cst_16 : f32 to vector<8x128xf32>
    %38 = arith.subf %37, %29 : vector<8x128xf32>
    %39 = arith.mulf %38, %36 : vector<8x128xf32>
    %40 = arith.mulf %29, %9 : vector<8x128xf32>
    %41 = arith.addf %39, %40 : vector<8x128xf32>
    %42 = arith.index_cast %10 : i32 to index
    %c0_17 = arith.constant 0 : index
    %43 = vector.load %arg13[%42, %c0_17] : memref<64x128xf32, #tpu.memory_space<vmem>>, vector<8x128xf32>
    tpu.vector_store %arg13[%42, %c0_17], %41 {strides = array<i32>} : memref<64x128xf32, #tpu.memory_space<vmem>>, vector<8x128xf32>,
    %c1_i32 = arith.constant 1 : i32
    %c8_i32_18 = arith.constant 8 : i32
    %44 = arith.muli %c1_i32, %c8_i32_18 : i32
    %45 = arith.index_cast %44 : i32 to index
    %c0_19 = arith.constant 0 : index
    %46 = vector.load %arg12[%45, %c0_19] : memref<64x384xf32, #tpu.memory_space<vmem>>, vector<8x384xf32>
    %cst_20 = arith.constant dense<0.000000e+00> : vector<8x384xf32>
    %47 = tpu.matmul %41, %7, %cst_20 {dimension_numbers = #tpu.dot_dimension_numbers<[1], [0], [0], [1], [0, 0, 1, 1], [], []>} : vector<8x128xf32>, vector<128x384xf32>, vector<8x384xf32> -> vector<8x384xf32>
    %48 = vector.extract_strided_slice %46 {offsets = [0, 0], sizes = [8, 128], strides = [1, 1]} : vector<8x384xf32> to vector<8x128xf32>
    %49 = vector.extract_strided_slice %47 {offsets = [0, 0], sizes = [8, 128], strides = [1, 1]} : vector<8x384xf32> to vector<8x128xf32>
    %50 = arith.addf %48, %49 : vector<8x128xf32>
    %51 = arith.negf %50 : vector<8x128xf32>
    %52 = math.exp %51 : vector<8x128xf32>
    %cst_21 = arith.constant 1.000000e+00 : f32
    %53 = vector.broadcast %cst_21 : f32 to vector<8x128xf32>
    %54 = arith.addf %53, %52 : vector<8x128xf32>
    %55 = arith.divf %53, %54 : vector<8x128xf32>
    %56 = vector.extract_strided_slice %46 {offsets = [0, 128], sizes = [8, 128], strides = [1, 1]} : vector<8x384xf32> to vector<8x128xf32>
    %57 = vector.extract_strided_slice %47 {offsets = [0, 128], sizes = [8, 128], strides = [1, 1]} : vector<8x384xf32> to vector<8x128xf32>
    %58 = arith.addf %56, %57 : vector<8x128xf32>
    %59 = arith.negf %58 : vector<8x128xf32>
    %60 = math.exp %59 : vector<8x128xf32>
    %cst_22 = arith.constant 1.000000e+00 : f32
    %61 = vector.broadcast %cst_22 : f32 to vector<8x128xf32>
    %62 = arith.addf %61, %60 : vector<8x128xf32>
    %63 = arith.divf %61, %62 : vector<8x128xf32>
    %64 = vector.extract_strided_slice %46 {offsets = [0, 256], sizes = [8, 128], strides = [1, 1]} : vector<8x384xf32> to vector<8x128xf32>
    %65 = vector.extract_strided_slice %47 {offsets = [0, 256], sizes = [8, 128], strides = [1, 1]} : vector<8x384xf32> to vector<8x128xf32>
    %66 = vector.broadcast %8 : vector<1x128xf32> to vector<8x128xf32>
    %67 = arith.addf %65, %66 : vector<8x128xf32>
    %68 = arith.mulf %55, %67 : vector<8x128xf32>
    %69 = arith.addf %64, %68 : vector<8x128xf32>
    %70 = math.tanh %69 : vector<8x128xf32>
    %cst_23 = arith.constant 1.000000e+00 : f32
    %71 = vector.broadcast %cst_23 : f32 to vector<8x128xf32>
    %72 = arith.subf %71, %63 : vector<8x128xf32>
    %73 = arith.mulf %72, %70 : vector<8x128xf32>
    %74 = arith.mulf %63, %41 : vector<8x128xf32>
    %75 = arith.addf %73, %74 : vector<8x128xf32>
    %76 = arith.index_cast %44 : i32 to index
    %c0_24 = arith.constant 0 : index
    %77 = vector.load %arg13[%76, %c0_24] : memref<64x128xf32, #tpu.memory_space<vmem>>, vector<8x128xf32>
    tpu.vector_store %arg13[%76, %c0_24], %75 {strides = array<i32>} : memref<64x128xf32, #tpu.memory_space<vmem>>, vector<8x128xf32>,
    %c2_i32 = arith.constant 2 : i32
    %c8_i32_25 = arith.constant 8 : i32
    %78 = arith.muli %c2_i32, %c8_i32_25 : i32
    %79 = arith.index_cast %78 : i32 to index
    %c0_26 = arith.constant 0 : index
    %80 = vector.load %arg12[%79, %c0_26] : memref<64x384xf32, #tpu.memory_space<vmem>>, vector<8x384xf32>
    %cst_27 = arith.constant dense<0.000000e+00> : vector<8x384xf32>
    %81 = tpu.matmul %75, %7, %cst_27 {dimension_numbers = #tpu.dot_dimension_numbers<[1], [0], [0], [1], [0, 0, 1, 1], [], []>} : vector<8x128xf32>, vector<128x384xf32>, vector<8x384xf32> -> vector<8x384xf32>
    %82 = vector.extract_strided_slice %80 {offsets = [0, 0], sizes = [8, 128], strides = [1, 1]} : vector<8x384xf32> to vector<8x128xf32>
    %83 = vector.extract_strided_slice %81 {offsets = [0, 0], sizes = [8, 128], strides = [1, 1]} : vector<8x384xf32> to vector<8x128xf32>
    %84 = arith.addf %82, %83 : vector<8x128xf32>
    %85 = arith.negf %84 : vector<8x128xf32>
    %86 = math.exp %85 : vector<8x128xf32>
    %cst_28 = arith.constant 1.000000e+00 : f32
    %87 = vector.broadcast %cst_28 : f32 to vector<8x128xf32>
    %88 = arith.addf %87, %86 : vector<8x128xf32>
    %89 = arith.divf %87, %88 : vector<8x128xf32>
    %90 = vector.extract_strided_slice %80 {offsets = [0, 128], sizes = [8, 128], strides = [1, 1]} : vector<8x384xf32> to vector<8x128xf32>
    %91 = vector.extract_strided_slice %81 {offsets = [0, 128], sizes = [8, 128], strides = [1, 1]} : vector<8x384xf32> to vector<8x128xf32>
    %92 = arith.addf %90, %91 : vector<8x128xf32>
    %93 = arith.negf %92 : vector<8x128xf32>
    %94 = math.exp %93 : vector<8x128xf32>
    %cst_29 = arith.constant 1.000000e+00 : f32
    %95 = vector.broadcast %cst_29 : f32 to vector<8x128xf32>
    %96 = arith.addf %95, %94 : vector<8x128xf32>
    %97 = arith.divf %95, %96 : vector<8x128xf32>
    %98 = vector.extract_strided_slice %80 {offsets = [0, 256], sizes = [8, 128], strides = [1, 1]} : vector<8x384xf32> to vector<8x128xf32>
    %99 = vector.extract_strided_slice %81 {offsets = [0, 256], sizes = [8, 128], strides = [1, 1]} : vector<8x384xf32> to vector<8x128xf32>
    %100 = vector.broadcast %8 : vector<1x128xf32> to vector<8x128xf32>
    %101 = arith.addf %99, %100 : vector<8x128xf32>
    %102 = arith.mulf %89, %101 : vector<8x128xf32>
    %103 = arith.addf %98, %102 : vector<8x128xf32>
    %104 = math.tanh %103 : vector<8x128xf32>
    %cst_30 = arith.constant 1.000000e+00 : f32
    %105 = vector.broadcast %cst_30 : f32 to vector<8x128xf32>
    %106 = arith.subf %105, %97 : vector<8x128xf32>
    %107 = arith.mulf %106, %104 : vector<8x128xf32>
    %108 = arith.mulf %97, %75 : vector<8x128xf32>
    %109 = arith.addf %107, %108 : vector<8x128xf32>
    %110 = arith.index_cast %78 : i32 to index
    %c0_31 = arith.constant 0 : index
    %111 = vector.load %arg13[%110, %c0_31] : memref<64x128xf32, #tpu.memory_space<vmem>>, vector<8x128xf32>
    tpu.vector_store %arg13[%110, %c0_31], %109 {strides = array<i32>} : memref<64x128xf32, #tpu.memory_space<vmem>>, vector<8x128xf32>,
    %c3_i32 = arith.constant 3 : i32
    %c8_i32_32 = arith.constant 8 : i32
    %112 = arith.muli %c3_i32, %c8_i32_32 : i32
    %113 = arith.index_cast %112 : i32 to index
    %c0_33 = arith.constant 0 : index
    %114 = vector.load %arg12[%113, %c0_33] : memref<64x384xf32, #tpu.memory_space<vmem>>, vector<8x384xf32>
    %cst_34 = arith.constant dense<0.000000e+00> : vector<8x384xf32>
    %115 = tpu.matmul %109, %7, %cst_34 {dimension_numbers = #tpu.dot_dimension_numbers<[1], [0], [0], [1], [0, 0, 1, 1], [], []>} : vector<8x128xf32>, vector<128x384xf32>, vector<8x384xf32> -> vector<8x384xf32>
    %116 = vector.extract_strided_slice %114 {offsets = [0, 0], sizes = [8, 128], strides = [1, 1]} : vector<8x384xf32> to vector<8x128xf32>
    %117 = vector.extract_strided_slice %115 {offsets = [0, 0], sizes = [8, 128], strides = [1, 1]} : vector<8x384xf32> to vector<8x128xf32>
    %118 = arith.addf %116, %117 : vector<8x128xf32>
    %119 = arith.negf %118 : vector<8x128xf32>
    %120 = math.exp %119 : vector<8x128xf32>
    %cst_35 = arith.constant 1.000000e+00 : f32
    %121 = vector.broadcast %cst_35 : f32 to vector<8x128xf32>
    %122 = arith.addf %121, %120 : vector<8x128xf32>
    %123 = arith.divf %121, %122 : vector<8x128xf32>
    %124 = vector.extract_strided_slice %114 {offsets = [0, 128], sizes = [8, 128], strides = [1, 1]} : vector<8x384xf32> to vector<8x128xf32>
    %125 = vector.extract_strided_slice %115 {offsets = [0, 128], sizes = [8, 128], strides = [1, 1]} : vector<8x384xf32> to vector<8x128xf32>
    %126 = arith.addf %124, %125 : vector<8x128xf32>
    %127 = arith.negf %126 : vector<8x128xf32>
    %128 = math.exp %127 : vector<8x128xf32>
    %cst_36 = arith.constant 1.000000e+00 : f32
    %129 = vector.broadcast %cst_36 : f32 to vector<8x128xf32>
    %130 = arith.addf %129, %128 : vector<8x128xf32>
    %131 = arith.divf %129, %130 : vector<8x128xf32>
    %132 = vector.extract_strided_slice %114 {offsets = [0, 256], sizes = [8, 128], strides = [1, 1]} : vector<8x384xf32> to vector<8x128xf32>
    %133 = vector.extract_strided_slice %115 {offsets = [0, 256], sizes = [8, 128], strides = [1, 1]} : vector<8x384xf32> to vector<8x128xf32>
    %134 = vector.broadcast %8 : vector<1x128xf32> to vector<8x128xf32>
    %135 = arith.addf %133, %134 : vector<8x128xf32>
    %136 = arith.mulf %123, %135 : vector<8x128xf32>
    %137 = arith.addf %132, %136 : vector<8x128xf32>
    %138 = math.tanh %137 : vector<8x128xf32>
    %cst_37 = arith.constant 1.000000e+00 : f32
    %139 = vector.broadcast %cst_37 : f32 to vector<8x128xf32>
    %140 = arith.subf %139, %131 : vector<8x128xf32>
    %141 = arith.mulf %140, %138 : vector<8x128xf32>
    %142 = arith.mulf %131, %109 : vector<8x128xf32>
    %143 = arith.addf %141, %142 : vector<8x128xf32>
    %144 = arith.index_cast %112 : i32 to index
    %c0_38 = arith.constant 0 : index
    %145 = vector.load %arg13[%144, %c0_38] : memref<64x128xf32, #tpu.memory_space<vmem>>, vector<8x128xf32>
    tpu.vector_store %arg13[%144, %c0_38], %143 {strides = array<i32>} : memref<64x128xf32, #tpu.memory_space<vmem>>, vector<8x128xf32>,
    %c4_i32 = arith.constant 4 : i32
    %c8_i32_39 = arith.constant 8 : i32
    %146 = arith.muli %c4_i32, %c8_i32_39 : i32
    %147 = arith.index_cast %146 : i32 to index
    %c0_40 = arith.constant 0 : index
    %148 = vector.load %arg12[%147, %c0_40] : memref<64x384xf32, #tpu.memory_space<vmem>>, vector<8x384xf32>
    %cst_41 = arith.constant dense<0.000000e+00> : vector<8x384xf32>
    %149 = tpu.matmul %143, %7, %cst_41 {dimension_numbers = #tpu.dot_dimension_numbers<[1], [0], [0], [1], [0, 0, 1, 1], [], []>} : vector<8x128xf32>, vector<128x384xf32>, vector<8x384xf32> -> vector<8x384xf32>
    %150 = vector.extract_strided_slice %148 {offsets = [0, 0], sizes = [8, 128], strides = [1, 1]} : vector<8x384xf32> to vector<8x128xf32>
    %151 = vector.extract_strided_slice %149 {offsets = [0, 0], sizes = [8, 128], strides = [1, 1]} : vector<8x384xf32> to vector<8x128xf32>
    %152 = arith.addf %150, %151 : vector<8x128xf32>
    %153 = arith.negf %152 : vector<8x128xf32>
    %154 = math.exp %153 : vector<8x128xf32>
    %cst_42 = arith.constant 1.000000e+00 : f32
    %155 = vector.broadcast %cst_42 : f32 to vector<8x128xf32>
    %156 = arith.addf %155, %154 : vector<8x128xf32>
    %157 = arith.divf %155, %156 : vector<8x128xf32>
    %158 = vector.extract_strided_slice %148 {offsets = [0, 128], sizes = [8, 128], strides = [1, 1]} : vector<8x384xf32> to vector<8x128xf32>
    %159 = vector.extract_strided_slice %149 {offsets = [0, 128], sizes = [8, 128], strides = [1, 1]} : vector<8x384xf32> to vector<8x128xf32>
    %160 = arith.addf %158, %159 : vector<8x128xf32>
    %161 = arith.negf %160 : vector<8x128xf32>
    %162 = math.exp %161 : vector<8x128xf32>
    %cst_43 = arith.constant 1.000000e+00 : f32
    %163 = vector.broadcast %cst_43 : f32 to vector<8x128xf32>
    %164 = arith.addf %163, %162 : vector<8x128xf32>
    %165 = arith.divf %163, %164 : vector<8x128xf32>
    %166 = vector.extract_strided_slice %148 {offsets = [0, 256], sizes = [8, 128], strides = [1, 1]} : vector<8x384xf32> to vector<8x128xf32>
    %167 = vector.extract_strided_slice %149 {offsets = [0, 256], sizes = [8, 128], strides = [1, 1]} : vector<8x384xf32> to vector<8x128xf32>
    %168 = vector.broadcast %8 : vector<1x128xf32> to vector<8x128xf32>
    %169 = arith.addf %167, %168 : vector<8x128xf32>
    %170 = arith.mulf %157, %169 : vector<8x128xf32>
    %171 = arith.addf %166, %170 : vector<8x128xf32>
    %172 = math.tanh %171 : vector<8x128xf32>
    %cst_44 = arith.constant 1.000000e+00 : f32
    %173 = vector.broadcast %cst_44 : f32 to vector<8x128xf32>
    %174 = arith.subf %173, %165 : vector<8x128xf32>
    %175 = arith.mulf %174, %172 : vector<8x128xf32>
    %176 = arith.mulf %165, %143 : vector<8x128xf32>
    %177 = arith.addf %175, %176 : vector<8x128xf32>
    %178 = arith.index_cast %146 : i32 to index
    %c0_45 = arith.constant 0 : index
    %179 = vector.load %arg13[%178, %c0_45] : memref<64x128xf32, #tpu.memory_space<vmem>>, vector<8x128xf32>
    tpu.vector_store %arg13[%178, %c0_45], %177 {strides = array<i32>} : memref<64x128xf32, #tpu.memory_space<vmem>>, vector<8x128xf32>,
    %c5_i32 = arith.constant 5 : i32
    %c8_i32_46 = arith.constant 8 : i32
    %180 = arith.muli %c5_i32, %c8_i32_46 : i32
    %181 = arith.index_cast %180 : i32 to index
    %c0_47 = arith.constant 0 : index
    %182 = vector.load %arg12[%181, %c0_47] : memref<64x384xf32, #tpu.memory_space<vmem>>, vector<8x384xf32>
    %cst_48 = arith.constant dense<0.000000e+00> : vector<8x384xf32>
    %183 = tpu.matmul %177, %7, %cst_48 {dimension_numbers = #tpu.dot_dimension_numbers<[1], [0], [0], [1], [0, 0, 1, 1], [], []>} : vector<8x128xf32>, vector<128x384xf32>, vector<8x384xf32> -> vector<8x384xf32>
    %184 = vector.extract_strided_slice %182 {offsets = [0, 0], sizes = [8, 128], strides = [1, 1]} : vector<8x384xf32> to vector<8x128xf32>
    %185 = vector.extract_strided_slice %183 {offsets = [0, 0], sizes = [8, 128], strides = [1, 1]} : vector<8x384xf32> to vector<8x128xf32>
    %186 = arith.addf %184, %185 : vector<8x128xf32>
    %187 = arith.negf %186 : vector<8x128xf32>
    %188 = math.exp %187 : vector<8x128xf32>
    %cst_49 = arith.constant 1.000000e+00 : f32
    %189 = vector.broadcast %cst_49 : f32 to vector<8x128xf32>
    %190 = arith.addf %189, %188 : vector<8x128xf32>
    %191 = arith.divf %189, %190 : vector<8x128xf32>
    %192 = vector.extract_strided_slice %182 {offsets = [0, 128], sizes = [8, 128], strides = [1, 1]} : vector<8x384xf32> to vector<8x128xf32>
    %193 = vector.extract_strided_slice %183 {offsets = [0, 128], sizes = [8, 128], strides = [1, 1]} : vector<8x384xf32> to vector<8x128xf32>
    %194 = arith.addf %192, %193 : vector<8x128xf32>
    %195 = arith.negf %194 : vector<8x128xf32>
    %196 = math.exp %195 : vector<8x128xf32>
    %cst_50 = arith.constant 1.000000e+00 : f32
    %197 = vector.broadcast %cst_50 : f32 to vector<8x128xf32>
    %198 = arith.addf %197, %196 : vector<8x128xf32>
    %199 = arith.divf %197, %198 : vector<8x128xf32>
    %200 = vector.extract_strided_slice %182 {offsets = [0, 256], sizes = [8, 128], strides = [1, 1]} : vector<8x384xf32> to vector<8x128xf32>
    %201 = vector.extract_strided_slice %183 {offsets = [0, 256], sizes = [8, 128], strides = [1, 1]} : vector<8x384xf32> to vector<8x128xf32>
    %202 = vector.broadcast %8 : vector<1x128xf32> to vector<8x128xf32>
    %203 = arith.addf %201, %202 : vector<8x128xf32>
    %204 = arith.mulf %191, %203 : vector<8x128xf32>
    %205 = arith.addf %200, %204 : vector<8x128xf32>
    %206 = math.tanh %205 : vector<8x128xf32>
    %cst_51 = arith.constant 1.000000e+00 : f32
    %207 = vector.broadcast %cst_51 : f32 to vector<8x128xf32>
    %208 = arith.subf %207, %199 : vector<8x128xf32>
    %209 = arith.mulf %208, %206 : vector<8x128xf32>
    %210 = arith.mulf %199, %177 : vector<8x128xf32>
    %211 = arith.addf %209, %210 : vector<8x128xf32>
    %212 = arith.index_cast %180 : i32 to index
    %c0_52 = arith.constant 0 : index
    %213 = vector.load %arg13[%212, %c0_52] : memref<64x128xf32, #tpu.memory_space<vmem>>, vector<8x128xf32>
    tpu.vector_store %arg13[%212, %c0_52], %211 {strides = array<i32>} : memref<64x128xf32, #tpu.memory_space<vmem>>, vector<8x128xf32>,
    %c6_i32 = arith.constant 6 : i32
    %c8_i32_53 = arith.constant 8 : i32
    %214 = arith.muli %c6_i32, %c8_i32_53 : i32
    %215 = arith.index_cast %214 : i32 to index
    %c0_54 = arith.constant 0 : index
    %216 = vector.load %arg12[%215, %c0_54] : memref<64x384xf32, #tpu.memory_space<vmem>>, vector<8x384xf32>
    %cst_55 = arith.constant dense<0.000000e+00> : vector<8x384xf32>
    %217 = tpu.matmul %211, %7, %cst_55 {dimension_numbers = #tpu.dot_dimension_numbers<[1], [0], [0], [1], [0, 0, 1, 1], [], []>} : vector<8x128xf32>, vector<128x384xf32>, vector<8x384xf32> -> vector<8x384xf32>
    %218 = vector.extract_strided_slice %216 {offsets = [0, 0], sizes = [8, 128], strides = [1, 1]} : vector<8x384xf32> to vector<8x128xf32>
    %219 = vector.extract_strided_slice %217 {offsets = [0, 0], sizes = [8, 128], strides = [1, 1]} : vector<8x384xf32> to vector<8x128xf32>
    %220 = arith.addf %218, %219 : vector<8x128xf32>
    %221 = arith.negf %220 : vector<8x128xf32>
    %222 = math.exp %221 : vector<8x128xf32>
    %cst_56 = arith.constant 1.000000e+00 : f32
    %223 = vector.broadcast %cst_56 : f32 to vector<8x128xf32>
    %224 = arith.addf %223, %222 : vector<8x128xf32>
    %225 = arith.divf %223, %224 : vector<8x128xf32>
    %226 = vector.extract_strided_slice %216 {offsets = [0, 128], sizes = [8, 128], strides = [1, 1]} : vector<8x384xf32> to vector<8x128xf32>
    %227 = vector.extract_strided_slice %217 {offsets = [0, 128], sizes = [8, 128], strides = [1, 1]} : vector<8x384xf32> to vector<8x128xf32>
    %228 = arith.addf %226, %227 : vector<8x128xf32>
    %229 = arith.negf %228 : vector<8x128xf32>
    %230 = math.exp %229 : vector<8x128xf32>
    %cst_57 = arith.constant 1.000000e+00 : f32
    %231 = vector.broadcast %cst_57 : f32 to vector<8x128xf32>
    %232 = arith.addf %231, %230 : vector<8x128xf32>
    %233 = arith.divf %231, %232 : vector<8x128xf32>
    %234 = vector.extract_strided_slice %216 {offsets = [0, 256], sizes = [8, 128], strides = [1, 1]} : vector<8x384xf32> to vector<8x128xf32>
    %235 = vector.extract_strided_slice %217 {offsets = [0, 256], sizes = [8, 128], strides = [1, 1]} : vector<8x384xf32> to vector<8x128xf32>
    %236 = vector.broadcast %8 : vector<1x128xf32> to vector<8x128xf32>
    %237 = arith.addf %235, %236 : vector<8x128xf32>
    %238 = arith.mulf %225, %237 : vector<8x128xf32>
    %239 = arith.addf %234, %238 : vector<8x128xf32>
    %240 = math.tanh %239 : vector<8x128xf32>
    %cst_58 = arith.constant 1.000000e+00 : f32
    %241 = vector.broadcast %cst_58 : f32 to vector<8x128xf32>
    %242 = arith.subf %241, %233 : vector<8x128xf32>
    %243 = arith.mulf %242, %240 : vector<8x128xf32>
    %244 = arith.mulf %233, %211 : vector<8x128xf32>
    %245 = arith.addf %243, %244 : vector<8x128xf32>
    %246 = arith.index_cast %214 : i32 to index
    %c0_59 = arith.constant 0 : index
    %247 = vector.load %arg13[%246, %c0_59] : memref<64x128xf32, #tpu.memory_space<vmem>>, vector<8x128xf32>
    tpu.vector_store %arg13[%246, %c0_59], %245 {strides = array<i32>} : memref<64x128xf32, #tpu.memory_space<vmem>>, vector<8x128xf32>,
    %c7_i32 = arith.constant 7 : i32
    %c8_i32_60 = arith.constant 8 : i32
    %248 = arith.muli %c7_i32, %c8_i32_60 : i32
    %249 = arith.index_cast %248 : i32 to index
    %c0_61 = arith.constant 0 : index
    %250 = vector.load %arg12[%249, %c0_61] : memref<64x384xf32, #tpu.memory_space<vmem>>, vector<8x384xf32>
    %cst_62 = arith.constant dense<0.000000e+00> : vector<8x384xf32>
    %251 = tpu.matmul %245, %7, %cst_62 {dimension_numbers = #tpu.dot_dimension_numbers<[1], [0], [0], [1], [0, 0, 1, 1], [], []>} : vector<8x128xf32>, vector<128x384xf32>, vector<8x384xf32> -> vector<8x384xf32>
    %252 = vector.extract_strided_slice %250 {offsets = [0, 0], sizes = [8, 128], strides = [1, 1]} : vector<8x384xf32> to vector<8x128xf32>
    %253 = vector.extract_strided_slice %251 {offsets = [0, 0], sizes = [8, 128], strides = [1, 1]} : vector<8x384xf32> to vector<8x128xf32>
    %254 = arith.addf %252, %253 : vector<8x128xf32>
    %255 = arith.negf %254 : vector<8x128xf32>
    %256 = math.exp %255 : vector<8x128xf32>
    %cst_63 = arith.constant 1.000000e+00 : f32
    %257 = vector.broadcast %cst_63 : f32 to vector<8x128xf32>
    %258 = arith.addf %257, %256 : vector<8x128xf32>
    %259 = arith.divf %257, %258 : vector<8x128xf32>
    %260 = vector.extract_strided_slice %250 {offsets = [0, 128], sizes = [8, 128], strides = [1, 1]} : vector<8x384xf32> to vector<8x128xf32>
    %261 = vector.extract_strided_slice %251 {offsets = [0, 128], sizes = [8, 128], strides = [1, 1]} : vector<8x384xf32> to vector<8x128xf32>
    %262 = arith.addf %260, %261 : vector<8x128xf32>
    %263 = arith.negf %262 : vector<8x128xf32>
    %264 = math.exp %263 : vector<8x128xf32>
    %cst_64 = arith.constant 1.000000e+00 : f32
    %265 = vector.broadcast %cst_64 : f32 to vector<8x128xf32>
    %266 = arith.addf %265, %264 : vector<8x128xf32>
    %267 = arith.divf %265, %266 : vector<8x128xf32>
    %268 = vector.extract_strided_slice %250 {offsets = [0, 256], sizes = [8, 128], strides = [1, 1]} : vector<8x384xf32> to vector<8x128xf32>
    %269 = vector.extract_strided_slice %251 {offsets = [0, 256], sizes = [8, 128], strides = [1, 1]} : vector<8x384xf32> to vector<8x128xf32>
    %270 = vector.broadcast %8 : vector<1x128xf32> to vector<8x128xf32>
    %271 = arith.addf %269, %270 : vector<8x128xf32>
    %272 = arith.mulf %259, %271 : vector<8x128xf32>
    %273 = arith.addf %268, %272 : vector<8x128xf32>
    %274 = math.tanh %273 : vector<8x128xf32>
    %cst_65 = arith.constant 1.000000e+00 : f32
    %275 = vector.broadcast %cst_65 : f32 to vector<8x128xf32>
    %276 = arith.subf %275, %267 : vector<8x128xf32>
    %277 = arith.mulf %276, %274 : vector<8x128xf32>
    %278 = arith.mulf %267, %245 : vector<8x128xf32>
    %279 = arith.addf %277, %278 : vector<8x128xf32>
    %280 = arith.index_cast %248 : i32 to index
    %c0_66 = arith.constant 0 : index
    %281 = vector.load %arg13[%280, %c0_66] : memref<64x128xf32, #tpu.memory_space<vmem>>, vector<8x128xf32>
    tpu.vector_store %arg13[%280, %c0_66], %279 {strides = array<i32>} : memref<64x128xf32, #tpu.memory_space<vmem>>, vector<8x128xf32>,
    %c8_i32_67 = arith.constant 8 : i32
    %c0_68 = arith.constant 0 : index
    %c0_69 = arith.constant 0 : index
    %282 = vector.load %arg13[%c0_68, %c0_69] : memref<64x128xf32, #tpu.memory_space<vmem>>, vector<64x128xf32>
    %c0_70 = arith.constant 0 : index
    %c0_71 = arith.constant 0 : index
    %c0_72 = arith.constant 0 : index
    %283 = vector.load %arg5[%c0_70, %c0_71, %c0_72] : memref<1x128x384xf32, #tpu.memory_space<vmem>>, vector<1x128x384xf32>
    %284 = vector.shape_cast %283 : vector<1x128x384xf32> to vector<128x384xf32>
    %cst_73 = arith.constant dense<0.000000e+00> : vector<64x384xf32>
    %285 = tpu.matmul %282, %284, %cst_73 {dimension_numbers = #tpu.dot_dimension_numbers<[1], [0], [0], [1], [0, 0, 1, 1], [], []>} : vector<64x128xf32>, vector<128x384xf32>, vector<64x384xf32> -> vector<64x384xf32>
    %c0_74 = arith.constant 0 : index
    %c0_75 = arith.constant 0 : index
    %c0_76 = arith.constant 0 : index
    %286 = vector.load %arg7[%c0_74, %c0_75, %c0_76] : memref<1x1x384xf32, #tpu.memory_space<vmem>>, vector<1x1x384xf32>
    %287 = vector.shape_cast %286 : vector<1x1x384xf32> to vector<1x384xf32>
    %288 = vector.broadcast %287 : vector<1x384xf32> to vector<64x384xf32>
    %289 = arith.addf %285, %288 : vector<64x384xf32>
    %c0_77 = arith.constant 0 : index
    %c0_78 = arith.constant 0 : index
    %290 = vector.load %arg12[%c0_77, %c0_78] : memref<64x384xf32, #tpu.memory_space<vmem>>, vector<64x384xf32>
    tpu.vector_store %arg12[%c0_77, %c0_78], %289 {strides = array<i32>} : memref<64x384xf32, #tpu.memory_space<vmem>>, vector<64x384xf32>,
    %c0_79 = arith.constant 0 : index
    %c0_80 = arith.constant 0 : index
    %c0_81 = arith.constant 0 : index
    %291 = vector.load %arg6[%c0_79, %c0_80, %c0_81] : memref<1x128x384xf32, #tpu.memory_space<vmem>>, vector<1x128x384xf32>
    %292 = vector.shape_cast %291 : vector<1x128x384xf32> to vector<128x384xf32>
    %c0_82 = arith.constant 0 : index
    %c0_83 = arith.constant 0 : index
    %c0_84 = arith.constant 0 : index
    %293 = vector.load %arg8[%c0_82, %c0_83, %c0_84] : memref<1x1x128xf32, #tpu.memory_space<vmem>>, vector<1x1x128xf32>
    %294 = vector.shape_cast %293 : vector<1x1x128xf32> to vector<1x128xf32>
    %cst_85 = arith.constant 0.000000e+00 : f32
    %295 = vector.broadcast %cst_85 : f32 to vector<8x128xf32>
    %c0_i32_86 = arith.constant 0 : i32
    %c8_i32_87 = arith.constant 8 : i32
    %296 = arith.muli %c0_i32_86, %c8_i32_87 : i32
    %297 = arith.index_cast %296 : i32 to index
    %c0_88 = arith.constant 0 : index
    %298 = vector.load %arg12[%297, %c0_88] : memref<64x384xf32, #tpu.memory_space<vmem>>, vector<8x384xf32>
    %cst_89 = arith.constant dense<0.000000e+00> : vector<8x384xf32>
    %299 = tpu.matmul %295, %292, %cst_89 {dimension_numbers = #tpu.dot_dimension_numbers<[1], [0], [0], [1], [0, 0, 1, 1], [], []>} : vector<8x128xf32>, vector<128x384xf32>, vector<8x384xf32> -> vector<8x384xf32>
    %300 = vector.extract_strided_slice %298 {offsets = [0, 0], sizes = [8, 128], strides = [1, 1]} : vector<8x384xf32> to vector<8x128xf32>
    %301 = vector.extract_strided_slice %299 {offsets = [0, 0], sizes = [8, 128], strides = [1, 1]} : vector<8x384xf32> to vector<8x128xf32>
    %302 = arith.addf %300, %301 : vector<8x128xf32>
    %303 = arith.negf %302 : vector<8x128xf32>
    %304 = math.exp %303 : vector<8x128xf32>
    %cst_90 = arith.constant 1.000000e+00 : f32
    %305 = vector.broadcast %cst_90 : f32 to vector<8x128xf32>
    %306 = arith.addf %305, %304 : vector<8x128xf32>
    %307 = arith.divf %305, %306 : vector<8x128xf32>
    %308 = vector.extract_strided_slice %298 {offsets = [0, 128], sizes = [8, 128], strides = [1, 1]} : vector<8x384xf32> to vector<8x128xf32>
    %309 = vector.extract_strided_slice %299 {offsets = [0, 128], sizes = [8, 128], strides = [1, 1]} : vector<8x384xf32> to vector<8x128xf32>
    %310 = arith.addf %308, %309 : vector<8x128xf32>
    %311 = arith.negf %310 : vector<8x128xf32>
    %312 = math.exp %311 : vector<8x128xf32>
    %cst_91 = arith.constant 1.000000e+00 : f32
    %313 = vector.broadcast %cst_91 : f32 to vector<8x128xf32>
    %314 = arith.addf %313, %312 : vector<8x128xf32>
    %315 = arith.divf %313, %314 : vector<8x128xf32>
    %316 = vector.extract_strided_slice %298 {offsets = [0, 256], sizes = [8, 128], strides = [1, 1]} : vector<8x384xf32> to vector<8x128xf32>
    %317 = vector.extract_strided_slice %299 {offsets = [0, 256], sizes = [8, 128], strides = [1, 1]} : vector<8x384xf32> to vector<8x128xf32>
    %318 = vector.broadcast %294 : vector<1x128xf32> to vector<8x128xf32>
    %319 = arith.addf %317, %318 : vector<8x128xf32>
    %320 = arith.mulf %307, %319 : vector<8x128xf32>
    %321 = arith.addf %316, %320 : vector<8x128xf32>
    %322 = math.tanh %321 : vector<8x128xf32>
    %cst_92 = arith.constant 1.000000e+00 : f32
    %323 = vector.broadcast %cst_92 : f32 to vector<8x128xf32>
    %324 = arith.subf %323, %315 : vector<8x128xf32>
    %325 = arith.mulf %324, %322 : vector<8x128xf32>
    %326 = arith.mulf %315, %295 : vector<8x128xf32>
    %327 = arith.addf %325, %326 : vector<8x128xf32>
    %c1_i32_93 = arith.constant 1 : i32
    %c8_i32_94 = arith.constant 8 : i32
    %328 = arith.muli %c1_i32_93, %c8_i32_94 : i32
    %329 = arith.index_cast %328 : i32 to index
    %c0_95 = arith.constant 0 : index
    %330 = vector.load %arg12[%329, %c0_95] : memref<64x384xf32, #tpu.memory_space<vmem>>, vector<8x384xf32>
    %cst_96 = arith.constant dense<0.000000e+00> : vector<8x384xf32>
    %331 = tpu.matmul %327, %292, %cst_96 {dimension_numbers = #tpu.dot_dimension_numbers<[1], [0], [0], [1], [0, 0, 1, 1], [], []>} : vector<8x128xf32>, vector<128x384xf32>, vector<8x384xf32> -> vector<8x384xf32>
    %332 = vector.extract_strided_slice %330 {offsets = [0, 0], sizes = [8, 128], strides = [1, 1]} : vector<8x384xf32> to vector<8x128xf32>
    %333 = vector.extract_strided_slice %331 {offsets = [0, 0], sizes = [8, 128], strides = [1, 1]} : vector<8x384xf32> to vector<8x128xf32>
    %334 = arith.addf %332, %333 : vector<8x128xf32>
    %335 = arith.negf %334 : vector<8x128xf32>
    %336 = math.exp %335 : vector<8x128xf32>
    %cst_97 = arith.constant 1.000000e+00 : f32
    %337 = vector.broadcast %cst_97 : f32 to vector<8x128xf32>
    %338 = arith.addf %337, %336 : vector<8x128xf32>
    %339 = arith.divf %337, %338 : vector<8x128xf32>
    %340 = vector.extract_strided_slice %330 {offsets = [0, 128], sizes = [8, 128], strides = [1, 1]} : vector<8x384xf32> to vector<8x128xf32>
    %341 = vector.extract_strided_slice %331 {offsets = [0, 128], sizes = [8, 128], strides = [1, 1]} : vector<8x384xf32> to vector<8x128xf32>
    %342 = arith.addf %340, %341 : vector<8x128xf32>
    %343 = arith.negf %342 : vector<8x128xf32>
    %344 = math.exp %343 : vector<8x128xf32>
    %cst_98 = arith.constant 1.000000e+00 : f32
    %345 = vector.broadcast %cst_98 : f32 to vector<8x128xf32>
    %346 = arith.addf %345, %344 : vector<8x128xf32>
    %347 = arith.divf %345, %346 : vector<8x128xf32>
    %348 = vector.extract_strided_slice %330 {offsets = [0, 256], sizes = [8, 128], strides = [1, 1]} : vector<8x384xf32> to vector<8x128xf32>
    %349 = vector.extract_strided_slice %331 {offsets = [0, 256], sizes = [8, 128], strides = [1, 1]} : vector<8x384xf32> to vector<8x128xf32>
    %350 = vector.broadcast %294 : vector<1x128xf32> to vector<8x128xf32>
    %351 = arith.addf %349, %350 : vector<8x128xf32>
    %352 = arith.mulf %339, %351 : vector<8x128xf32>
    %353 = arith.addf %348, %352 : vector<8x128xf32>
    %354 = math.tanh %353 : vector<8x128xf32>
    %cst_99 = arith.constant 1.000000e+00 : f32
    %355 = vector.broadcast %cst_99 : f32 to vector<8x128xf32>
    %356 = arith.subf %355, %347 : vector<8x128xf32>
    %357 = arith.mulf %356, %354 : vector<8x128xf32>
    %358 = arith.mulf %347, %327 : vector<8x128xf32>
    %359 = arith.addf %357, %358 : vector<8x128xf32>
    %c2_i32_100 = arith.constant 2 : i32
    %c8_i32_101 = arith.constant 8 : i32
    %360 = arith.muli %c2_i32_100, %c8_i32_101 : i32
    %361 = arith.index_cast %360 : i32 to index
    %c0_102 = arith.constant 0 : index
    %362 = vector.load %arg12[%361, %c0_102] : memref<64x384xf32, #tpu.memory_space<vmem>>, vector<8x384xf32>
    %cst_103 = arith.constant dense<0.000000e+00> : vector<8x384xf32>
    %363 = tpu.matmul %359, %292, %cst_103 {dimension_numbers = #tpu.dot_dimension_numbers<[1], [0], [0], [1], [0, 0, 1, 1], [], []>} : vector<8x128xf32>, vector<128x384xf32>, vector<8x384xf32> -> vector<8x384xf32>
    %364 = vector.extract_strided_slice %362 {offsets = [0, 0], sizes = [8, 128], strides = [1, 1]} : vector<8x384xf32> to vector<8x128xf32>
    %365 = vector.extract_strided_slice %363 {offsets = [0, 0], sizes = [8, 128], strides = [1, 1]} : vector<8x384xf32> to vector<8x128xf32>
    %366 = arith.addf %364, %365 : vector<8x128xf32>
    %367 = arith.negf %366 : vector<8x128xf32>
    %368 = math.exp %367 : vector<8x128xf32>
    %cst_104 = arith.constant 1.000000e+00 : f32
    %369 = vector.broadcast %cst_104 : f32 to vector<8x128xf32>
    %370 = arith.addf %369, %368 : vector<8x128xf32>
    %371 = arith.divf %369, %370 : vector<8x128xf32>
    %372 = vector.extract_strided_slice %362 {offsets = [0, 128], sizes = [8, 128], strides = [1, 1]} : vector<8x384xf32> to vector<8x128xf32>
    %373 = vector.extract_strided_slice %363 {offsets = [0, 128], sizes = [8, 128], strides = [1, 1]} : vector<8x384xf32> to vector<8x128xf32>
    %374 = arith.addf %372, %373 : vector<8x128xf32>
    %375 = arith.negf %374 : vector<8x128xf32>
    %376 = math.exp %375 : vector<8x128xf32>
    %cst_105 = arith.constant 1.000000e+00 : f32
    %377 = vector.broadcast %cst_105 : f32 to vector<8x128xf32>
    %378 = arith.addf %377, %376 : vector<8x128xf32>
    %379 = arith.divf %377, %378 : vector<8x128xf32>
    %380 = vector.extract_strided_slice %362 {offsets = [0, 256], sizes = [8, 128], strides = [1, 1]} : vector<8x384xf32> to vector<8x128xf32>
    %381 = vector.extract_strided_slice %363 {offsets = [0, 256], sizes = [8, 128], strides = [1, 1]} : vector<8x384xf32> to vector<8x128xf32>
    %382 = vector.broadcast %294 : vector<1x128xf32> to vector<8x128xf32>
    %383 = arith.addf %381, %382 : vector<8x128xf32>
    %384 = arith.mulf %371, %383 : vector<8x128xf32>
    %385 = arith.addf %380, %384 : vector<8x128xf32>
    %386 = math.tanh %385 : vector<8x128xf32>
    %cst_106 = arith.constant 1.000000e+00 : f32
    %387 = vector.broadcast %cst_106 : f32 to vector<8x128xf32>
    %388 = arith.subf %387, %379 : vector<8x128xf32>
    %389 = arith.mulf %388, %386 : vector<8x128xf32>
    %390 = arith.mulf %379, %359 : vector<8x128xf32>
    %391 = arith.addf %389, %390 : vector<8x128xf32>
    %c3_i32_107 = arith.constant 3 : i32
    %c8_i32_108 = arith.constant 8 : i32
    %392 = arith.muli %c3_i32_107, %c8_i32_108 : i32
    %393 = arith.index_cast %392 : i32 to index
    %c0_109 = arith.constant 0 : index
    %394 = vector.load %arg12[%393, %c0_109] : memref<64x384xf32, #tpu.memory_space<vmem>>, vector<8x384xf32>
    %cst_110 = arith.constant dense<0.000000e+00> : vector<8x384xf32>
    %395 = tpu.matmul %391, %292, %cst_110 {dimension_numbers = #tpu.dot_dimension_numbers<[1], [0], [0], [1], [0, 0, 1, 1], [], []>} : vector<8x128xf32>, vector<128x384xf32>, vector<8x384xf32> -> vector<8x384xf32>
    %396 = vector.extract_strided_slice %394 {offsets = [0, 0], sizes = [8, 128], strides = [1, 1]} : vector<8x384xf32> to vector<8x128xf32>
    %397 = vector.extract_strided_slice %395 {offsets = [0, 0], sizes = [8, 128], strides = [1, 1]} : vector<8x384xf32> to vector<8x128xf32>
    %398 = arith.addf %396, %397 : vector<8x128xf32>
    %399 = arith.negf %398 : vector<8x128xf32>
    %400 = math.exp %399 : vector<8x128xf32>
    %cst_111 = arith.constant 1.000000e+00 : f32
    %401 = vector.broadcast %cst_111 : f32 to vector<8x128xf32>
    %402 = arith.addf %401, %400 : vector<8x128xf32>
    %403 = arith.divf %401, %402 : vector<8x128xf32>
    %404 = vector.extract_strided_slice %394 {offsets = [0, 128], sizes = [8, 128], strides = [1, 1]} : vector<8x384xf32> to vector<8x128xf32>
    %405 = vector.extract_strided_slice %395 {offsets = [0, 128], sizes = [8, 128], strides = [1, 1]} : vector<8x384xf32> to vector<8x128xf32>
    %406 = arith.addf %404, %405 : vector<8x128xf32>
    %407 = arith.negf %406 : vector<8x128xf32>
    %408 = math.exp %407 : vector<8x128xf32>
    %cst_112 = arith.constant 1.000000e+00 : f32
    %409 = vector.broadcast %cst_112 : f32 to vector<8x128xf32>
    %410 = arith.addf %409, %408 : vector<8x128xf32>
    %411 = arith.divf %409, %410 : vector<8x128xf32>
    %412 = vector.extract_strided_slice %394 {offsets = [0, 256], sizes = [8, 128], strides = [1, 1]} : vector<8x384xf32> to vector<8x128xf32>
    %413 = vector.extract_strided_slice %395 {offsets = [0, 256], sizes = [8, 128], strides = [1, 1]} : vector<8x384xf32> to vector<8x128xf32>
    %414 = vector.broadcast %294 : vector<1x128xf32> to vector<8x128xf32>
    %415 = arith.addf %413, %414 : vector<8x128xf32>
    %416 = arith.mulf %403, %415 : vector<8x128xf32>
    %417 = arith.addf %412, %416 : vector<8x128xf32>
    %418 = math.tanh %417 : vector<8x128xf32>
    %cst_113 = arith.constant 1.000000e+00 : f32
    %419 = vector.broadcast %cst_113 : f32 to vector<8x128xf32>
    %420 = arith.subf %419, %411 : vector<8x128xf32>
    %421 = arith.mulf %420, %418 : vector<8x128xf32>
    %422 = arith.mulf %411, %391 : vector<8x128xf32>
    %423 = arith.addf %421, %422 : vector<8x128xf32>
    %c4_i32_114 = arith.constant 4 : i32
    %c8_i32_115 = arith.constant 8 : i32
    %424 = arith.muli %c4_i32_114, %c8_i32_115 : i32
    %425 = arith.index_cast %424 : i32 to index
    %c0_116 = arith.constant 0 : index
    %426 = vector.load %arg12[%425, %c0_116] : memref<64x384xf32, #tpu.memory_space<vmem>>, vector<8x384xf32>
    %cst_117 = arith.constant dense<0.000000e+00> : vector<8x384xf32>
    %427 = tpu.matmul %423, %292, %cst_117 {dimension_numbers = #tpu.dot_dimension_numbers<[1], [0], [0], [1], [0, 0, 1, 1], [], []>} : vector<8x128xf32>, vector<128x384xf32>, vector<8x384xf32> -> vector<8x384xf32>
    %428 = vector.extract_strided_slice %426 {offsets = [0, 0], sizes = [8, 128], strides = [1, 1]} : vector<8x384xf32> to vector<8x128xf32>
    %429 = vector.extract_strided_slice %427 {offsets = [0, 0], sizes = [8, 128], strides = [1, 1]} : vector<8x384xf32> to vector<8x128xf32>
    %430 = arith.addf %428, %429 : vector<8x128xf32>
    %431 = arith.negf %430 : vector<8x128xf32>
    %432 = math.exp %431 : vector<8x128xf32>
    %cst_118 = arith.constant 1.000000e+00 : f32
    %433 = vector.broadcast %cst_118 : f32 to vector<8x128xf32>
    %434 = arith.addf %433, %432 : vector<8x128xf32>
    %435 = arith.divf %433, %434 : vector<8x128xf32>
    %436 = vector.extract_strided_slice %426 {offsets = [0, 128], sizes = [8, 128], strides = [1, 1]} : vector<8x384xf32> to vector<8x128xf32>
    %437 = vector.extract_strided_slice %427 {offsets = [0, 128], sizes = [8, 128], strides = [1, 1]} : vector<8x384xf32> to vector<8x128xf32>
    %438 = arith.addf %436, %437 : vector<8x128xf32>
    %439 = arith.negf %438 : vector<8x128xf32>
    %440 = math.exp %439 : vector<8x128xf32>
    %cst_119 = arith.constant 1.000000e+00 : f32
    %441 = vector.broadcast %cst_119 : f32 to vector<8x128xf32>
    %442 = arith.addf %441, %440 : vector<8x128xf32>
    %443 = arith.divf %441, %442 : vector<8x128xf32>
    %444 = vector.extract_strided_slice %426 {offsets = [0, 256], sizes = [8, 128], strides = [1, 1]} : vector<8x384xf32> to vector<8x128xf32>
    %445 = vector.extract_strided_slice %427 {offsets = [0, 256], sizes = [8, 128], strides = [1, 1]} : vector<8x384xf32> to vector<8x128xf32>
    %446 = vector.broadcast %294 : vector<1x128xf32> to vector<8x128xf32>
    %447 = arith.addf %445, %446 : vector<8x128xf32>
    %448 = arith.mulf %435, %447 : vector<8x128xf32>
    %449 = arith.addf %444, %448 : vector<8x128xf32>
    %450 = math.tanh %449 : vector<8x128xf32>
    %cst_120 = arith.constant 1.000000e+00 : f32
    %451 = vector.broadcast %cst_120 : f32 to vector<8x128xf32>
    %452 = arith.subf %451, %443 : vector<8x128xf32>
    %453 = arith.mulf %452, %450 : vector<8x128xf32>
    %454 = arith.mulf %443, %423 : vector<8x128xf32>
    %455 = arith.addf %453, %454 : vector<8x128xf32>
    %c5_i32_121 = arith.constant 5 : i32
    %c8_i32_122 = arith.constant 8 : i32
    %456 = arith.muli %c5_i32_121, %c8_i32_122 : i32
    %457 = arith.index_cast %456 : i32 to index
    %c0_123 = arith.constant 0 : index
    %458 = vector.load %arg12[%457, %c0_123] : memref<64x384xf32, #tpu.memory_space<vmem>>, vector<8x384xf32>
    %cst_124 = arith.constant dense<0.000000e+00> : vector<8x384xf32>
    %459 = tpu.matmul %455, %292, %cst_124 {dimension_numbers = #tpu.dot_dimension_numbers<[1], [0], [0], [1], [0, 0, 1, 1], [], []>} : vector<8x128xf32>, vector<128x384xf32>, vector<8x384xf32> -> vector<8x384xf32>
    %460 = vector.extract_strided_slice %458 {offsets = [0, 0], sizes = [8, 128], strides = [1, 1]} : vector<8x384xf32> to vector<8x128xf32>
    %461 = vector.extract_strided_slice %459 {offsets = [0, 0], sizes = [8, 128], strides = [1, 1]} : vector<8x384xf32> to vector<8x128xf32>
    %462 = arith.addf %460, %461 : vector<8x128xf32>
    %463 = arith.negf %462 : vector<8x128xf32>
    %464 = math.exp %463 : vector<8x128xf32>
    %cst_125 = arith.constant 1.000000e+00 : f32
    %465 = vector.broadcast %cst_125 : f32 to vector<8x128xf32>
    %466 = arith.addf %465, %464 : vector<8x128xf32>
    %467 = arith.divf %465, %466 : vector<8x128xf32>
    %468 = vector.extract_strided_slice %458 {offsets = [0, 128], sizes = [8, 128], strides = [1, 1]} : vector<8x384xf32> to vector<8x128xf32>
    %469 = vector.extract_strided_slice %459 {offsets = [0, 128], sizes = [8, 128], strides = [1, 1]} : vector<8x384xf32> to vector<8x128xf32>
    %470 = arith.addf %468, %469 : vector<8x128xf32>
    %471 = arith.negf %470 : vector<8x128xf32>
    %472 = math.exp %471 : vector<8x128xf32>
    %cst_126 = arith.constant 1.000000e+00 : f32
    %473 = vector.broadcast %cst_126 : f32 to vector<8x128xf32>
    %474 = arith.addf %473, %472 : vector<8x128xf32>
    %475 = arith.divf %473, %474 : vector<8x128xf32>
    %476 = vector.extract_strided_slice %458 {offsets = [0, 256], sizes = [8, 128], strides = [1, 1]} : vector<8x384xf32> to vector<8x128xf32>
    %477 = vector.extract_strided_slice %459 {offsets = [0, 256], sizes = [8, 128], strides = [1, 1]} : vector<8x384xf32> to vector<8x128xf32>
    %478 = vector.broadcast %294 : vector<1x128xf32> to vector<8x128xf32>
    %479 = arith.addf %477, %478 : vector<8x128xf32>
    %480 = arith.mulf %467, %479 : vector<8x128xf32>
    %481 = arith.addf %476, %480 : vector<8x128xf32>
    %482 = math.tanh %481 : vector<8x128xf32>
    %cst_127 = arith.constant 1.000000e+00 : f32
    %483 = vector.broadcast %cst_127 : f32 to vector<8x128xf32>
    %484 = arith.subf %483, %475 : vector<8x128xf32>
    %485 = arith.mulf %484, %482 : vector<8x128xf32>
    %486 = arith.mulf %475, %455 : vector<8x128xf32>
    %487 = arith.addf %485, %486 : vector<8x128xf32>
    %c6_i32_128 = arith.constant 6 : i32
    %c8_i32_129 = arith.constant 8 : i32
    %488 = arith.muli %c6_i32_128, %c8_i32_129 : i32
    %489 = arith.index_cast %488 : i32 to index
    %c0_130 = arith.constant 0 : index
    %490 = vector.load %arg12[%489, %c0_130] : memref<64x384xf32, #tpu.memory_space<vmem>>, vector<8x384xf32>
    %cst_131 = arith.constant dense<0.000000e+00> : vector<8x384xf32>
    %491 = tpu.matmul %487, %292, %cst_131 {dimension_numbers = #tpu.dot_dimension_numbers<[1], [0], [0], [1], [0, 0, 1, 1], [], []>} : vector<8x128xf32>, vector<128x384xf32>, vector<8x384xf32> -> vector<8x384xf32>
    %492 = vector.extract_strided_slice %490 {offsets = [0, 0], sizes = [8, 128], strides = [1, 1]} : vector<8x384xf32> to vector<8x128xf32>
    %493 = vector.extract_strided_slice %491 {offsets = [0, 0], sizes = [8, 128], strides = [1, 1]} : vector<8x384xf32> to vector<8x128xf32>
    %494 = arith.addf %492, %493 : vector<8x128xf32>
    %495 = arith.negf %494 : vector<8x128xf32>
    %496 = math.exp %495 : vector<8x128xf32>
    %cst_132 = arith.constant 1.000000e+00 : f32
    %497 = vector.broadcast %cst_132 : f32 to vector<8x128xf32>
    %498 = arith.addf %497, %496 : vector<8x128xf32>
    %499 = arith.divf %497, %498 : vector<8x128xf32>
    %500 = vector.extract_strided_slice %490 {offsets = [0, 128], sizes = [8, 128], strides = [1, 1]} : vector<8x384xf32> to vector<8x128xf32>
    %501 = vector.extract_strided_slice %491 {offsets = [0, 128], sizes = [8, 128], strides = [1, 1]} : vector<8x384xf32> to vector<8x128xf32>
    %502 = arith.addf %500, %501 : vector<8x128xf32>
    %503 = arith.negf %502 : vector<8x128xf32>
    %504 = math.exp %503 : vector<8x128xf32>
    %cst_133 = arith.constant 1.000000e+00 : f32
    %505 = vector.broadcast %cst_133 : f32 to vector<8x128xf32>
    %506 = arith.addf %505, %504 : vector<8x128xf32>
    %507 = arith.divf %505, %506 : vector<8x128xf32>
    %508 = vector.extract_strided_slice %490 {offsets = [0, 256], sizes = [8, 128], strides = [1, 1]} : vector<8x384xf32> to vector<8x128xf32>
    %509 = vector.extract_strided_slice %491 {offsets = [0, 256], sizes = [8, 128], strides = [1, 1]} : vector<8x384xf32> to vector<8x128xf32>
    %510 = vector.broadcast %294 : vector<1x128xf32> to vector<8x128xf32>
    %511 = arith.addf %509, %510 : vector<8x128xf32>
    %512 = arith.mulf %499, %511 : vector<8x128xf32>
    %513 = arith.addf %508, %512 : vector<8x128xf32>
    %514 = math.tanh %513 : vector<8x128xf32>
    %cst_134 = arith.constant 1.000000e+00 : f32
    %515 = vector.broadcast %cst_134 : f32 to vector<8x128xf32>
    %516 = arith.subf %515, %507 : vector<8x128xf32>
    %517 = arith.mulf %516, %514 : vector<8x128xf32>
    %518 = arith.mulf %507, %487 : vector<8x128xf32>
    %519 = arith.addf %517, %518 : vector<8x128xf32>
    %c7_i32_135 = arith.constant 7 : i32
    %c8_i32_136 = arith.constant 8 : i32
    %520 = arith.muli %c7_i32_135, %c8_i32_136 : i32
    %521 = arith.index_cast %520 : i32 to index
    %c0_137 = arith.constant 0 : index
    %522 = vector.load %arg12[%521, %c0_137] : memref<64x384xf32, #tpu.memory_space<vmem>>, vector<8x384xf32>
    %cst_138 = arith.constant dense<0.000000e+00> : vector<8x384xf32>
    %523 = tpu.matmul %519, %292, %cst_138 {dimension_numbers = #tpu.dot_dimension_numbers<[1], [0], [0], [1], [0, 0, 1, 1], [], []>} : vector<8x128xf32>, vector<128x384xf32>, vector<8x384xf32> -> vector<8x384xf32>
    %524 = vector.extract_strided_slice %522 {offsets = [0, 0], sizes = [8, 128], strides = [1, 1]} : vector<8x384xf32> to vector<8x128xf32>
    %525 = vector.extract_strided_slice %523 {offsets = [0, 0], sizes = [8, 128], strides = [1, 1]} : vector<8x384xf32> to vector<8x128xf32>
    %526 = arith.addf %524, %525 : vector<8x128xf32>
    %527 = arith.negf %526 : vector<8x128xf32>
    %528 = math.exp %527 : vector<8x128xf32>
    %cst_139 = arith.constant 1.000000e+00 : f32
    %529 = vector.broadcast %cst_139 : f32 to vector<8x128xf32>
    %530 = arith.addf %529, %528 : vector<8x128xf32>
    %531 = arith.divf %529, %530 : vector<8x128xf32>
    %532 = vector.extract_strided_slice %522 {offsets = [0, 128], sizes = [8, 128], strides = [1, 1]} : vector<8x384xf32> to vector<8x128xf32>
    %533 = vector.extract_strided_slice %523 {offsets = [0, 128], sizes = [8, 128], strides = [1, 1]} : vector<8x384xf32> to vector<8x128xf32>
    %534 = arith.addf %532, %533 : vector<8x128xf32>
    %535 = arith.negf %534 : vector<8x128xf32>
    %536 = math.exp %535 : vector<8x128xf32>
    %cst_140 = arith.constant 1.000000e+00 : f32
    %537 = vector.broadcast %cst_140 : f32 to vector<8x128xf32>
    %538 = arith.addf %537, %536 : vector<8x128xf32>
    %539 = arith.divf %537, %538 : vector<8x128xf32>
    %540 = vector.extract_strided_slice %522 {offsets = [0, 256], sizes = [8, 128], strides = [1, 1]} : vector<8x384xf32> to vector<8x128xf32>
    %541 = vector.extract_strided_slice %523 {offsets = [0, 256], sizes = [8, 128], strides = [1, 1]} : vector<8x384xf32> to vector<8x128xf32>
    %542 = vector.broadcast %294 : vector<1x128xf32> to vector<8x128xf32>
    %543 = arith.addf %541, %542 : vector<8x128xf32>
    %544 = arith.mulf %531, %543 : vector<8x128xf32>
    %545 = arith.addf %540, %544 : vector<8x128xf32>
    %546 = math.tanh %545 : vector<8x128xf32>
    %cst_141 = arith.constant 1.000000e+00 : f32
    %547 = vector.broadcast %cst_141 : f32 to vector<8x128xf32>
    %548 = arith.subf %547, %539 : vector<8x128xf32>
    %549 = arith.mulf %548, %546 : vector<8x128xf32>
    %550 = arith.mulf %539, %519 : vector<8x128xf32>
    %551 = arith.addf %549, %550 : vector<8x128xf32>
    %c8_i32_142 = arith.constant 8 : i32
    %c0_143 = arith.constant 0 : index
    %c0_144 = arith.constant 0 : index
    %552 = vector.load %arg9[%c0_143, %c0_144] : memref<128x4xf32, #tpu.memory_space<vmem>>, vector<128x4xf32>
    %cst_145 = arith.constant dense<0.000000e+00> : vector<8x4xf32>
    %553 = tpu.matmul %551, %552, %cst_145 {dimension_numbers = #tpu.dot_dimension_numbers<[1], [0], [0], [1], [0, 0, 1, 1], [], []>} : vector<8x128xf32>, vector<128x4xf32>, vector<8x4xf32> -> vector<8x4xf32>
    %c0_146 = arith.constant 0 : index
    %c0_147 = arith.constant 0 : index
    %554 = vector.load %arg10[%c0_146, %c0_147] : memref<1x4xf32, #tpu.memory_space<vmem>>, vector<1x4xf32>
    %555 = vector.broadcast %554 : vector<1x4xf32> to vector<8x4xf32>
    %556 = arith.addf %553, %555 : vector<8x4xf32>
    %c0_148 = arith.constant 0 : index
    %c0_149 = arith.constant 0 : index
    %557 = vector.load %arg11[%c0_148, %c0_149] : memref<8x4xf32, #tpu.memory_space<vmem>>, vector<8x4xf32>
    tpu.vector_store %arg11[%c0_148, %c0_149], %556 {strides = array<i32>} : memref<8x4xf32, #tpu.memory_space<vmem>>, vector<8x4xf32>,
    return
  }
}

</mosaic_0001>

<llo_original>
// kernel: gru_forward.1
$region0: #{gru_forward.1}
  #allocation0 [shape = 'u32[]', space=smem, size = 0x4, offset = 0x4, fixed_abs, tag = 'smem constant byte address 0x4 - core index']
  #allocation1 [shape = 'u32[144,128]{1,0:T(1,128)}', space=vmem, size = 0x12000, scoped, tag = 'internal scratch']
  #allocation2 [shape = 'f32[64,384]{1,0:T(8,128)}', space=vmem, size = 0x18000, scoped, tag = 'scratch operand']
  #allocation3 [shape = 'f32[64,128]{1,0:T(8,128)}', space=vmem, size = 0x8000, scoped, tag = 'scratch operand']
  %s0 = inlined_call_operand.vmem [shape: f32[64,16], index: 0, kind: input, shape index: {}]
  %s1 = inlined_call_operand.vmem [shape: f32[16,384], index: 1, kind: input, shape index: {}]
  %s2 = inlined_call_operand.hbm [shape: f32[128,384], index: 2, kind: input, shape index: {}]
  %s3 = inlined_call_operand.vmem [shape: f32[1,384], index: 3, kind: input, shape index: {}]
  %s4 = inlined_call_operand.vmem [shape: f32[1,128], index: 4, kind: input, shape index: {}]
  %s5 = inlined_call_operand.hbm [shape: f32[1,128,384], index: 5, kind: input, shape index: {}]
  %s6 = inlined_call_operand.hbm [shape: f32[1,128,384], index: 6, kind: input, shape index: {}]
  %s7 = inlined_call_operand.vmem [shape: f32[1,1,384], index: 7, kind: input, shape index: {}]
  %s8 = inlined_call_operand.vmem [shape: f32[1,1,128], index: 8, kind: input, shape index: {}]
  %s9 = inlined_call_operand.vmem [shape: f32[128,4], index: 9, kind: input, shape index: {}]
  %s10 = inlined_call_operand.vmem [shape: f32[1,4], index: 10, kind: input, shape index: {}]
  %s11 = inlined_call_operand.vmem [shape: f32[8,4], index: 11, kind: output, shape index: {}]
  %s12 = sld [smem:[#allocation0]]
  $region66: #{gru_forward.1} parent=0
    _
  %s14 = ssub.s32 1, %s12
  %s15 = scalar_select 0, %s14, %s12
  $region1: #{gru_forward.1} parent=0
    #allocation4 [shape = 'u8[196608]{0}', space=vmem, size = 0x30000, scoped, tag = 'input window, operand 2, single buffered']
    #allocation5 [shape = 's32[1]{0}', space=sflag, size = 0x4, scoped, tag = 'scoped memory for gru_forward.1']
    #allocation6 [shape = 'u8[196608]{0}', space=vmem, size = 0x30000, scoped, tag = 'input window, operand 5, single buffered']
    #allocation7 [shape = 's32[1]{0}', space=sflag, size = 0x4, scoped, tag = 'scoped memory for gru_forward.1']
    #allocation8 [shape = 'u8[196608]{0}', space=vmem, size = 0x30000, scoped, tag = 'input window, operand 6, single buffered']
    %16 = vsyncpa [#allocation5], 0
    %17 = vsyncpa [#allocation7], 0
    // Predicated region
    $region2: #{gru_forward.1} parent=1 // pred_check
      _
    $region3: #{gru_forward.1} parent=1 // pred_check_branch
      %19 = sbr.rel (0) target = $region5
    $region4: #{gru_forward.1} parent=1 // pred_region
      _
    $region5: #{gru_forward.1} parent=1 // pred_fallthru
      _
    // Predicated region
    $region6: #{gru_forward.1} parent=1 // pred_check
      _
    $region7: #{gru_forward.1} parent=1 // pred_check_branch
      %21 = sbr.rel (0) target = $region9
    $region8: #{gru_forward.1} parent=1 // pred_region
      _
    $region9: #{gru_forward.1} parent=1 // pred_fallthru
      _
    // Predicated region
    $region10: #{gru_forward.1} parent=1 // pred_check
      _
    $region11: #{gru_forward.1} parent=1 // pred_check_branch
      %23 = sbr.rel (0) target = $region13
    $region12: #{gru_forward.1} parent=1 // pred_region
      %s25 = ssub.s32 6144, 6144
      %26 = vsyncadd [#allocation5], %s25
      %s27 = sshll.u32 [#allocation4], 4
      %s28 = int_to_ptr.vmem [resolvable:$true] %s27
      %33 = dma.hbm_to_vmem [thread:$0]  %s2, 6144, %s28, [#allocation5], 384, 384, 24
    $region13: #{gru_forward.1} parent=1 // pred_fallthru
      _
    // Predicated region
    $region14: #{gru_forward.1} parent=1 // pred_check
      _
    $region15: #{gru_forward.1} parent=1 // pred_check_branch
      %35 = sbr.rel (0) target = $region17
    $region16: #{gru_forward.1} parent=1 // pred_region
      _
    $region17: #{gru_forward.1} parent=1 // pred_fallthru
      _
    // Predicated region
    $region18: #{gru_forward.1} parent=1 // pred_check
      _
    $region19: #{gru_forward.1} parent=1 // pred_check_branch
      %37 = sbr.rel (0) target = $region21
    $region20: #{gru_forward.1} parent=1 // pred_region
      _
    $region21: #{gru_forward.1} parent=1 // pred_fallthru
      _
    // Predicated region
    $region22: #{gru_forward.1} parent=1 // pred_check
      _
    $region23: #{gru_forward.1} parent=1 // pred_check_branch
      %39 = sbr.rel (0) target = $region25
    $region24: #{gru_forward.1} parent=1 // pred_region
      %s41 = ssub.s32 6144, 6144
      %42 = vsyncadd [#allocation7], %s41
      %s43 = sshll.u32 [#allocation6], 4
      %s44 = int_to_ptr.vmem [resolvable:$true] %s43
      %49 = dma.hbm_to_vmem [thread:$0]  %s5, 6144, %s44, [#allocation7], 384, 384, 24
    $region25: #{gru_forward.1} parent=1 // pred_fallthru
      _
    // Predicated region
    $region26: #{gru_forward.1} parent=1 // pred_check
      _
    $region27: #{gru_forward.1} parent=1 // pred_check_branch
      %51 = sbr.rel (0) target = $region29
    $region28: #{gru_forward.1} parent=1 // pred_region
      %s53 = ssub.s32 6144, 6144
      %54 = vsyncadd [#allocation7], %s53
      %s55 = sshll.u32 [#allocation8], 4
      %s56 = int_to_ptr.vmem [resolvable:$true] %s55
      %61 = dma.hbm_to_vmem [thread:$0]  %s6, 6144, %s56, [#allocation7], 384, 384, 24
    $region29: #{gru_forward.1} parent=1 // pred_fallthru
      _
    // Predicated region
    $region30: #{gru_forward.1} parent=1 // pred_check
      _
    $region31: #{gru_forward.1} parent=1 // pred_check_branch
      %63 = sbr.rel (0) target = $region33
    $region32: #{gru_forward.1} parent=1 // pred_region
      _
    $region33: #{gru_forward.1} parent=1 // pred_fallthru
      _
    // Predicated region
    $region34: #{gru_forward.1} parent=1 // pred_check
      _
    $region35: #{gru_forward.1} parent=1 // pred_check_branch
      %65 = sbr.rel (0) target = $region37
    $region36: #{gru_forward.1} parent=1 // pred_region
      _
    $region37: #{gru_forward.1} parent=1 // pred_fallthru
      _
    // Predicated region
    $region38: #{gru_forward.1} parent=1 // pred_check
      _
    $region39: #{gru_forward.1} parent=1 // pred_check_branch
      %67 = sbr.rel (0) target = $region41
    $region40: #{gru_forward.1} parent=1 // pred_region
      _
    $region41: #{gru_forward.1} parent=1 // pred_fallthru
      _
    // Predicated region
    $region42: #{gru_forward.1} parent=1 // pred_check
      _
    $region43: #{gru_forward.1} parent=1 // pred_check_branch
      %69 = sbr.rel (0) target = $region45
    $region44: #{gru_forward.1} parent=1 // pred_region
      _
    $region45: #{gru_forward.1} parent=1 // pred_fallthru
      _
    // Predicated region
    $region46: #{gru_forward.1} parent=1 // pred_check
      _
    $region47: #{gru_forward.1} parent=1 // pred_check_branch
      %71 = sbr.rel (0) target = $region49
    $region48: #{gru_forward.1} parent=1 // pred_region
      %72 = dma.done [#allocation5], 6144
    $region49: #{gru_forward.1} parent=1 // pred_fallthru
      _
    // Predicated region
    $region50: #{gru_forward.1} parent=1 // pred_check
      _
    $region51: #{gru_forward.1} parent=1 // pred_check_branch
      %74 = sbr.rel (0) target = $region53
    $region52: #{gru_forward.1} parent=1 // pred_region
      %75 = dma.done [#allocation7], 6144
    $region53: #{gru_forward.1} parent=1 // pred_fallthru
      _
    // Predicated region
    $region54: #{gru_forward.1} parent=1 // pred_check
      _
    $region55: #{gru_forward.1} parent=1 // pred_check_branch
      %77 = sbr.rel (0) target = $region57
    $region56: #{gru_forward.1} parent=1 // pred_region
      %78 = dma.done [#allocation7], 6144
    $region57: #{gru_forward.1} parent=1 // pred_fallthru
      _
    %v79 = vld [vmem:[%s0] sm:$0xff]
    %v80 = vld [vmem:[%s0 + $0x8] sm:$0xff]
    %v81 = vld [vmem:[%s0 + $0x10] sm:$0xff]
    %v82 = vld [vmem:[%s0 + $0x18] sm:$0xff]
    %v83 = vld [vmem:[%s0 + $0x20] sm:$0xff]
    %v84 = vld [vmem:[%s0 + $0x28] sm:$0xff]
    %v85 = vld [vmem:[%s0 + $0x30] sm:$0xff]
    %v86 = vld [vmem:[%s0 + $0x38] sm:$0xff]
    %v87 = vld [vmem:[%s1] sm:$0xff]
    %v88 = vld [vmem:[%s1 + $0x8] sm:$0xff]
    %v89 = vld [vmem:[%s1 + $0x10] sm:$0xff]
    %v90 = vld [vmem:[%s1 + $0x18] sm:$0xff]
    %v91 = vld [vmem:[%s1 + $0x20] sm:$0xff]
    %v92 = vld [vmem:[%s1 + $0x28] sm:$0xff]
    %v93 = vld [vmem:[%s3] sm:$0x7]
    %v95 = vlaneseq
    %v96 = vshrl.u32 %v95, 7
    %v97 = vsub.s32 0, %v96
    %v98 = vrot.slane %v93, %v97
    %v99 = vlaneseq
    %v100 = vshrl.u32 %v99, 7
    %v101 = vsub.s32 1, %v100
    %v102 = vrot.slane %v93, %v101
    %v103 = vlaneseq
    %v104 = vshrl.u32 %v103, 7
    %v105 = vsub.s32 2, %v104
    %v106 = vrot.slane %v93, %v105
    %vm110 = vcmask 130048
    %v112 = vsel %vm110, %v79, 0
    %v115 = vsel %vm110, %v80, 0
    %v118 = vsel %vm110, %v81, 0
    %v121 = vsel %vm110, %v82, 0
    %v124 = vsel %vm110, %v83, 0
    %v127 = vsel %vm110, %v84, 0
    %v130 = vsel %vm110, %v85, 0
    %v133 = vsel %vm110, %v86, 0
    %135 = vmatprep.subr.mxu0 %v88
    %136 = vmatpush1.msra.mxu0 %v87
    %137 = vmatprep.subr.mxu0 %v91
    %138 = vmatpush1.msra.mxu0 %v90
    %139 = vmatprep.subr.mxu0 0.0
    %140 = vmatpush1.msra.mxu0 0.0
    %141 = vmatprep.subr.mxu0 0.0
    %142 = vmatpush1.msra.mxu0 0.0
    %143 = vmatprep.subr.mxu0 0.0
    %144 = vmatpush1.msra.mxu0 0.0
    %145 = vmatprep.subr.mxu0 0.0
    %146 = vmatpush1.msra.mxu0 0.0
    %147 = vmatprep.subr.mxu0 0.0
    %148 = vmatpush1.msra.mxu0 0.0
    %149 = vmatprep.subr.mxu0 0.0
    %150 = vmatpush1.msra.mxu0 0.0
    %151 = vmatprep.subr.mxu0 0.0
    %152 = vmatpush1.msra.mxu0 0.0
    %153 = vmatprep.subr.mxu0 0.0
    %154 = vmatpush1.msra.mxu0 0.0
    %155 = vmatprep.subr.mxu0 0.0
    %156 = vmatpush1.msra.mxu0 0.0
    %157 = vmatprep.subr.mxu0 0.0
    %158 = vmatpush1.msra.mxu0 0.0
    %159 = vmatprep.subr.mxu0 0.0
    %160 = vmatpush1.msra.mxu0 0.0
    %161 = vmatprep.subr.mxu0 0.0
    %162 = vmatpush1.msra.mxu0 0.0
    %163 = vmatprep.subr.mxu0 0.0
    %164 = vmatpush1.msra.mxu0 0.0
    %165 = vmatprep.subr.mxu0 0.0
    %166 = vmatpush1.msra.mxu0 0.0
    %167 = vmatprep.subr.mxu0 0.0
    %168 = vmatpush1.msra.mxu0 0.0
    %169 = vmatprep.subr.mxu0 0.0
    %170 = vmatpush1.msra.mxu0 0.0
    %171 = vmatprep.subr.mxu0 0.0
    %172 = vmatpush1.msra.mxu0 0.0
    %173 = vmatprep.subr.mxu0 0.0
    %174 = vmatpush1.msra.mxu0 0.0
    %175 = vmatprep.subr.mxu0 0.0
    %176 = vmatpush1.msra.mxu0 0.0
    %177 = vmatprep.subr.mxu0 0.0
    %178 = vmatpush1.msra.mxu0 0.0
    %179 = vmatprep.subr.mxu0 0.0
    %180 = vmatpush1.msra.mxu0 0.0
    %181 = vmatprep.subr.mxu0 0.0
    %182 = vmatpush1.msra.mxu0 0.0
    %183 = vmatprep.subr.mxu0 0.0
    %184 = vmatpush1.msra.mxu0 0.0
    %185 = vmatprep.subr.mxu0 0.0
    %186 = vmatpush1.msra.mxu0 0.0
    %187 = vmatprep.subr.mxu0 0.0
    %188 = vmatpush1.msra.mxu0 0.0
    %189 = vmatprep.subr.mxu0 0.0
    %190 = vmatpush1.msra.mxu0 0.0
    %191 = vmatprep.subr.mxu0 0.0
    %192 = vmatpush1.msra.mxu0 0.0
    %193 = vmatprep.subr.mxu0 0.0
    %194 = vmatpush1.msra.mxu0 0.0
    %195 = vmatprep.subr.mxu0 0.0
    %196 = vmatpush1.msra.mxu0 0.0
    %197 = vmatprep.subr.mxu0 0.0
    %198 = vmatpush1.msra.mxu0 0.0
    %199 = vmatprep.mubr.f32.mxu0 0.0
    %200 = vmatmul.mubr.f32.gmra.mrb[0].mxu0 %v112
    %v201 = vpop.f32.mrb[0].mxu0
    %v202 = vadd.f32 %v98, %v201
    %v203 = vpop.f32.mrb[0].mxu0
    %v204 = vadd.f32 %v102, %v203
    %205 = vmatprep.mubr.f32.mxu0 0.0
    %206 = vmatmul.mubr.f32.gmra.mrb[0].mxu0 %v115
    %v207 = vpop.f32.mrb[0].mxu0
    %v208 = vadd.f32 %v98, %v207
    %v209 = vpop.f32.mrb[0].mxu0
    %v210 = vadd.f32 %v102, %v209
    %211 = vmatprep.mubr.f32.mxu0 0.0
    %212 = vmatmul.mubr.f32.gmra.mrb[0].mxu0 %v118
    %v213 = vpop.f32.mrb[0].mxu0
    %v214 = vadd.f32 %v98, %v213
    %v215 = vpop.f32.mrb[0].mxu0
    %v216 = vadd.f32 %v102, %v215
    %217 = vmatprep.mubr.f32.mxu0 0.0
    %218 = vmatmul.mubr.f32.gmra.mrb[0].mxu0 %v121
    %v219 = vpop.f32.mrb[0].mxu0
    %v220 = vadd.f32 %v98, %v219
    %v221 = vpop.f32.mrb[0].mxu0
    %v222 = vadd.f32 %v102, %v221
    %223 = vmatprep.mubr.f32.mxu0 0.0
    %224 = vmatmul.mubr.f32.gmra.mrb[0].mxu0 %v124
    %v225 = vpop.f32.mrb[0].mxu0
    %v226 = vadd.f32 %v98, %v225
    %v227 = vpop.f32.mrb[0].mxu0
    %v228 = vadd.f32 %v102, %v227
    %229 = vmatprep.mubr.f32.mxu0 0.0
    %230 = vmatmul.mubr.f32.gmra.mrb[0].mxu0 %v127
    %v231 = vpop.f32.mrb[0].mxu0
    %v232 = vadd.f32 %v98, %v231
    %v233 = vpop.f32.mrb[0].mxu0
    %v234 = vadd.f32 %v102, %v233
    %235 = vmatprep.mubr.f32.mxu0 0.0
    %236 = vmatmul.mubr.f32.gmra.mrb[0].mxu0 %v130
    %v237 = vpop.f32.mrb[0].mxu0
    %v238 = vadd.f32 %v98, %v237
    %v239 = vpop.f32.mrb[0].mxu0
    %v240 = vadd.f32 %v102, %v239
    %241 = vmatprep.mubr.f32.mxu0 0.0
    %242 = vmatmul.mubr.f32.gmra.mrb[0].mxu0 %v133
    %v243 = vpop.f32.mrb[0].mxu0
    %v244 = vadd.f32 %v98, %v243
    %v245 = vpop.f32.mrb[0].mxu0
    %v246 = vadd.f32 %v102, %v245
    %247 = vdwg.mxu0
    %248 = vmatprep.subr.mxu0 0.0
    %249 = vmatpush1.msra.mxu0 %v89
    %250 = vmatprep.subr.mxu0 0.0
    %251 = vmatpush1.msra.mxu0 %v92
    %252 = vmatprep.subr.mxu0 0.0
    %253 = vmatpush1.msra.mxu0 0.0
    %254 = vmatprep.subr.mxu0 0.0
    %255 = vmatpush1.msra.mxu0 0.0
    %256 = vmatprep.subr.mxu0 0.0
    %257 = vmatpush1.msra.mxu0 0.0
    %258 = vmatprep.subr.mxu0 0.0
    %259 = vmatpush1.msra.mxu0 0.0
    %260 = vmatprep.subr.mxu0 0.0
    %261 = vmatpush1.msra.mxu0 0.0
    %262 = vmatprep.subr.mxu0 0.0
    %263 = vmatpush1.msra.mxu0 0.0
    %264 = vmatprep.subr.mxu0 0.0
    %265 = vmatpush1.msra.mxu0 0.0
    %266 = vmatprep.subr.mxu0 0.0
    %267 = vmatpush1.msra.mxu0 0.0
    %268 = vmatprep.subr.mxu0 0.0
    %269 = vmatpush1.msra.mxu0 0.0
    %270 = vmatprep.subr.mxu0 0.0
    %271 = vmatpush1.msra.mxu0 0.0
    %272 = vmatprep.subr.mxu0 0.0
    %273 = vmatpush1.msra.mxu0 0.0
    %274 = vmatprep.subr.mxu0 0.0
    %275 = vmatpush1.msra.mxu0 0.0
    %276 = vmatprep.subr.mxu0 0.0
    %277 = vmatpush1.msra.mxu0 0.0
    %278 = vmatprep.subr.mxu0 0.0
    %279 = vmatpush1.msra.mxu0 0.0
    %280 = vmatprep.subr.mxu0 0.0
    %281 = vmatpush1.msra.mxu0 0.0
    %282 = vmatprep.subr.mxu0 0.0
    %283 = vmatpush1.msra.mxu0 0.0
    %284 = vmatprep.subr.mxu0 0.0
    %285 = vmatpush1.msra.mxu0 0.0
    %286 = vmatprep.subr.mxu0 0.0
    %287 = vmatpush1.msra.mxu0 0.0
    %288 = vmatprep.subr.mxu0 0.0
    %289 = vmatpush1.msra.mxu0 0.0
    %290 = vmatprep.subr.mxu0 0.0
    %291 = vmatpush1.msra.mxu0 0.0
    %292 = vmatprep.subr.mxu0 0.0
    %293 = vmatpush1.msra.mxu0 0.0
    %294 = vmatprep.subr.mxu0 0.0
    %295 = vmatpush1.msra.mxu0 0.0
    %296 = vmatprep.subr.mxu0 0.0
    %297 = vmatpush1.msra.mxu0 0.0
    %298 = vmatprep.subr.mxu0 0.0
    %299 = vmatpush1.msra.mxu0 0.0
    %300 = vmatprep.subr.mxu0 0.0
    %301 = vmatpush1.msra.mxu0 0.0
    %302 = vmatprep.subr.mxu0 0.0
    %303 = vmatpush1.msra.mxu0 0.0
    %304 = vmatprep.subr.mxu0 0.0
    %305 = vmatpush1.msra.mxu0 0.0
    %306 = vmatprep.subr.mxu0 0.0
    %307 = vmatpush1.msra.mxu0 0.0
    %308 = vmatprep.subr.mxu0 0.0
    %309 = vmatpush1.msra.mxu0 0.0
    %310 = vmatprep.subr.mxu0 0.0
    %311 = vmatpush1.msra.mxu0 0.0
    %312 = vmatprep.mubr.f32.mxu0 0.0
    %313 = vmatmul.mubr.f32.gmra.mrb[0].mxu0 %v112
    %v314 = vpop.f32.mrb[0].mxu0
    %v315 = vadd.f32 %v106, %v314
    %v316 = vpop.f32.mrb[0].mxu0
    %317 = vmatprep.mubr.f32.mxu0 0.0
    %318 = vmatmul.mubr.f32.gmra.mrb[0].mxu0 %v115
    %v319 = vpop.f32.mrb[0].mxu0
    %v320 = vadd.f32 %v106, %v319
    %v321 = vpop.f32.mrb[0].mxu0
    %322 = vmatprep.mubr.f32.mxu0 0.0
    %323 = vmatmul.mubr.f32.gmra.mrb[0].mxu0 %v118
    %v324 = vpop.f32.mrb[0].mxu0
    %v325 = vadd.f32 %v106, %v324
    %v326 = vpop.f32.mrb[0].mxu0
    %327 = vmatprep.mubr.f32.mxu0 0.0
    %328 = vmatmul.mubr.f32.gmra.mrb[0].mxu0 %v121
    %v329 = vpop.f32.mrb[0].mxu0
    %v330 = vadd.f32 %v106, %v329
    %v331 = vpop.f32.mrb[0].mxu0
    %332 = vmatprep.mubr.f32.mxu0 0.0
    %333 = vmatmul.mubr.f32.gmra.mrb[0].mxu0 %v124
    %v334 = vpop.f32.mrb[0].mxu0
    %v335 = vadd.f32 %v106, %v334
    %v336 = vpop.f32.mrb[0].mxu0
    %337 = vmatprep.mubr.f32.mxu0 0.0
    %338 = vmatmul.mubr.f32.gmra.mrb[0].mxu0 %v127
    %v339 = vpop.f32.mrb[0].mxu0
    %v340 = vadd.f32 %v106, %v339
    %v341 = vpop.f32.mrb[0].mxu0
    %342 = vmatprep.mubr.f32.mxu0 0.0
    %343 = vmatmul.mubr.f32.gmra.mrb[0].mxu0 %v130
    %v344 = vpop.f32.mrb[0].mxu0
    %v345 = vadd.f32 %v106, %v344
    %v346 = vpop.f32.mrb[0].mxu0
    %347 = vmatprep.mubr.f32.mxu0 0.0
    %348 = vmatmul.mubr.f32.gmra.mrb[0].mxu0 %v133
    %v349 = vpop.f32.mrb[0].mxu0
    %v350 = vadd.f32 %v106, %v349
    %v351 = vpop.f32.mrb[0].mxu0
    %352 = vdwg.mxu0
    %353 = vst [vmem:[#allocation2] sm:$0xff] %v202
    %354 = vst [vmem:[#allocation2 + $0x8] sm:$0xff] %v204
    %355 = vst [vmem:[#allocation2 + $0x10] sm:$0xff] %v315
    %356 = vst [vmem:[#allocation2 + $0x18] sm:$0xff] %v208
    %357 = vst [vmem:[#allocation2 + $0x20] sm:$0xff] %v210
    %358 = vst [vmem:[#allocation2 + $0x28] sm:$0xff] %v320
    %359 = vst [vmem:[#allocation2 + $0x30] sm:$0xff] %v214
    %360 = vst [vmem:[#allocation2 + $0x38] sm:$0xff] %v216
    %361 = vst [vmem:[#allocation2 + $0x40] sm:$0xff] %v325
    %362 = vst [vmem:[#allocation2 + $0x48] sm:$0xff] %v220
    %363 = vst [vmem:[#allocation2 + $0x50] sm:$0xff] %v222
    %364 = vst [vmem:[#allocation2 + $0x58] sm:$0xff] %v330
    %365 = vst [vmem:[#allocation2 + $0x60] sm:$0xff] %v226
    %366 = vst [vmem:[#allocation2 + $0x68] sm:$0xff] %v228
    %367 = vst [vmem:[#allocation2 + $0x70] sm:$0xff] %v335
    %368 = vst [vmem:[#allocation2 + $0x78] sm:$0xff] %v232
    %369 = vst [vmem:[#allocation2 + $0x80] sm:$0xff] %v234
    %370 = vst [vmem:[#allocation2 + $0x88] sm:$0xff] %v340
    %371 = vst [vmem:[#allocation2 + $0x90] sm:$0xff] %v238
    %372 = vst [vmem:[#allocation2 + $0x98] sm:$0xff] %v240
    %373 = vst [vmem:[#allocation2 + $0xa0] sm:$0xff] %v345
    %374 = vst [vmem:[#allocation2 + $0xa8] sm:$0xff] %v244
    %375 = vst [vmem:[#allocation2 + $0xb0] sm:$0xff] %v246
    %376 = vst [vmem:[#allocation2 + $0xb8] sm:$0xff] %v350
    %v377 = vld [vmem:[#allocation4] sm:$0xff]
    %v378 = vld [vmem:[#allocation4 + $0x8] sm:$0xff]
    %v379 = vld [vmem:[#allocation4 + $0x10] sm:$0xff]
    %v380 = vld [vmem:[#allocation4 + $0x18] sm:$0xff]
    %v381 = vld [vmem:[#allocation4 + $0x20] sm:$0xff]
    %v382 = vld [vmem:[#allocation4 + $0x28] sm:$0xff]
    %v383 = vld [vmem:[#allocation4 + $0x30] sm:$0xff]
    %v384 = vld [vmem:[#allocation4 + $0x38] sm:$0xff]
    %v385 = vld [vmem:[#allocation4 + $0x40] sm:$0xff]
    %v386 = vld [vmem:[#allocation4 + $0x48] sm:$0xff]
    %v387 = vld [vmem:[#allocation4 + $0x50] sm:$0xff]
    %v388 = vld [vmem:[#allocation4 + $0x58] sm:$0xff]
    %v389 = vld [vmem:[#allocation4 + $0x60] sm:$0xff]
    %v390 = vld [vmem:[#allocation4 + $0x68] sm:$0xff]
    %v391 = vld [vmem:[#allocation4 + $0x70] sm:$0xff]
    %v392 = vld [vmem:[#allocation4 + $0x78] sm:$0xff]
    %v393 = vld [vmem:[#allocation4 + $0x80] sm:$0xff]
    %v394 = vld [vmem:[#allocation4 + $0x88] sm:$0xff]
    %v395 = vld [vmem:[#allocation4 + $0x90] sm:$0xff]
    %v396 = vld [vmem:[#allocation4 + $0x98] sm:$0xff]
    %v397 = vld [vmem:[#allocation4 + $0xa0] sm:$0xff]
    %v398 = vld [vmem:[#allocation4 + $0xa8] sm:$0xff]
    %v399 = vld [vmem:[#allocation4 + $0xb0] sm:$0xff]
    %v400 = vld [vmem:[#allocation4 + $0xb8] sm:$0xff]
    %v401 = vld [vmem:[#allocation4 + $0xc0] sm:$0xff]
    %v402 = vld [vmem:[#allocation4 + $0xc8] sm:$0xff]
    %v403 = vld [vmem:[#allocation4 + $0xd0] sm:$0xff]
    %v404 = vld [vmem:[#allocation4 + $0xd8] sm:$0xff]
    %v405 = vld [vmem:[#allocation4 + $0xe0] sm:$0xff]
    %v406 = vld [vmem:[#allocation4 + $0xe8] sm:$0xff]
    %v407 = vld [vmem:[#allocation4 + $0xf0] sm:$0xff]
    %v408 = vld [vmem:[#allocation4 + $0xf8] sm:$0xff]
    %v409 = vld [vmem:[#allocation4 + $0x100] sm:$0xff]
    %v410 = vld [vmem:[#allocation4 + $0x108] sm:$0xff]
    %v411 = vld [vmem:[#allocation4 + $0x110] sm:$0xff]
    %v412 = vld [vmem:[#allocation4 + $0x118] sm:$0xff]
    %v413 = vld [vmem:[#allocation4 + $0x120] sm:$0xff]
    %v414 = vld [vmem:[#allocation4 + $0x128] sm:$0xff]
    %v415 = vld [vmem:[#allocation4 + $0x130] sm:$0xff]
    %v416 = vld [vmem:[#allocation4 + $0x138] sm:$0xff]
    %v417 = vld [vmem:[#allocation4 + $0x140] sm:$0xff]
    %v418 = vld [vmem:[#allocation4 + $0x148] sm:$0xff]
    %v419 = vld [vmem:[#allocation4 + $0x150] sm:$0xff]
    %v420 = vld [vmem:[#allocation4 + $0x158] sm:$0xff]
    %v421 = vld [vmem:[#allocation4 + $0x160] sm:$0xff]
    %v422 = vld [vmem:[#allocation4 + $0x168] sm:$0xff]
    %v423 = vld [vmem:[#allocation4 + $0x170] sm:$0xff]
    %v424 = vld [vmem:[#allocation4 + $0x178] sm:$0xff]
    %v425 = vld [vmem:[%s4] sm:$0x1]
    %v426 = vld [vmem:[#allocation2] sm:$0xff]
    %v427 = vld [vmem:[#allocation2 + $0x8] sm:$0xff]
    %v428 = vld [vmem:[#allocation2 + $0x10] sm:$0xff]
    %429 = vmatprep.subr.mxu0 %v378
    %430 = vmatpush1.msra.mxu0 %v377
    %431 = vmatprep.subr.mxu0 %v381
    %432 = vmatpush1.msra.mxu0 %v380
    %433 = vmatprep.subr.mxu0 %v384
    %434 = vmatpush1.msra.mxu0 %v383
    %435 = vmatprep.subr.mxu0 %v387
    %436 = vmatpush1.msra.mxu0 %v386
    %437 = vmatprep.subr.mxu0 %v390
    %438 = vmatpush1.msra.mxu0 %v389
    %439 = vmatprep.subr.mxu0 %v393
    %440 = vmatpush1.msra.mxu0 %v392
    %441 = vmatprep.subr.mxu0 %v396
    %442 = vmatpush1.msra.mxu0 %v395
    %443 = vmatprep.subr.mxu0 %v399
    %444 = vmatpush1.msra.mxu0 %v398
    %445 = vmatprep.subr.mxu0 %v402
    %446 = vmatpush1.msra.mxu0 %v401
    %447 = vmatprep.subr.mxu0 %v405
    %448 = vmatpush1.msra.mxu0 %v404
    %449 = vmatprep.subr.mxu0 %v408
    %450 = vmatpush1.msra.mxu0 %v407
    %451 = vmatprep.subr.mxu0 %v411
    %452 = vmatpush1.msra.mxu0 %v410
    %453 = vmatprep.subr.mxu0 %v414
    %454 = vmatpush1.msra.mxu0 %v413
    %455 = vmatprep.subr.mxu0 %v417
    %456 = vmatpush1.msra.mxu0 %v416
    %457 = vmatprep.subr.mxu0 %v420
    %458 = vmatpush1.msra.mxu0 %v419
    %459 = vmatprep.subr.mxu0 %v423
    %460 = vmatpush1.msra.mxu0 %v422
    %461 = vmatprep.subr.mxu0 0.0
    %462 = vmatpush1.msra.mxu0 0.0
    %463 = vmatprep.subr.mxu0 0.0
    %464 = vmatpush1.msra.mxu0 0.0
    %465 = vmatprep.subr.mxu0 0.0
    %466 = vmatpush1.msra.mxu0 0.0
    %467 = vmatprep.subr.mxu0 0.0
    %468 = vmatpush1.msra.mxu0 0.0
    %469 = vmatprep.subr.mxu0 0.0
    %470 = vmatpush1.msra.mxu0 0.0
    %471 = vmatprep.subr.mxu0 0.0
    %472 = vmatpush1.msra.mxu0 0.0
    %473 = vmatprep.subr.mxu0 0.0
    %474 = vmatpush1.msra.mxu0 0.0
    %475 = vmatprep.subr.mxu0 0.0
    %476 = vmatpush1.msra.mxu0 0.0
    %477 = vmatprep.subr.mxu0 0.0
    %478 = vmatpush1.msra.mxu0 0.0
    %479 = vmatprep.subr.mxu0 0.0
    %480 = vmatpush1.msra.mxu0 0.0
    %481 = vmatprep.subr.mxu0 0.0
    %482 = vmatpush1.msra.mxu0 0.0
    %483 = vmatprep.subr.mxu0 0.0
    %484 = vmatpush1.msra.mxu0 0.0
    %485 = vmatprep.subr.mxu0 0.0
    %486 = vmatpush1.msra.mxu0 0.0
    %487 = vmatprep.subr.mxu0 0.0
    %488 = vmatpush1.msra.mxu0 0.0
    %489 = vmatprep.subr.mxu0 0.0
    %490 = vmatpush1.msra.mxu0 0.0
    %491 = vmatprep.subr.mxu0 0.0
    %492 = vmatpush1.msra.mxu0 0.0
    %493 = vmatprep.mubr.f32.mxu0 0.0
    %494 = vmatmul.mubr.f32.gmra.mrb[0].mxu0 0.0
    %v495 = vpop.f32.mrb[0].mxu0
    %v496 = vadd.f32 0.0, %v495
    %v497 = vpop.f32.mrb[0].mxu0
    %v498 = vadd.f32 0.0, %v497
    %499 = vdwg.mxu0
    %500 = vmatprep.subr.mxu0 0.0
    %501 = vmatpush1.msra.mxu0 %v379
    %502 = vmatprep.subr.mxu0 0.0
    %503 = vmatpush1.msra.mxu0 %v382
    %504 = vmatprep.subr.mxu0 0.0
    %505 = vmatpush1.msra.mxu0 %v385
    %506 = vmatprep.subr.mxu0 0.0
    %507 = vmatpush1.msra.mxu0 %v388
    %508 = vmatprep.subr.mxu0 0.0
    %509 = vmatpush1.msra.mxu0 %v391
    %510 = vmatprep.subr.mxu0 0.0
    %511 = vmatpush1.msra.mxu0 %v394
    %512 = vmatprep.subr.mxu0 0.0
    %513 = vmatpush1.msra.mxu0 %v397
    %514 = vmatprep.subr.mxu0 0.0
    %515 = vmatpush1.msra.mxu0 %v400
    %516 = vmatprep.subr.mxu0 0.0
    %517 = vmatpush1.msra.mxu0 %v403
    %518 = vmatprep.subr.mxu0 0.0
    %519 = vmatpush1.msra.mxu0 %v406
    %520 = vmatprep.subr.mxu0 0.0
    %521 = vmatpush1.msra.mxu0 %v409
    %522 = vmatprep.subr.mxu0 0.0
    %523 = vmatpush1.msra.mxu0 %v412
    %524 = vmatprep.subr.mxu0 0.0
    %525 = vmatpush1.msra.mxu0 %v415
    %526 = vmatprep.subr.mxu0 0.0
    %527 = vmatpush1.msra.mxu0 %v418
    %528 = vmatprep.subr.mxu0 0.0
    %529 = vmatpush1.msra.mxu0 %v421
    %530 = vmatprep.subr.mxu0 0.0
    %531 = vmatpush1.msra.mxu0 %v424
    %532 = vmatprep.subr.mxu0 0.0
    %533 = vmatpush1.msra.mxu0 0.0
    %534 = vmatprep.subr.mxu0 0.0
    %535 = vmatpush1.msra.mxu0 0.0
    %536 = vmatprep.subr.mxu0 0.0
    %537 = vmatpush1.msra.mxu0 0.0
    %538 = vmatprep.subr.mxu0 0.0
    %539 = vmatpush1.msra.mxu0 0.0
    %540 = vmatprep.subr.mxu0 0.0
    %541 = vmatpush1.msra.mxu0 0.0
    %542 = vmatprep.subr.mxu0 0.0
    %543 = vmatpush1.msra.mxu0 0.0
    %544 = vmatprep.subr.mxu0 0.0
    %545 = vmatpush1.msra.mxu0 0.0
    %546 = vmatprep.subr.mxu0 0.0
    %547 = vmatpush1.msra.mxu0 0.0
    %548 = vmatprep.subr.mxu0 0.0
    %549 = vmatpush1.msra.mxu0 0.0
    %550 = vmatprep.subr.mxu0 0.0
    %551 = vmatpush1.msra.mxu0 0.0
    %552 = vmatprep.subr.mxu0 0.0
    %553 = vmatpush1.msra.mxu0 0.0
    %554 = vmatprep.subr.mxu0 0.0
    %555 = vmatpush1.msra.mxu0 0.0
    %556 = vmatprep.subr.mxu0 0.0
    %557 = vmatpush1.msra.mxu0 0.0
    %558 = vmatprep.subr.mxu0 0.0
    %559 = vmatpush1.msra.mxu0 0.0
    %560 = vmatprep.subr.mxu0 0.0
    %561 = vmatpush1.msra.mxu0 0.0
    %562 = vmatprep.subr.mxu0 0.0
    %563 = vmatpush1.msra.mxu0 0.0
    %564 = vmatprep.mubr.f32.mxu0 0.0
    %565 = vmatmul.mubr.f32.gmra.mrb[0].mxu0 0.0
    %v566 = vpop.f32.mrb[0].mxu0
    %v567 = vadd.f32 0.0, %v566
    %v568 = vpop.f32.mrb[0].mxu0
    %569 = vdwg.mxu0
    %v570 = vadd.f32 %v426, %v496
    %v571 = vxor.u32 %v570, 2147483648
    %v572 = vmul.f32 %v571, 1.442695
    %v573 = vpow.pop %v572
    %v574 = vadd.f32 %v573, 1.0
    %v575 = vrcp.pop %v574
    %v576 = vmul.f32 1.0, %v575
    %v577 = vadd.f32 %v427, %v498
    %v578 = vxor.u32 %v577, 2147483648
    %v579 = vmul.f32 %v578, 1.442695
    %v580 = vpow.pop %v579
    %v581 = vadd.f32 %v580, 1.0
    %v582 = vrcp.pop %v581
    %v583 = vmul.f32 1.0, %v582
    %v585 = vlaneseq
    %v586 = vshrl.u32 %v585, 7
    %v587 = vsub.s32 0, %v586
    %v588 = vrot.slane %v425, %v587
    %v590 = vadd.f32 %v567, %v588
    %v591 = vmul.f32 %v576, %v590
    %v592 = vadd.f32 %v428, %v591
    %v593 = vtanh.pop %v592
    %v594 = vsub.f32 1.0, %v583
    %v595 = vmul.f32 %v594, %v593
    %v596 = vmul.f32 %v583, 0.0
    %v597 = vadd.f32 %v595, %v596
    %598 = vst [vmem:[#allocation3] sm:$0xff] %v597
    %v599 = vld [vmem:[#allocation2 + $0x18] sm:$0xff]
    %v600 = vld [vmem:[#allocation2 + $0x20] sm:$0xff]
    %v601 = vld [vmem:[#allocation2 + $0x28] sm:$0xff]
    %602 = vmatprep.subr.mxu0 %v378
    %603 = vmatpush1.msra.mxu0 %v377
    %604 = vmatprep.subr.mxu0 %v381
    %605 = vmatpush1.msra.mxu0 %v380
    %606 = vmatprep.subr.mxu0 %v384
    %607 = vmatpush1.msra.mxu0 %v383
    %608 = vmatprep.subr.mxu0 %v387
    %609 = vmatpush1.msra.mxu0 %v386
    %610 = vmatprep.subr.mxu0 %v390
    %611 = vmatpush1.msra.mxu0 %v389
    %612 = vmatprep.subr.mxu0 %v393
    %613 = vmatpush1.msra.mxu0 %v392
    %614 = vmatprep.subr.mxu0 %v396
    %615 = vmatpush1.msra.mxu0 %v395
    %616 = vmatprep.subr.mxu0 %v399
    %617 = vmatpush1.msra.mxu0 %v398
    %618 = vmatprep.subr.mxu0 %v402
    %619 = vmatpush1.msra.mxu0 %v401
    %620 = vmatprep.subr.mxu0 %v405
    %621 = vmatpush1.msra.mxu0 %v404
    %622 = vmatprep.subr.mxu0 %v408
    %623 = vmatpush1.msra.mxu0 %v407
    %624 = vmatprep.subr.mxu0 %v411
    %625 = vmatpush1.msra.mxu0 %v410
    %626 = vmatprep.subr.mxu0 %v414
    %627 = vmatpush1.msra.mxu0 %v413
    %628 = vmatprep.subr.mxu0 %v417
    %629 = vmatpush1.msra.mxu0 %v416
    %630 = vmatprep.subr.mxu0 %v420
    %631 = vmatpush1.msra.mxu0 %v419
    %632 = vmatprep.subr.mxu0 %v423
    %633 = vmatpush1.msra.mxu0 %v422
    %634 = vmatprep.subr.mxu0 0.0
    %635 = vmatpush1.msra.mxu0 0.0
    %636 = vmatprep.subr.mxu0 0.0
    %637 = vmatpush1.msra.mxu0 0.0
    %638 = vmatprep.subr.mxu0 0.0
    %639 = vmatpush1.msra.mxu0 0.0
    %640 = vmatprep.subr.mxu0 0.0
    %641 = vmatpush1.msra.mxu0 0.0
    %642 = vmatprep.subr.mxu0 0.0
    %643 = vmatpush1.msra.mxu0 0.0
    %644 = vmatprep.subr.mxu0 0.0
    %645 = vmatpush1.msra.mxu0 0.0
    %646 = vmatprep.subr.mxu0 0.0
    %647 = vmatpush1.msra.mxu0 0.0
    %648 = vmatprep.subr.mxu0 0.0
    %649 = vmatpush1.msra.mxu0 0.0
    %650 = vmatprep.subr.mxu0 0.0
    %651 = vmatpush1.msra.mxu0 0.0
    %652 = vmatprep.subr.mxu0 0.0
    %653 = vmatpush1.msra.mxu0 0.0
    %654 = vmatprep.subr.mxu0 0.0
    %655 = vmatpush1.msra.mxu0 0.0
    %656 = vmatprep.subr.mxu0 0.0
    %657 = vmatpush1.msra.mxu0 0.0
    %658 = vmatprep.subr.mxu0 0.0
    %659 = vmatpush1.msra.mxu0 0.0
    %660 = vmatprep.subr.mxu0 0.0
    %661 = vmatpush1.msra.mxu0 0.0
    %662 = vmatprep.subr.mxu0 0.0
    %663 = vmatpush1.msra.mxu0 0.0
    %664 = vmatprep.subr.mxu0 0.0
    %665 = vmatpush1.msra.mxu0 0.0
    %666 = vmatprep.mubr.f32.mxu0 0.0
    %667 = vmatmul.mubr.f32.gmra.mrb[0].mxu0 %v597
    %v668 = vpop.f32.mrb[0].mxu0
    %v669 = vadd.f32 0.0, %v668
    %v670 = vpop.f32.mrb[0].mxu0
    %v671 = vadd.f32 0.0, %v670
    %672 = vdwg.mxu0
    %673 = vmatprep.subr.mxu0 0.0
    %674 = vmatpush1.msra.mxu0 %v379
    %675 = vmatprep.subr.mxu0 0.0
    %676 = vmatpush1.msra.mxu0 %v382
    %677 = vmatprep.subr.mxu0 0.0
    %678 = vmatpush1.msra.mxu0 %v385
    %679 = vmatprep.subr.mxu0 0.0
    %680 = vmatpush1.msra.mxu0 %v388
    %681 = vmatprep.subr.mxu0 0.0
    %682 = vmatpush1.msra.mxu0 %v391
    %683 = vmatprep.subr.mxu0 0.0
    %684 = vmatpush1.msra.mxu0 %v394
    %685 = vmatprep.subr.mxu0 0.0
    %686 = vmatpush1.msra.mxu0 %v397
    %687 = vmatprep.subr.mxu0 0.0
    %688 = vmatpush1.msra.mxu0 %v400
    %689 = vmatprep.subr.mxu0 0.0
    %690 = vmatpush1.msra.mxu0 %v403
    %691 = vmatprep.subr.mxu0 0.0
    %692 = vmatpush1.msra.mxu0 %v406
    %693 = vmatprep.subr.mxu0 0.0
    %694 = vmatpush1.msra.mxu0 %v409
    %695 = vmatprep.subr.mxu0 0.0
    %696 = vmatpush1.msra.mxu0 %v412
    %697 = vmatprep.subr.mxu0 0.0
    %698 = vmatpush1.msra.mxu0 %v415
    %699 = vmatprep.subr.mxu0 0.0
    %700 = vmatpush1.msra.mxu0 %v418
    %701 = vmatprep.subr.mxu0 0.0
    %702 = vmatpush1.msra.mxu0 %v421
    %703 = vmatprep.subr.mxu0 0.0
    %704 = vmatpush1.msra.mxu0 %v424
    %705 = vmatprep.subr.mxu0 0.0
    %706 = vmatpush1.msra.mxu0 0.0
    %707 = vmatprep.subr.mxu0 0.0
    %708 = vmatpush1.msra.mxu0 0.0
    %709 = vmatprep.subr.mxu0 0.0
    %710 = vmatpush1.msra.mxu0 0.0
    %711 = vmatprep.subr.mxu0 0.0
    %712 = vmatpush1.msra.mxu0 0.0
    %713 = vmatprep.subr.mxu0 0.0
    %714 = vmatpush1.msra.mxu0 0.0
    %715 = vmatprep.subr.mxu0 0.0
    %716 = vmatpush1.msra.mxu0 0.0
    %717 = vmatprep.subr.mxu0 0.0
    %718 = vmatpush1.msra.mxu0 0.0
    %719 = vmatprep.subr.mxu0 0.0
    %720 = vmatpush1.msra.mxu0 0.0
    %721 = vmatprep.subr.mxu0 0.0
    %722 = vmatpush1.msra.mxu0 0.0
    %723 = vmatprep.subr.mxu0 0.0
    %724 = vmatpush1.msra.mxu0 0.0
    %725 = vmatprep.subr.mxu0 0.0
    %726 = vmatpush1.msra.mxu0 0.0
    %727 = vmatprep.subr.mxu0 0.0
    %728 = vmatpush1.msra.mxu0 0.0
    %729 = vmatprep.subr.mxu0 0.0
    %730 = vmatpush1.msra.mxu0 0.0
    %731 = vmatprep.subr.mxu0 0.0
    %732 = vmatpush1.msra.mxu0 0.0
    %733 = vmatprep.subr.mxu0 0.0
    %734 = vmatpush1.msra.mxu0 0.0
    %735 = vmatprep.subr.mxu0 0.0
    %736 = vmatpush1.msra.mxu0 0.0
    %737 = vmatprep.mubr.f32.mxu0 0.0
    %738 = vmatmul.mubr.f32.gmra.mrb[0].mxu0 %v597
    %v739 = vpop.f32.mrb[0].mxu0
    %v740 = vadd.f32 0.0, %v739
    %v741 = vpop.f32.mrb[0].mxu0
    %742 = vdwg.mxu0
    %v743 = vadd.f32 %v599, %v669
    %v744 = vxor.u32 %v743, 2147483648
    %v745 = vmul.f32 %v744, 1.442695
    %v746 = vpow.pop %v745
    %v747 = vadd.f32 %v746, 1.0
    %v748 = vrcp.pop %v747
    %v749 = vmul.f32 1.0, %v748
    %v750 = vadd.f32 %v600, %v671
    %v751 = vxor.u32 %v750, 2147483648
    %v752 = vmul.f32 %v751, 1.442695
    %v753 = vpow.pop %v752
    %v754 = vadd.f32 %v753, 1.0
    %v755 = vrcp.pop %v754
    %v756 = vmul.f32 1.0, %v755
    %v757 = vadd.f32 %v740, %v588
    %v758 = vmul.f32 %v749, %v757
    %v759 = vadd.f32 %v601, %v758
    %v760 = vtanh.pop %v759
    %v761 = vsub.f32 1.0, %v756
    %v762 = vmul.f32 %v761, %v760
    %v763 = vmul.f32 %v756, %v597
    %v764 = vadd.f32 %v762, %v763
    %765 = vst [vmem:[#allocation3 + $0x8] sm:$0xff] %v764
    %v766 = vld [vmem:[#allocation2 + $0x30] sm:$0xff]
    %v767 = vld [vmem:[#allocation2 + $0x38] sm:$0xff]
    %v768 = vld [vmem:[#allocation2 + $0x40] sm:$0xff]
    %769 = vmatprep.subr.mxu0 %v378
    %770 = vmatpush1.msra.mxu0 %v377
    %771 = vmatprep.subr.mxu0 %v381
    %772 = vmatpush1.msra.mxu0 %v380
    %773 = vmatprep.subr.mxu0 %v384
    %774 = vmatpush1.msra.mxu0 %v383
    %775 = vmatprep.subr.mxu0 %v387
    %776 = vmatpush1.msra.mxu0 %v386
    %777 = vmatprep.subr.mxu0 %v390
    %778 = vmatpush1.msra.mxu0 %v389
    %779 = vmatprep.subr.mxu0 %v393
    %780 = vmatpush1.msra.mxu0 %v392
    %781 = vmatprep.subr.mxu0 %v396
    %782 = vmatpush1.msra.mxu0 %v395
    %783 = vmatprep.subr.mxu0 %v399
    %784 = vmatpush1.msra.mxu0 %v398
    %785 = vmatprep.subr.mxu0 %v402
    %786 = vmatpush1.msra.mxu0 %v401
    %787 = vmatprep.subr.mxu0 %v405
    %788 = vmatpush1.msra.mxu0 %v404
    %789 = vmatprep.subr.mxu0 %v408
    %790 = vmatpush1.msra.mxu0 %v407
    %791 = vmatprep.subr.mxu0 %v411
    %792 = vmatpush1.msra.mxu0 %v410
    %793 = vmatprep.subr.mxu0 %v414
    %794 = vmatpush1.msra.mxu0 %v413
    %795 = vmatprep.subr.mxu0 %v417
    %796 = vmatpush1.msra.mxu0 %v416
    %797 = vmatprep.subr.mxu0 %v420
    %798 = vmatpush1.msra.mxu0 %v419
    %799 = vmatprep.subr.mxu0 %v423
    %800 = vmatpush1.msra.mxu0 %v422
    %801 = vmatprep.subr.mxu0 0.0
    %802 = vmatpush1.msra.mxu0 0.0
    %803 = vmatprep.subr.mxu0 0.0
    %804 = vmatpush1.msra.mxu0 0.0
    %805 = vmatprep.subr.mxu0 0.0
    %806 = vmatpush1.msra.mxu0 0.0
    %807 = vmatprep.subr.mxu0 0.0
    %808 = vmatpush1.msra.mxu0 0.0
    %809 = vmatprep.subr.mxu0 0.0
    %810 = vmatpush1.msra.mxu0 0.0
    %811 = vmatprep.subr.mxu0 0.0
    %812 = vmatpush1.msra.mxu0 0.0
    %813 = vmatprep.subr.mxu0 0.0
    %814 = vmatpush1.msra.mxu0 0.0
    %815 = vmatprep.subr.mxu0 0.0
    %816 = vmatpush1.msra.mxu0 0.0
    %817 = vmatprep.subr.mxu0 0.0
    %818 = vmatpush1.msra.mxu0 0.0
    %819 = vmatprep.subr.mxu0 0.0
    %820 = vmatpush1.msra.mxu0 0.0
    %821 = vmatprep.subr.mxu0 0.0
    %822 = vmatpush1.msra.mxu0 0.0
    %823 = vmatprep.subr.mxu0 0.0
    %824 = vmatpush1.msra.mxu0 0.0
    %825 = vmatprep.subr.mxu0 0.0
    %826 = vmatpush1.msra.mxu0 0.0
    %827 = vmatprep.subr.mxu0 0.0
    %828 = vmatpush1.msra.mxu0 0.0
    %829 = vmatprep.subr.mxu0 0.0
    %830 = vmatpush1.msra.mxu0 0.0
    %831 = vmatprep.subr.mxu0 0.0
    %832 = vmatpush1.msra.mxu0 0.0
    %833 = vmatprep.mubr.f32.mxu0 0.0
    %834 = vmatmul.mubr.f32.gmra.mrb[0].mxu0 %v764
    %v835 = vpop.f32.mrb[0].mxu0
    %v836 = vadd.f32 0.0, %v835
    %v837 = vpop.f32.mrb[0].mxu0
    %v838 = vadd.f32 0.0, %v837
    %839 = vdwg.mxu0
    %840 = vmatprep.subr.mxu0 0.0
    %841 = vmatpush1.msra.mxu0 %v379
    %842 = vmatprep.subr.mxu0 0.0
    %843 = vmatpush1.msra.mxu0 %v382
    %844 = vmatprep.subr.mxu0 0.0
    %845 = vmatpush1.msra.mxu0 %v385
    %846 = vmatprep.subr.mxu0 0.0
    %847 = vmatpush1.msra.mxu0 %v388
    %848 = vmatprep.subr.mxu0 0.0
    %849 = vmatpush1.msra.mxu0 %v391
    %850 = vmatprep.subr.mxu0 0.0
    %851 = vmatpush1.msra.mxu0 %v394
    %852 = vmatprep.subr.mxu0 0.0
    %853 = vmatpush1.msra.mxu0 %v397
    %854 = vmatprep.subr.mxu0 0.0
    %855 = vmatpush1.msra.mxu0 %v400
    %856 = vmatprep.subr.mxu0 0.0
    %857 = vmatpush1.msra.mxu0 %v403
    %858 = vmatprep.subr.mxu0 0.0
    %859 = vmatpush1.msra.mxu0 %v406
    %860 = vmatprep.subr.mxu0 0.0
    %861 = vmatpush1.msra.mxu0 %v409
    %862 = vmatprep.subr.mxu0 0.0
    %863 = vmatpush1.msra.mxu0 %v412
    %864 = vmatprep.subr.mxu0 0.0
    %865 = vmatpush1.msra.mxu0 %v415
    %866 = vmatprep.subr.mxu0 0.0
    %867 = vmatpush1.msra.mxu0 %v418
    %868 = vmatprep.subr.mxu0 0.0
    %869 = vmatpush1.msra.mxu0 %v421
    %870 = vmatprep.subr.mxu0 0.0
    %871 = vmatpush1.msra.mxu0 %v424
    %872 = vmatprep.subr.mxu0 0.0
    %873 = vmatpush1.msra.mxu0 0.0
    %874 = vmatprep.subr.mxu0 0.0
    %875 = vmatpush1.msra.mxu0 0.0
    %876 = vmatprep.subr.mxu0 0.0
    %877 = vmatpush1.msra.mxu0 0.0
    %878 = vmatprep.subr.mxu0 0.0
    %879 = vmatpush1.msra.mxu0 0.0
    %880 = vmatprep.subr.mxu0 0.0
    %881 = vmatpush1.msra.mxu0 0.0
    %882 = vmatprep.subr.mxu0 0.0
    %883 = vmatpush1.msra.mxu0 0.0
    %884 = vmatprep.subr.mxu0 0.0
    %885 = vmatpush1.msra.mxu0 0.0
    %886 = vmatprep.subr.mxu0 0.0
    %887 = vmatpush1.msra.mxu0 0.0
    %888 = vmatprep.subr.mxu0 0.0
    %889 = vmatpush1.msra.mxu0 0.0
    %890 = vmatprep.subr.mxu0 0.0
    %891 = vmatpush1.msra.mxu0 0.0
    %892 = vmatprep.subr.mxu0 0.0
    %893 = vmatpush1.msra.mxu0 0.0
    %894 = vmatprep.subr.mxu0 0.0
    %895 = vmatpush1.msra.mxu0 0.0
    %896 = vmatprep.subr.mxu0 0.0
    %897 = vmatpush1.msra.mxu0 0.0
    %898 = vmatprep.subr.mxu0 0.0
    %899 = vmatpush1.msra.mxu0 0.0
    %900 = vmatprep.subr.mxu0 0.0
    %901 = vmatpush1.msra.mxu0 0.0
    %902 = vmatprep.subr.mxu0 0.0
    %903 = vmatpush1.msra.mxu0 0.0
    %904 = vmatprep.mubr.f32.mxu0 0.0
    %905 = vmatmul.mubr.f32.gmra.mrb[0].mxu0 %v764
    %v906 = vpop.f32.mrb[0].mxu0
    %v907 = vadd.f32 0.0, %v906
    %v908 = vpop.f32.mrb[0].mxu0
    %909 = vdwg.mxu0
    %v910 = vadd.f32 %v766, %v836
    %v911 = vxor.u32 %v910, 2147483648
    %v912 = vmul.f32 %v911, 1.442695
    %v913 = vpow.pop %v912
    %v914 = vadd.f32 %v913, 1.0
    %v915 = vrcp.pop %v914
    %v916 = vmul.f32 1.0, %v915
    %v917 = vadd.f32 %v767, %v838
    %v918 = vxor.u32 %v917, 2147483648
    %v919 = vmul.f32 %v918, 1.442695
    %v920 = vpow.pop %v919
    %v921 = vadd.f32 %v920, 1.0
    %v922 = vrcp.pop %v921
    %v923 = vmul.f32 1.0, %v922
    %v924 = vadd.f32 %v907, %v588
    %v925 = vmul.f32 %v916, %v924
    %v926 = vadd.f32 %v768, %v925
    %v927 = vtanh.pop %v926
    %v928 = vsub.f32 1.0, %v923
    %v929 = vmul.f32 %v928, %v927
    %v930 = vmul.f32 %v923, %v764
    %v931 = vadd.f32 %v929, %v930
    %932 = vst [vmem:[#allocation3 + $0x10] sm:$0xff] %v931
    %v933 = vld [vmem:[#allocation2 + $0x48] sm:$0xff]
    %v934 = vld [vmem:[#allocation2 + $0x50] sm:$0xff]
    %v935 = vld [vmem:[#allocation2 + $0x58] sm:$0xff]
    %936 = vmatprep.subr.mxu0 %v378
    %937 = vmatpush1.msra.mxu0 %v377
    %938 = vmatprep.subr.mxu0 %v381
    %939 = vmatpush1.msra.mxu0 %v380
    %940 = vmatprep.subr.mxu0 %v384
    %941 = vmatpush1.msra.mxu0 %v383
    %942 = vmatprep.subr.mxu0 %v387
    %943 = vmatpush1.msra.mxu0 %v386
    %944 = vmatprep.subr.mxu0 %v390
    %945 = vmatpush1.msra.mxu0 %v389
    %946 = vmatprep.subr.mxu0 %v393
    %947 = vmatpush1.msra.mxu0 %v392
    %948 = vmatprep.subr.mxu0 %v396
    %949 = vmatpush1.msra.mxu0 %v395
    %950 = vmatprep.subr.mxu0 %v399
    %951 = vmatpush1.msra.mxu0 %v398
    %952 = vmatprep.subr.mxu0 %v402
    %953 = vmatpush1.msra.mxu0 %v401
    %954 = vmatprep.subr.mxu0 %v405
    %955 = vmatpush1.msra.mxu0 %v404
    %956 = vmatprep.subr.mxu0 %v408
    %957 = vmatpush1.msra.mxu0 %v407
    %958 = vmatprep.subr.mxu0 %v411
    %959 = vmatpush1.msra.mxu0 %v410
    %960 = vmatprep.subr.mxu0 %v414
    %961 = vmatpush1.msra.mxu0 %v413
    %962 = vmatprep.subr.mxu0 %v417
    %963 = vmatpush1.msra.mxu0 %v416
    %964 = vmatprep.subr.mxu0 %v420
    %965 = vmatpush1.msra.mxu0 %v419
    %966 = vmatprep.subr.mxu0 %v423
    %967 = vmatpush1.msra.mxu0 %v422
    %968 = vmatprep.subr.mxu0 0.0
    %969 = vmatpush1.msra.mxu0 0.0
    %970 = vmatprep.subr.mxu0 0.0
    %971 = vmatpush1.msra.mxu0 0.0
    %972 = vmatprep.subr.mxu0 0.0
    %973 = vmatpush1.msra.mxu0 0.0
    %974 = vmatprep.subr.mxu0 0.0
    %975 = vmatpush1.msra.mxu0 0.0
    %976 = vmatprep.subr.mxu0 0.0
    %977 = vmatpush1.msra.mxu0 0.0
    %978 = vmatprep.subr.mxu0 0.0
    %979 = vmatpush1.msra.mxu0 0.0
    %980 = vmatprep.subr.mxu0 0.0
    %981 = vmatpush1.msra.mxu0 0.0
    %982 = vmatprep.subr.mxu0 0.0
    %983 = vmatpush1.msra.mxu0 0.0
    %984 = vmatprep.subr.mxu0 0.0
    %985 = vmatpush1.msra.mxu0 0.0
    %986 = vmatprep.subr.mxu0 0.0
    %987 = vmatpush1.msra.mxu0 0.0
    %988 = vmatprep.subr.mxu0 0.0
    %989 = vmatpush1.msra.mxu0 0.0
    %990 = vmatprep.subr.mxu0 0.0
    %991 = vmatpush1.msra.mxu0 0.0
    %992 = vmatprep.subr.mxu0 0.0
    %993 = vmatpush1.msra.mxu0 0.0
    %994 = vmatprep.subr.mxu0 0.0
    %995 = vmatpush1.msra.mxu0 0.0
    %996 = vmatprep.subr.mxu0 0.0
    %997 = vmatpush1.msra.mxu0 0.0
    %998 = vmatprep.subr.mxu0 0.0
    %999 = vmatpush1.msra.mxu0 0.0
    %1000 = vmatprep.mubr.f32.mxu0 0.0
    %1001 = vmatmul.mubr.f32.gmra.mrb[0].mxu0 %v931
    %v1002 = vpop.f32.mrb[0].mxu0
    %v1003 = vadd.f32 0.0, %v1002
    %v1004 = vpop.f32.mrb[0].mxu0
    %v1005 = vadd.f32 0.0, %v1004
    %1006 = vdwg.mxu0
    %1007 = vmatprep.subr.mxu0 0.0
    %1008 = vmatpush1.msra.mxu0 %v379
    %1009 = vmatprep.subr.mxu0 0.0
    %1010 = vmatpush1.msra.mxu0 %v382
    %1011 = vmatprep.subr.mxu0 0.0
    %1012 = vmatpush1.msra.mxu0 %v385
    %1013 = vmatprep.subr.mxu0 0.0
    %1014 = vmatpush1.msra.mxu0 %v388
    %1015 = vmatprep.subr.mxu0 0.0
    %1016 = vmatpush1.msra.mxu0 %v391
    %1017 = vmatprep.subr.mxu0 0.0
    %1018 = vmatpush1.msra.mxu0 %v394
    %1019 = vmatprep.subr.mxu0 0.0
    %1020 = vmatpush1.msra.mxu0 %v397
    %1021 = vmatprep.subr.mxu0 0.0
    %1022 = vmatpush1.msra.mxu0 %v400
    %1023 = vmatprep.subr.mxu0 0.0
    %1024 = vmatpush1.msra.mxu0 %v403
    %1025 = vmatprep.subr.mxu0 0.0
    %1026 = vmatpush1.msra.mxu0 %v406
    %1027 = vmatprep.subr.mxu0 0.0
    %1028 = vmatpush1.msra.mxu0 %v409
    %1029 = vmatprep.subr.mxu0 0.0
    %1030 = vmatpush1.msra.mxu0 %v412
    %1031 = vmatprep.subr.mxu0 0.0
    %1032 = vmatpush1.msra.mxu0 %v415
    %1033 = vmatprep.subr.mxu0 0.0
    %1034 = vmatpush1.msra.mxu0 %v418
    %1035 = vmatprep.subr.mxu0 0.0
    %1036 = vmatpush1.msra.mxu0 %v421
    %1037 = vmatprep.subr.mxu0 0.0
    %1038 = vmatpush1.msra.mxu0 %v424
    %1039 = vmatprep.subr.mxu0 0.0
    %1040 = vmatpush1.msra.mxu0 0.0
    %1041 = vmatprep.subr.mxu0 0.0
    %1042 = vmatpush1.msra.mxu0 0.0
    %1043 = vmatprep.subr.mxu0 0.0
    %1044 = vmatpush1.msra.mxu0 0.0
    %1045 = vmatprep.subr.mxu0 0.0
    %1046 = vmatpush1.msra.mxu0 0.0
    %1047 = vmatprep.subr.mxu0 0.0
    %1048 = vmatpush1.msra.mxu0 0.0
    %1049 = vmatprep.subr.mxu0 0.0
    %1050 = vmatpush1.msra.mxu0 0.0
    %1051 = vmatprep.subr.mxu0 0.0
    %1052 = vmatpush1.msra.mxu0 0.0
    %1053 = vmatprep.subr.mxu0 0.0
    %1054 = vmatpush1.msra.mxu0 0.0
    %1055 = vmatprep.subr.mxu0 0.0
    %1056 = vmatpush1.msra.mxu0 0.0
    %1057 = vmatprep.subr.mxu0 0.0
    %1058 = vmatpush1.msra.mxu0 0.0
    %1059 = vmatprep.subr.mxu0 0.0
    %1060 = vmatpush1.msra.mxu0 0.0
    %1061 = vmatprep.subr.mxu0 0.0
    %1062 = vmatpush1.msra.mxu0 0.0
    %1063 = vmatprep.subr.mxu0 0.0
    %1064 = vmatpush1.msra.mxu0 0.0
    %1065 = vmatprep.subr.mxu0 0.0
    %1066 = vmatpush1.msra.mxu0 0.0
    %1067 = vmatprep.subr.mxu0 0.0
    %1068 = vmatpush1.msra.mxu0 0.0
    %1069 = vmatprep.subr.mxu0 0.0
    %1070 = vmatpush1.msra.mxu0 0.0
    %1071 = vmatprep.mubr.f32.mxu0 0.0
    %1072 = vmatmul.mubr.f32.gmra.mrb[0].mxu0 %v931
    %v1073 = vpop.f32.mrb[0].mxu0
    %v1074 = vadd.f32 0.0, %v1073
    %v1075 = vpop.f32.mrb[0].mxu0
    %1076 = vdwg.mxu0
    %v1077 = vadd.f32 %v933, %v1003
    %v1078 = vxor.u32 %v1077, 2147483648
    %v1079 = vmul.f32 %v1078, 1.442695
    %v1080 = vpow.pop %v1079
    %v1081 = vadd.f32 %v1080, 1.0
    %v1082 = vrcp.pop %v1081
    %v1083 = vmul.f32 1.0, %v1082
    %v1084 = vadd.f32 %v934, %v1005
    %v1085 = vxor.u32 %v1084, 2147483648
    %v1086 = vmul.f32 %v1085, 1.442695
    %v1087 = vpow.pop %v1086
    %v1088 = vadd.f32 %v1087, 1.0
    %v1089 = vrcp.pop %v1088
    %v1090 = vmul.f32 1.0, %v1089
    %v1091 = vadd.f32 %v1074, %v588
    %v1092 = vmul.f32 %v1083, %v1091
    %v1093 = vadd.f32 %v935, %v1092
    %v1094 = vtanh.pop %v1093
    %v1095 = vsub.f32 1.0, %v1090
    %v1096 = vmul.f32 %v1095, %v1094
    %v1097 = vmul.f32 %v1090, %v931
    %v1098 = vadd.f32 %v1096, %v1097
    %1099 = vst [vmem:[#allocation3 + $0x18] sm:$0xff] %v1098
    %v1100 = vld [vmem:[#allocation2 + $0x60] sm:$0xff]
    %v1101 = vld [vmem:[#allocation2 + $0x68] sm:$0xff]
    %v1102 = vld [vmem:[#allocation2 + $0x70] sm:$0xff]
    %1103 = vmatprep.subr.mxu0 %v378
    %1104 = vmatpush1.msra.mxu0 %v377
    %1105 = vmatprep.subr.mxu0 %v381
    %1106 = vmatpush1.msra.mxu0 %v380
    %1107 = vmatprep.subr.mxu0 %v384
    %1108 = vmatpush1.msra.mxu0 %v383
    %1109 = vmatprep.subr.mxu0 %v387
    %1110 = vmatpush1.msra.mxu0 %v386
    %1111 = vmatprep.subr.mxu0 %v390
    %1112 = vmatpush1.msra.mxu0 %v389
    %1113 = vmatprep.subr.mxu0 %v393
    %1114 = vmatpush1.msra.mxu0 %v392
    %1115 = vmatprep.subr.mxu0 %v396
    %1116 = vmatpush1.msra.mxu0 %v395
    %1117 = vmatprep.subr.mxu0 %v399
    %1118 = vmatpush1.msra.mxu0 %v398
    %1119 = vmatprep.subr.mxu0 %v402
    %1120 = vmatpush1.msra.mxu0 %v401
    %1121 = vmatprep.subr.mxu0 %v405
    %1122 = vmatpush1.msra.mxu0 %v404
    %1123 = vmatprep.subr.mxu0 %v408
    %1124 = vmatpush1.msra.mxu0 %v407
    %1125 = vmatprep.subr.mxu0 %v411
    %1126 = vmatpush1.msra.mxu0 %v410
    %1127 = vmatprep.subr.mxu0 %v414
    %1128 = vmatpush1.msra.mxu0 %v413
    %1129 = vmatprep.subr.mxu0 %v417
    %1130 = vmatpush1.msra.mxu0 %v416
    %1131 = vmatprep.subr.mxu0 %v420
    %1132 = vmatpush1.msra.mxu0 %v419
    %1133 = vmatprep.subr.mxu0 %v423
    %1134 = vmatpush1.msra.mxu0 %v422
    %1135 = vmatprep.subr.mxu0 0.0
    %1136 = vmatpush1.msra.mxu0 0.0
    %1137 = vmatprep.subr.mxu0 0.0
    %1138 = vmatpush1.msra.mxu0 0.0
    %1139 = vmatprep.subr.mxu0 0.0
    %1140 = vmatpush1.msra.mxu0 0.0
    %1141 = vmatprep.subr.mxu0 0.0
    %1142 = vmatpush1.msra.mxu0 0.0
    %1143 = vmatprep.subr.mxu0 0.0
    %1144 = vmatpush1.msra.mxu0 0.0
    %1145 = vmatprep.subr.mxu0 0.0
    %1146 = vmatpush1.msra.mxu0 0.0
    %1147 = vmatprep.subr.mxu0 0.0
    %1148 = vmatpush1.msra.mxu0 0.0
    %1149 = vmatprep.subr.mxu0 0.0
    %1150 = vmatpush1.msra.mxu0 0.0
    %1151 = vmatprep.subr.mxu0 0.0
    %1152 = vmatpush1.msra.mxu0 0.0
    %1153 = vmatprep.subr.mxu0 0.0
    %1154 = vmatpush1.msra.mxu0 0.0
    %1155 = vmatprep.subr.mxu0 0.0
    %1156 = vmatpush1.msra.mxu0 0.0
    %1157 = vmatprep.subr.mxu0 0.0
    %1158 = vmatpush1.msra.mxu0 0.0
    %1159 = vmatprep.subr.mxu0 0.0
    %1160 = vmatpush1.msra.mxu0 0.0
    %1161 = vmatprep.subr.mxu0 0.0
    %1162 = vmatpush1.msra.mxu0 0.0
    %1163 = vmatprep.subr.mxu0 0.0
    %1164 = vmatpush1.msra.mxu0 0.0
    %1165 = vmatprep.subr.mxu0 0.0
    %1166 = vmatpush1.msra.mxu0 0.0
    %1167 = vmatprep.mubr.f32.mxu0 0.0
    %1168 = vmatmul.mubr.f32.gmra.mrb[0].mxu0 %v1098
    %v1169 = vpop.f32.mrb[0].mxu0
    %v1170 = vadd.f32 0.0, %v1169
    %v1171 = vpop.f32.mrb[0].mxu0
    %v1172 = vadd.f32 0.0, %v1171
    %1173 = vdwg.mxu0
    %1174 = vmatprep.subr.mxu0 0.0
    %1175 = vmatpush1.msra.mxu0 %v379
    %1176 = vmatprep.subr.mxu0 0.0
    %1177 = vmatpush1.msra.mxu0 %v382
    %1178 = vmatprep.subr.mxu0 0.0
    %1179 = vmatpush1.msra.mxu0 %v385
    %1180 = vmatprep.subr.mxu0 0.0
    %1181 = vmatpush1.msra.mxu0 %v388
    %1182 = vmatprep.subr.mxu0 0.0
    %1183 = vmatpush1.msra.mxu0 %v391
    %1184 = vmatprep.subr.mxu0 0.0
    %1185 = vmatpush1.msra.mxu0 %v394
    %1186 = vmatprep.subr.mxu0 0.0
    %1187 = vmatpush1.msra.mxu0 %v397
    %1188 = vmatprep.subr.mxu0 0.0
    %1189 = vmatpush1.msra.mxu0 %v400
    %1190 = vmatprep.subr.mxu0 0.0
    %1191 = vmatpush1.msra.mxu0 %v403
    %1192 = vmatprep.subr.mxu0 0.0
    %1193 = vmatpush1.msra.mxu0 %v406
    %1194 = vmatprep.subr.mxu0 0.0
    %1195 = vmatpush1.msra.mxu0 %v409
    %1196 = vmatprep.subr.mxu0 0.0
    %1197 = vmatpush1.msra.mxu0 %v412
    %1198 = vmatprep.subr.mxu0 0.0
    %1199 = vmatpush1.msra.mxu0 %v415
    %1200 = vmatprep.subr.mxu0 0.0
    %1201 = vmatpush1.msra.mxu0 %v418
    %1202 = vmatprep.subr.mxu0 0.0
    %1203 = vmatpush1.msra.mxu0 %v421
    %1204 = vmatprep.subr.mxu0 0.0
    %1205 = vmatpush1.msra.mxu0 %v424
    %1206 = vmatprep.subr.mxu0 0.0
    %1207 = vmatpush1.msra.mxu0 0.0
    %1208 = vmatprep.subr.mxu0 0.0
    %1209 = vmatpush1.msra.mxu0 0.0
    %1210 = vmatprep.subr.mxu0 0.0
    %1211 = vmatpush1.msra.mxu0 0.0
    %1212 = vmatprep.subr.mxu0 0.0
    %1213 = vmatpush1.msra.mxu0 0.0
    %1214 = vmatprep.subr.mxu0 0.0
    %1215 = vmatpush1.msra.mxu0 0.0
    %1216 = vmatprep.subr.mxu0 0.0
    %1217 = vmatpush1.msra.mxu0 0.0
    %1218 = vmatprep.subr.mxu0 0.0
    %1219 = vmatpush1.msra.mxu0 0.0
    %1220 = vmatprep.subr.mxu0 0.0
    %1221 = vmatpush1.msra.mxu0 0.0
    %1222 = vmatprep.subr.mxu0 0.0
    %1223 = vmatpush1.msra.mxu0 0.0
    %1224 = vmatprep.subr.mxu0 0.0
    %1225 = vmatpush1.msra.mxu0 0.0
    %1226 = vmatprep.subr.mxu0 0.0
    %1227 = vmatpush1.msra.mxu0 0.0
    %1228 = vmatprep.subr.mxu0 0.0
    %1229 = vmatpush1.msra.mxu0 0.0
    %1230 = vmatprep.subr.mxu0 0.0
    %1231 = vmatpush1.msra.mxu0 0.0
    %1232 = vmatprep.subr.mxu0 0.0
    %1233 = vmatpush1.msra.mxu0 0.0
    %1234 = vmatprep.subr.mxu0 0.0
    %1235 = vmatpush1.msra.mxu0 0.0
    %1236 = vmatprep.subr.mxu0 0.0
    %1237 = vmatpush1.msra.mxu0 0.0
    %1238 = vmatprep.mubr.f32.mxu0 0.0
    %1239 = vmatmul.mubr.f32.gmra.mrb[0].mxu0 %v1098
    %v1240 = vpop.f32.mrb[0].mxu0
    %v1241 = vadd.f32 0.0, %v1240
    %v1242 = vpop.f32.mrb[0].mxu0
    %1243 = vdwg.mxu0
    %v1244 = vadd.f32 %v1100, %v1170
    %v1245 = vxor.u32 %v1244, 2147483648
    %v1246 = vmul.f32 %v1245, 1.442695
    %v1247 = vpow.pop %v1246
    %v1248 = vadd.f32 %v1247, 1.0
    %v1249 = vrcp.pop %v1248
    %v1250 = vmul.f32 1.0, %v1249
    %v1251 = vadd.f32 %v1101, %v1172
    %v1252 = vxor.u32 %v1251, 2147483648
    %v1253 = vmul.f32 %v1252, 1.442695
    %v1254 = vpow.pop %v1253
    %v1255 = vadd.f32 %v1254, 1.0
    %v1256 = vrcp.pop %v1255
    %v1257 = vmul.f32 1.0, %v1256
    %v1258 = vadd.f32 %v1241, %v588
    %v1259 = vmul.f32 %v1250, %v1258
    %v1260 = vadd.f32 %v1102, %v1259
    %v1261 = vtanh.pop %v1260
    %v1262 = vsub.f32 1.0, %v1257
    %v1263 = vmul.f32 %v1262, %v1261
    %v1264 = vmul.f32 %v1257, %v1098
    %v1265 = vadd.f32 %v1263, %v1264
    %1266 = vst [vmem:[#allocation3 + $0x20] sm:$0xff] %v1265
    %v1267 = vld [vmem:[#allocation2 + $0x78] sm:$0xff]
    %v1268 = vld [vmem:[#allocation2 + $0x80] sm:$0xff]
    %v1269 = vld [vmem:[#allocation2 + $0x88] sm:$0xff]
    %1270 = vmatprep.subr.mxu0 %v378
    %1271 = vmatpush1.msra.mxu0 %v377
    %1272 = vmatprep.subr.mxu0 %v381
    %1273 = vmatpush1.msra.mxu0 %v380
    %1274 = vmatprep.subr.mxu0 %v384
    %1275 = vmatpush1.msra.mxu0 %v383
    %1276 = vmatprep.subr.mxu0 %v387
    %1277 = vmatpush1.msra.mxu0 %v386
    %1278 = vmatprep.subr.mxu0 %v390
    %1279 = vmatpush1.msra.mxu0 %v389
    %1280 = vmatprep.subr.mxu0 %v393
    %1281 = vmatpush1.msra.mxu0 %v392
    %1282 = vmatprep.subr.mxu0 %v396
    %1283 = vmatpush1.msra.mxu0 %v395
    %1284 = vmatprep.subr.mxu0 %v399
    %1285 = vmatpush1.msra.mxu0 %v398
    %1286 = vmatprep.subr.mxu0 %v402
    %1287 = vmatpush1.msra.mxu0 %v401
    %1288 = vmatprep.subr.mxu0 %v405
    %1289 = vmatpush1.msra.mxu0 %v404
    %1290 = vmatprep.subr.mxu0 %v408
    %1291 = vmatpush1.msra.mxu0 %v407
    %1292 = vmatprep.subr.mxu0 %v411
    %1293 = vmatpush1.msra.mxu0 %v410
    %1294 = vmatprep.subr.mxu0 %v414
    %1295 = vmatpush1.msra.mxu0 %v413
    %1296 = vmatprep.subr.mxu0 %v417
    %1297 = vmatpush1.msra.mxu0 %v416
    %1298 = vmatprep.subr.mxu0 %v420
    %1299 = vmatpush1.msra.mxu0 %v419
    %1300 = vmatprep.subr.mxu0 %v423
    %1301 = vmatpush1.msra.mxu0 %v422
    %1302 = vmatprep.subr.mxu0 0.0
    %1303 = vmatpush1.msra.mxu0 0.0
    %1304 = vmatprep.subr.mxu0 0.0
    %1305 = vmatpush1.msra.mxu0 0.0
    %1306 = vmatprep.subr.mxu0 0.0
    %1307 = vmatpush1.msra.mxu0 0.0
    %1308 = vmatprep.subr.mxu0 0.0
    %1309 = vmatpush1.msra.mxu0 0.0
    %1310 = vmatprep.subr.mxu0 0.0
    %1311 = vmatpush1.msra.mxu0 0.0
    %1312 = vmatprep.subr.mxu0 0.0
    %1313 = vmatpush1.msra.mxu0 0.0
    %1314 = vmatprep.subr.mxu0 0.0
    %1315 = vmatpush1.msra.mxu0 0.0
    %1316 = vmatprep.subr.mxu0 0.0
    %1317 = vmatpush1.msra.mxu0 0.0
    %1318 = vmatprep.subr.mxu0 0.0
    %1319 = vmatpush1.msra.mxu0 0.0
    %1320 = vmatprep.subr.mxu0 0.0
    %1321 = vmatpush1.msra.mxu0 0.0
    %1322 = vmatprep.subr.mxu0 0.0
    %1323 = vmatpush1.msra.mxu0 0.0
    %1324 = vmatprep.subr.mxu0 0.0
    %1325 = vmatpush1.msra.mxu0 0.0
    %1326 = vmatprep.subr.mxu0 0.0
    %1327 = vmatpush1.msra.mxu0 0.0
    %1328 = vmatprep.subr.mxu0 0.0
    %1329 = vmatpush1.msra.mxu0 0.0
    %1330 = vmatprep.subr.mxu0 0.0
    %1331 = vmatpush1.msra.mxu0 0.0
    %1332 = vmatprep.subr.mxu0 0.0
    %1333 = vmatpush1.msra.mxu0 0.0
    %1334 = vmatprep.mubr.f32.mxu0 0.0
    %1335 = vmatmul.mubr.f32.gmra.mrb[0].mxu0 %v1265
    %v1336 = vpop.f32.mrb[0].mxu0
    %v1337 = vadd.f32 0.0, %v1336
    %v1338 = vpop.f32.mrb[0].mxu0
    %v1339 = vadd.f32 0.0, %v1338
    %1340 = vdwg.mxu0
    %1341 = vmatprep.subr.mxu0 0.0
    %1342 = vmatpush1.msra.mxu0 %v379
    %1343 = vmatprep.subr.mxu0 0.0
    %1344 = vmatpush1.msra.mxu0 %v382
    %1345 = vmatprep.subr.mxu0 0.0
    %1346 = vmatpush1.msra.mxu0 %v385
    %1347 = vmatprep.subr.mxu0 0.0
    %1348 = vmatpush1.msra.mxu0 %v388
    %1349 = vmatprep.subr.mxu0 0.0
    %1350 = vmatpush1.msra.mxu0 %v391
    %1351 = vmatprep.subr.mxu0 0.0
    %1352 = vmatpush1.msra.mxu0 %v394
    %1353 = vmatprep.subr.mxu0 0.0
    %1354 = vmatpush1.msra.mxu0 %v397
    %1355 = vmatprep.subr.mxu0 0.0
    %1356 = vmatpush1.msra.mxu0 %v400
    %1357 = vmatprep.subr.mxu0 0.0
    %1358 = vmatpush1.msra.mxu0 %v403
    %1359 = vmatprep.subr.mxu0 0.0
    %1360 = vmatpush1.msra.mxu0 %v406
    %1361 = vmatprep.subr.mxu0 0.0
    %1362 = vmatpush1.msra.mxu0 %v409
    %1363 = vmatprep.subr.mxu0 0.0
    %1364 = vmatpush1.msra.mxu0 %v412
    %1365 = vmatprep.subr.mxu0 0.0
    %1366 = vmatpush1.msra.mxu0 %v415
    %1367 = vmatprep.subr.mxu0 0.0
    %1368 = vmatpush1.msra.mxu0 %v418
    %1369 = vmatprep.subr.mxu0 0.0
    %1370 = vmatpush1.msra.mxu0 %v421
    %1371 = vmatprep.subr.mxu0 0.0
    %1372 = vmatpush1.msra.mxu0 %v424
    %1373 = vmatprep.subr.mxu0 0.0
    %1374 = vmatpush1.msra.mxu0 0.0
    %1375 = vmatprep.subr.mxu0 0.0
    %1376 = vmatpush1.msra.mxu0 0.0
    %1377 = vmatprep.subr.mxu0 0.0
    %1378 = vmatpush1.msra.mxu0 0.0
    %1379 = vmatprep.subr.mxu0 0.0
    %1380 = vmatpush1.msra.mxu0 0.0
    %1381 = vmatprep.subr.mxu0 0.0
    %1382 = vmatpush1.msra.mxu0 0.0
    %1383 = vmatprep.subr.mxu0 0.0
    %1384 = vmatpush1.msra.mxu0 0.0
    %1385 = vmatprep.subr.mxu0 0.0
    %1386 = vmatpush1.msra.mxu0 0.0
    %1387 = vmatprep.subr.mxu0 0.0
    %1388 = vmatpush1.msra.mxu0 0.0
    %1389 = vmatprep.subr.mxu0 0.0
    %1390 = vmatpush1.msra.mxu0 0.0
    %1391 = vmatprep.subr.mxu0 0.0
    %1392 = vmatpush1.msra.mxu0 0.0
    %1393 = vmatprep.subr.mxu0 0.0
    %1394 = vmatpush1.msra.mxu0 0.0
    %1395 = vmatprep.subr.mxu0 0.0
    %1396 = vmatpush1.msra.mxu0 0.0
    %1397 = vmatprep.subr.mxu0 0.0
    %1398 = vmatpush1.msra.mxu0 0.0
    %1399 = vmatprep.subr.mxu0 0.0
    %1400 = vmatpush1.msra.mxu0 0.0
    %1401 = vmatprep.subr.mxu0 0.0
    %1402 = vmatpush1.msra.mxu0 0.0
    %1403 = vmatprep.subr.mxu0 0.0
    %1404 = vmatpush1.msra.mxu0 0.0
    %1405 = vmatprep.mubr.f32.mxu0 0.0
    %1406 = vmatmul.mubr.f32.gmra.mrb[0].mxu0 %v1265
    %v1407 = vpop.f32.mrb[0].mxu0
    %v1408 = vadd.f32 0.0, %v1407
    %v1409 = vpop.f32.mrb[0].mxu0
    %1410 = vdwg.mxu0
    %v1411 = vadd.f32 %v1267, %v1337
    %v1412 = vxor.u32 %v1411, 2147483648
    %v1413 = vmul.f32 %v1412, 1.442695
    %v1414 = vpow.pop %v1413
    %v1415 = vadd.f32 %v1414, 1.0
    %v1416 = vrcp.pop %v1415
    %v1417 = vmul.f32 1.0, %v1416
    %v1418 = vadd.f32 %v1268, %v1339
    %v1419 = vxor.u32 %v1418, 2147483648
    %v1420 = vmul.f32 %v1419, 1.442695
    %v1421 = vpow.pop %v1420
    %v1422 = vadd.f32 %v1421, 1.0
    %v1423 = vrcp.pop %v1422
    %v1424 = vmul.f32 1.0, %v1423
    %v1425 = vadd.f32 %v1408, %v588
    %v1426 = vmul.f32 %v1417, %v1425
    %v1427 = vadd.f32 %v1269, %v1426
    %v1428 = vtanh.pop %v1427
    %v1429 = vsub.f32 1.0, %v1424
    %v1430 = vmul.f32 %v1429, %v1428
    %v1431 = vmul.f32 %v1424, %v1265
    %v1432 = vadd.f32 %v1430, %v1431
    %1433 = vst [vmem:[#allocation3 + $0x28] sm:$0xff] %v1432
    %v1434 = vld [vmem:[#allocation2 + $0x90] sm:$0xff]
    %v1435 = vld [vmem:[#allocation2 + $0x98] sm:$0xff]
    %v1436 = vld [vmem:[#allocation2 + $0xa0] sm:$0xff]
    %1437 = vmatprep.subr.mxu0 %v378
    %1438 = vmatpush1.msra.mxu0 %v377
    %1439 = vmatprep.subr.mxu0 %v381
    %1440 = vmatpush1.msra.mxu0 %v380
    %1441 = vmatprep.subr.mxu0 %v384
    %1442 = vmatpush1.msra.mxu0 %v383
    %1443 = vmatprep.subr.mxu0 %v387
    %1444 = vmatpush1.msra.mxu0 %v386
    %1445 = vmatprep.subr.mxu0 %v390
    %1446 = vmatpush1.msra.mxu0 %v389
    %1447 = vmatprep.subr.mxu0 %v393
    %1448 = vmatpush1.msra.mxu0 %v392
    %1449 = vmatprep.subr.mxu0 %v396
    %1450 = vmatpush1.msra.mxu0 %v395
    %1451 = vmatprep.subr.mxu0 %v399
    %1452 = vmatpush1.msra.mxu0 %v398
    %1453 = vmatprep.subr.mxu0 %v402
    %1454 = vmatpush1.msra.mxu0 %v401
    %1455 = vmatprep.subr.mxu0 %v405
    %1456 = vmatpush1.msra.mxu0 %v404
    %1457 = vmatprep.subr.mxu0 %v408
    %1458 = vmatpush1.msra.mxu0 %v407
    %1459 = vmatprep.subr.mxu0 %v411
    %1460 = vmatpush1.msra.mxu0 %v410
    %1461 = vmatprep.subr.mxu0 %v414
    %1462 = vmatpush1.msra.mxu0 %v413
    %1463 = vmatprep.subr.mxu0 %v417
    %1464 = vmatpush1.msra.mxu0 %v416
    %1465 = vmatprep.subr.mxu0 %v420
    %1466 = vmatpush1.msra.mxu0 %v419
    %1467 = vmatprep.subr.mxu0 %v423
    %1468 = vmatpush1.msra.mxu0 %v422
    %1469 = vmatprep.subr.mxu0 0.0
    %1470 = vmatpush1.msra.mxu0 0.0
    %1471 = vmatprep.subr.mxu0 0.0
    %1472 = vmatpush1.msra.mxu0 0.0
    %1473 = vmatprep.subr.mxu0 0.0
    %1474 = vmatpush1.msra.mxu0 0.0
    %1475 = vmatprep.subr.mxu0 0.0
    %1476 = vmatpush1.msra.mxu0 0.0
    %1477 = vmatprep.subr.mxu0 0.0
    %1478 = vmatpush1.msra.mxu0 0.0
    %1479 = vmatprep.subr.mxu0 0.0
    %1480 = vmatpush1.msra.mxu0 0.0
    %1481 = vmatprep.subr.mxu0 0.0
    %1482 = vmatpush1.msra.mxu0 0.0
    %1483 = vmatprep.subr.mxu0 0.0
    %1484 = vmatpush1.msra.mxu0 0.0
    %1485 = vmatprep.subr.mxu0 0.0
    %1486 = vmatpush1.msra.mxu0 0.0
    %1487 = vmatprep.subr.mxu0 0.0
    %1488 = vmatpush1.msra.mxu0 0.0
    %1489 = vmatprep.subr.mxu0 0.0
    %1490 = vmatpush1.msra.mxu0 0.0
    %1491 = vmatprep.subr.mxu0 0.0
    %1492 = vmatpush1.msra.mxu0 0.0
    %1493 = vmatprep.subr.mxu0 0.0
    %1494 = vmatpush1.msra.mxu0 0.0
    %1495 = vmatprep.subr.mxu0 0.0
    %1496 = vmatpush1.msra.mxu0 0.0
    %1497 = vmatprep.subr.mxu0 0.0
    %1498 = vmatpush1.msra.mxu0 0.0
    %1499 = vmatprep.subr.mxu0 0.0
    %1500 = vmatpush1.msra.mxu0 0.0
    %1501 = vmatprep.mubr.f32.mxu0 0.0
    %1502 = vmatmul.mubr.f32.gmra.mrb[0].mxu0 %v1432
    %v1503 = vpop.f32.mrb[0].mxu0
    %v1504 = vadd.f32 0.0, %v1503
    %v1505 = vpop.f32.mrb[0].mxu0
    %v1506 = vadd.f32 0.0, %v1505
    %1507 = vdwg.mxu0
    %1508 = vmatprep.subr.mxu0 0.0
    %1509 = vmatpush1.msra.mxu0 %v379
    %1510 = vmatprep.subr.mxu0 0.0
    %1511 = vmatpush1.msra.mxu0 %v382
    %1512 = vmatprep.subr.mxu0 0.0
    %1513 = vmatpush1.msra.mxu0 %v385
    %1514 = vmatprep.subr.mxu0 0.0
    %1515 = vmatpush1.msra.mxu0 %v388
    %1516 = vmatprep.subr.mxu0 0.0
    %1517 = vmatpush1.msra.mxu0 %v391
    %1518 = vmatprep.subr.mxu0 0.0
    %1519 = vmatpush1.msra.mxu0 %v394
    %1520 = vmatprep.subr.mxu0 0.0
    %1521 = vmatpush1.msra.mxu0 %v397
    %1522 = vmatprep.subr.mxu0 0.0
    %1523 = vmatpush1.msra.mxu0 %v400
    %1524 = vmatprep.subr.mxu0 0.0
    %1525 = vmatpush1.msra.mxu0 %v403
    %1526 = vmatprep.subr.mxu0 0.0
    %1527 = vmatpush1.msra.mxu0 %v406
    %1528 = vmatprep.subr.mxu0 0.0
    %1529 = vmatpush1.msra.mxu0 %v409
    %1530 = vmatprep.subr.mxu0 0.0
    %1531 = vmatpush1.msra.mxu0 %v412
    %1532 = vmatprep.subr.mxu0 0.0
    %1533 = vmatpush1.msra.mxu0 %v415
    %1534 = vmatprep.subr.mxu0 0.0
    %1535 = vmatpush1.msra.mxu0 %v418
    %1536 = vmatprep.subr.mxu0 0.0
    %1537 = vmatpush1.msra.mxu0 %v421
    %1538 = vmatprep.subr.mxu0 0.0
    %1539 = vmatpush1.msra.mxu0 %v424
    %1540 = vmatprep.subr.mxu0 0.0
    %1541 = vmatpush1.msra.mxu0 0.0
    %1542 = vmatprep.subr.mxu0 0.0
    %1543 = vmatpush1.msra.mxu0 0.0
    %1544 = vmatprep.subr.mxu0 0.0
    %1545 = vmatpush1.msra.mxu0 0.0
    %1546 = vmatprep.subr.mxu0 0.0
    %1547 = vmatpush1.msra.mxu0 0.0
    %1548 = vmatprep.subr.mxu0 0.0
    %1549 = vmatpush1.msra.mxu0 0.0
    %1550 = vmatprep.subr.mxu0 0.0
    %1551 = vmatpush1.msra.mxu0 0.0
    %1552 = vmatprep.subr.mxu0 0.0
    %1553 = vmatpush1.msra.mxu0 0.0
    %1554 = vmatprep.subr.mxu0 0.0
    %1555 = vmatpush1.msra.mxu0 0.0
    %1556 = vmatprep.subr.mxu0 0.0
    %1557 = vmatpush1.msra.mxu0 0.0
    %1558 = vmatprep.subr.mxu0 0.0
    %1559 = vmatpush1.msra.mxu0 0.0
    %1560 = vmatprep.subr.mxu0 0.0
    %1561 = vmatpush1.msra.mxu0 0.0
    %1562 = vmatprep.subr.mxu0 0.0
    %1563 = vmatpush1.msra.mxu0 0.0
    %1564 = vmatprep.subr.mxu0 0.0
    %1565 = vmatpush1.msra.mxu0 0.0
    %1566 = vmatprep.subr.mxu0 0.0
    %1567 = vmatpush1.msra.mxu0 0.0
    %1568 = vmatprep.subr.mxu0 0.0
    %1569 = vmatpush1.msra.mxu0 0.0
    %1570 = vmatprep.subr.mxu0 0.0
    %1571 = vmatpush1.msra.mxu0 0.0
    %1572 = vmatprep.mubr.f32.mxu0 0.0
    %1573 = vmatmul.mubr.f32.gmra.mrb[0].mxu0 %v1432
    %v1574 = vpop.f32.mrb[0].mxu0
    %v1575 = vadd.f32 0.0, %v1574
    %v1576 = vpop.f32.mrb[0].mxu0
    %1577 = vdwg.mxu0
    %v1578 = vadd.f32 %v1434, %v1504
    %v1579 = vxor.u32 %v1578, 2147483648
    %v1580 = vmul.f32 %v1579, 1.442695
    %v1581 = vpow.pop %v1580
    %v1582 = vadd.f32 %v1581, 1.0
    %v1583 = vrcp.pop %v1582
    %v1584 = vmul.f32 1.0, %v1583
    %v1585 = vadd.f32 %v1435, %v1506
    %v1586 = vxor.u32 %v1585, 2147483648
    %v1587 = vmul.f32 %v1586, 1.442695
    %v1588 = vpow.pop %v1587
    %v1589 = vadd.f32 %v1588, 1.0
    %v1590 = vrcp.pop %v1589
    %v1591 = vmul.f32 1.0, %v1590
    %v1592 = vadd.f32 %v1575, %v588
    %v1593 = vmul.f32 %v1584, %v1592
    %v1594 = vadd.f32 %v1436, %v1593
    %v1595 = vtanh.pop %v1594
    %v1596 = vsub.f32 1.0, %v1591
    %v1597 = vmul.f32 %v1596, %v1595
    %v1598 = vmul.f32 %v1591, %v1432
    %v1599 = vadd.f32 %v1597, %v1598
    %1600 = vst [vmem:[#allocation3 + $0x30] sm:$0xff] %v1599
    %v1601 = vld [vmem:[#allocation2 + $0xa8] sm:$0xff]
    %v1602 = vld [vmem:[#allocation2 + $0xb0] sm:$0xff]
    %v1603 = vld [vmem:[#allocation2 + $0xb8] sm:$0xff]
    %1604 = vmatprep.subr.mxu0 %v378
    %1605 = vmatpush1.msra.mxu0 %v377
    %1606 = vmatprep.subr.mxu0 %v381
    %1607 = vmatpush1.msra.mxu0 %v380
    %1608 = vmatprep.subr.mxu0 %v384
    %1609 = vmatpush1.msra.mxu0 %v383
    %1610 = vmatprep.subr.mxu0 %v387
    %1611 = vmatpush1.msra.mxu0 %v386
    %1612 = vmatprep.subr.mxu0 %v390
    %1613 = vmatpush1.msra.mxu0 %v389
    %1614 = vmatprep.subr.mxu0 %v393
    %1615 = vmatpush1.msra.mxu0 %v392
    %1616 = vmatprep.subr.mxu0 %v396
    %1617 = vmatpush1.msra.mxu0 %v395
    %1618 = vmatprep.subr.mxu0 %v399
    %1619 = vmatpush1.msra.mxu0 %v398
    %1620 = vmatprep.subr.mxu0 %v402
    %1621 = vmatpush1.msra.mxu0 %v401
    %1622 = vmatprep.subr.mxu0 %v405
    %1623 = vmatpush1.msra.mxu0 %v404
    %1624 = vmatprep.subr.mxu0 %v408
    %1625 = vmatpush1.msra.mxu0 %v407
    %1626 = vmatprep.subr.mxu0 %v411
    %1627 = vmatpush1.msra.mxu0 %v410
    %1628 = vmatprep.subr.mxu0 %v414
    %1629 = vmatpush1.msra.mxu0 %v413
    %1630 = vmatprep.subr.mxu0 %v417
    %1631 = vmatpush1.msra.mxu0 %v416
    %1632 = vmatprep.subr.mxu0 %v420
    %1633 = vmatpush1.msra.mxu0 %v419
    %1634 = vmatprep.subr.mxu0 %v423
    %1635 = vmatpush1.msra.mxu0 %v422
    %1636 = vmatprep.subr.mxu0 0.0
    %1637 = vmatpush1.msra.mxu0 0.0
    %1638 = vmatprep.subr.mxu0 0.0
    %1639 = vmatpush1.msra.mxu0 0.0
    %1640 = vmatprep.subr.mxu0 0.0
    %1641 = vmatpush1.msra.mxu0 0.0
    %1642 = vmatprep.subr.mxu0 0.0
    %1643 = vmatpush1.msra.mxu0 0.0
    %1644 = vmatprep.subr.mxu0 0.0
    %1645 = vmatpush1.msra.mxu0 0.0
    %1646 = vmatprep.subr.mxu0 0.0
    %1647 = vmatpush1.msra.mxu0 0.0
    %1648 = vmatprep.subr.mxu0 0.0
    %1649 = vmatpush1.msra.mxu0 0.0
    %1650 = vmatprep.subr.mxu0 0.0
    %1651 = vmatpush1.msra.mxu0 0.0
    %1652 = vmatprep.subr.mxu0 0.0
    %1653 = vmatpush1.msra.mxu0 0.0
    %1654 = vmatprep.subr.mxu0 0.0
    %1655 = vmatpush1.msra.mxu0 0.0
    %1656 = vmatprep.subr.mxu0 0.0
    %1657 = vmatpush1.msra.mxu0 0.0
    %1658 = vmatprep.subr.mxu0 0.0
    %1659 = vmatpush1.msra.mxu0 0.0
    %1660 = vmatprep.subr.mxu0 0.0
    %1661 = vmatpush1.msra.mxu0 0.0
    %1662 = vmatprep.subr.mxu0 0.0
    %1663 = vmatpush1.msra.mxu0 0.0
    %1664 = vmatprep.subr.mxu0 0.0
    %1665 = vmatpush1.msra.mxu0 0.0
    %1666 = vmatprep.subr.mxu0 0.0
    %1667 = vmatpush1.msra.mxu0 0.0
    %1668 = vmatprep.mubr.f32.mxu0 0.0
    %1669 = vmatmul.mubr.f32.gmra.mrb[0].mxu0 %v1599
    %v1670 = vpop.f32.mrb[0].mxu0
    %v1671 = vadd.f32 0.0, %v1670
    %v1672 = vpop.f32.mrb[0].mxu0
    %v1673 = vadd.f32 0.0, %v1672
    %1674 = vdwg.mxu0
    %1675 = vmatprep.subr.mxu0 0.0
    %1676 = vmatpush1.msra.mxu0 %v379
    %1677 = vmatprep.subr.mxu0 0.0
    %1678 = vmatpush1.msra.mxu0 %v382
    %1679 = vmatprep.subr.mxu0 0.0
    %1680 = vmatpush1.msra.mxu0 %v385
    %1681 = vmatprep.subr.mxu0 0.0
    %1682 = vmatpush1.msra.mxu0 %v388
    %1683 = vmatprep.subr.mxu0 0.0
    %1684 = vmatpush1.msra.mxu0 %v391
    %1685 = vmatprep.subr.mxu0 0.0
    %1686 = vmatpush1.msra.mxu0 %v394
    %1687 = vmatprep.subr.mxu0 0.0
    %1688 = vmatpush1.msra.mxu0 %v397
    %1689 = vmatprep.subr.mxu0 0.0
    %1690 = vmatpush1.msra.mxu0 %v400
    %1691 = vmatprep.subr.mxu0 0.0
    %1692 = vmatpush1.msra.mxu0 %v403
    %1693 = vmatprep.subr.mxu0 0.0
    %1694 = vmatpush1.msra.mxu0 %v406
    %1695 = vmatprep.subr.mxu0 0.0
    %1696 = vmatpush1.msra.mxu0 %v409
    %1697 = vmatprep.subr.mxu0 0.0
    %1698 = vmatpush1.msra.mxu0 %v412
    %1699 = vmatprep.subr.mxu0 0.0
    %1700 = vmatpush1.msra.mxu0 %v415
    %1701 = vmatprep.subr.mxu0 0.0
    %1702 = vmatpush1.msra.mxu0 %v418
    %1703 = vmatprep.subr.mxu0 0.0
    %1704 = vmatpush1.msra.mxu0 %v421
    %1705 = vmatprep.subr.mxu0 0.0
    %1706 = vmatpush1.msra.mxu0 %v424
    %1707 = vmatprep.subr.mxu0 0.0
    %1708 = vmatpush1.msra.mxu0 0.0
    %1709 = vmatprep.subr.mxu0 0.0
    %1710 = vmatpush1.msra.mxu0 0.0
    %1711 = vmatprep.subr.mxu0 0.0
    %1712 = vmatpush1.msra.mxu0 0.0
    %1713 = vmatprep.subr.mxu0 0.0
    %1714 = vmatpush1.msra.mxu0 0.0
    %1715 = vmatprep.subr.mxu0 0.0
    %1716 = vmatpush1.msra.mxu0 0.0
    %1717 = vmatprep.subr.mxu0 0.0
    %1718 = vmatpush1.msra.mxu0 0.0
    %1719 = vmatprep.subr.mxu0 0.0
    %1720 = vmatpush1.msra.mxu0 0.0
    %1721 = vmatprep.subr.mxu0 0.0
    %1722 = vmatpush1.msra.mxu0 0.0
    %1723 = vmatprep.subr.mxu0 0.0
    %1724 = vmatpush1.msra.mxu0 0.0
    %1725 = vmatprep.subr.mxu0 0.0
    %1726 = vmatpush1.msra.mxu0 0.0
    %1727 = vmatprep.subr.mxu0 0.0
    %1728 = vmatpush1.msra.mxu0 0.0
    %1729 = vmatprep.subr.mxu0 0.0
    %1730 = vmatpush1.msra.mxu0 0.0
    %1731 = vmatprep.subr.mxu0 0.0
    %1732 = vmatpush1.msra.mxu0 0.0
    %1733 = vmatprep.subr.mxu0 0.0
    %1734 = vmatpush1.msra.mxu0 0.0
    %1735 = vmatprep.subr.mxu0 0.0
    %1736 = vmatpush1.msra.mxu0 0.0
    %1737 = vmatprep.subr.mxu0 0.0
    %1738 = vmatpush1.msra.mxu0 0.0
    %1739 = vmatprep.mubr.f32.mxu0 0.0
    %1740 = vmatmul.mubr.f32.gmra.mrb[0].mxu0 %v1599
    %v1741 = vpop.f32.mrb[0].mxu0
    %v1742 = vadd.f32 0.0, %v1741
    %v1743 = vpop.f32.mrb[0].mxu0
    %1744 = vdwg.mxu0
    %v1745 = vadd.f32 %v1601, %v1671
    %v1746 = vxor.u32 %v1745, 2147483648
    %v1747 = vmul.f32 %v1746, 1.442695
    %v1748 = vpow.pop %v1747
    %v1749 = vadd.f32 %v1748, 1.0
    %v1750 = vrcp.pop %v1749
    %v1751 = vmul.f32 1.0, %v1750
    %v1752 = vadd.f32 %v1602, %v1673
    %v1753 = vxor.u32 %v1752, 2147483648
    %v1754 = vmul.f32 %v1753, 1.442695
    %v1755 = vpow.pop %v1754
    %v1756 = vadd.f32 %v1755, 1.0
    %v1757 = vrcp.pop %v1756
    %v1758 = vmul.f32 1.0, %v1757
    %v1759 = vadd.f32 %v1742, %v588
    %v1760 = vmul.f32 %v1751, %v1759
    %v1761 = vadd.f32 %v1603, %v1760
    %v1762 = vtanh.pop %v1761
    %v1763 = vsub.f32 1.0, %v1758
    %v1764 = vmul.f32 %v1763, %v1762
    %v1765 = vmul.f32 %v1758, %v1599
    %v1766 = vadd.f32 %v1764, %v1765
    %1767 = vst [vmem:[#allocation3 + $0x38] sm:$0xff] %v1766
    %v1768 = vld [vmem:[#allocation3] sm:$0xff]
    %v1769 = vld [vmem:[#allocation3 + $0x8] sm:$0xff]
    %v1770 = vld [vmem:[#allocation3 + $0x10] sm:$0xff]
    %v1771 = vld [vmem:[#allocation3 + $0x18] sm:$0xff]
    %v1772 = vld [vmem:[#allocation3 + $0x20] sm:$0xff]
    %v1773 = vld [vmem:[#allocation3 + $0x28] sm:$0xff]
    %v1774 = vld [vmem:[#allocation3 + $0x30] sm:$0xff]
    %v1775 = vld [vmem:[#allocation3 + $0x38] sm:$0xff]
    %v1776 = vld [vmem:[#allocation6] sm:$0xff]
    %v1777 = vld [vmem:[#allocation6 + $0x8] sm:$0xff]
    %v1778 = vld [vmem:[#allocation6 + $0x10] sm:$0xff]
    %v1779 = vld [vmem:[#allocation6 + $0x18] sm:$0xff]
    %v1780 = vld [vmem:[#allocation6 + $0x20] sm:$0xff]
    %v1781 = vld [vmem:[#allocation6 + $0x28] sm:$0xff]
    %v1782 = vld [vmem:[#allocation6 + $0x30] sm:$0xff]
    %v1783 = vld [vmem:[#allocation6 + $0x38] sm:$0xff]
    %v1784 = vld [vmem:[#allocation6 + $0x40] sm:$0xff]
    %v1785 = vld [vmem:[#allocation6 + $0x48] sm:$0xff]
    %v1786 = vld [vmem:[#allocation6 + $0x50] sm:$0xff]
    %v1787 = vld [vmem:[#allocation6 + $0x58] sm:$0xff]
    %v1788 = vld [vmem:[#allocation6 + $0x60] sm:$0xff]
    %v1789 = vld [vmem:[#allocation6 + $0x68] sm:$0xff]
    %v1790 = vld [vmem:[#allocation6 + $0x70] sm:$0xff]
    %v1791 = vld [vmem:[#allocation6 + $0x78] sm:$0xff]
    %v1792 = vld [vmem:[#allocation6 + $0x80] sm:$0xff]
    %v1793 = vld [vmem:[#allocation6 + $0x88] sm:$0xff]
    %v1794 = vld [vmem:[#allocation6 + $0x90] sm:$0xff]
    %v1795 = vld [vmem:[#allocation6 + $0x98] sm:$0xff]
    %v1796 = vld [vmem:[#allocation6 + $0xa0] sm:$0xff]
    %v1797 = vld [vmem:[#allocation6 + $0xa8] sm:$0xff]
    %v1798 = vld [vmem:[#allocation6 + $0xb0] sm:$0xff]
    %v1799 = vld [vmem:[#allocation6 + $0xb8] sm:$0xff]
    %v1800 = vld [vmem:[#allocation6 + $0xc0] sm:$0xff]
    %v1801 = vld [vmem:[#allocation6 + $0xc8] sm:$0xff]
    %v1802 = vld [vmem:[#allocation6 + $0xd0] sm:$0xff]
    %v1803 = vld [vmem:[#allocation6 + $0xd8] sm:$0xff]
    %v1804 = vld [vmem:[#allocation6 + $0xe0] sm:$0xff]
    %v1805 = vld [vmem:[#allocation6 + $0xe8] sm:$0xff]
    %v1806 = vld [vmem:[#allocation6 + $0xf0] sm:$0xff]
    %v1807 = vld [vmem:[#allocation6 + $0xf8] sm:$0xff]
    %v1808 = vld [vmem:[#allocation6 + $0x100] sm:$0xff]
    %v1809 = vld [vmem:[#allocation6 + $0x108] sm:$0xff]
    %v1810 = vld [vmem:[#allocation6 + $0x110] sm:$0xff]
    %v1811 = vld [vmem:[#allocation6 + $0x118] sm:$0xff]
    %v1812 = vld [vmem:[#allocation6 + $0x120] sm:$0xff]
    %v1813 = vld [vmem:[#allocation6 + $0x128] sm:$0xff]
    %v1814 = vld [vmem:[#allocation6 + $0x130] sm:$0xff]
    %v1815 = vld [vmem:[#allocation6 + $0x138] sm:$0xff]
    %v1816 = vld [vmem:[#allocation6 + $0x140] sm:$0xff]
    %v1817 = vld [vmem:[#allocation6 + $0x148] sm:$0xff]
    %v1818 = vld [vmem:[#allocation6 + $0x150] sm:$0xff]
    %v1819 = vld [vmem:[#allocation6 + $0x158] sm:$0xff]
    %v1820 = vld [vmem:[#allocation6 + $0x160] sm:$0xff]
    %v1821 = vld [vmem:[#allocation6 + $0x168] sm:$0xff]
    %v1822 = vld [vmem:[#allocation6 + $0x170] sm:$0xff]
    %v1823 = vld [vmem:[#allocation6 + $0x178] sm:$0xff]
    %v1824 = vld [vmem:[%s7] sm:$0x7]
    %v1826 = vlaneseq
    %v1827 = vshrl.u32 %v1826, 7
    %v1828 = vsub.s32 0, %v1827
    %v1829 = vrot.slane %v1824, %v1828
    %v1830 = vlaneseq
    %v1831 = vshrl.u32 %v1830, 7
    %v1832 = vsub.s32 1, %v1831
    %v1833 = vrot.slane %v1824, %v1832
    %v1834 = vlaneseq
    %v1835 = vshrl.u32 %v1834, 7
    %v1836 = vsub.s32 2, %v1835
    %v1837 = vrot.slane %v1824, %v1836
    %1841 = vmatprep.subr.mxu0 %v1777
    %1842 = vmatpush1.msra.mxu0 %v1776
    %1843 = vmatprep.subr.mxu0 %v1780
    %1844 = vmatpush1.msra.mxu0 %v1779
    %1845 = vmatprep.subr.mxu0 %v1783
    %1846 = vmatpush1.msra.mxu0 %v1782
    %1847 = vmatprep.subr.mxu0 %v1786
    %1848 = vmatpush1.msra.mxu0 %v1785
    %1849 = vmatprep.subr.mxu0 %v1789
    %1850 = vmatpush1.msra.mxu0 %v1788
    %1851 = vmatprep.subr.mxu0 %v1792
    %1852 = vmatpush1.msra.mxu0 %v1791
    %1853 = vmatprep.subr.mxu0 %v1795
    %1854 = vmatpush1.msra.mxu0 %v1794
    %1855 = vmatprep.subr.mxu0 %v1798
    %1856 = vmatpush1.msra.mxu0 %v1797
    %1857 = vmatprep.subr.mxu0 %v1801
    %1858 = vmatpush1.msra.mxu0 %v1800
    %1859 = vmatprep.subr.mxu0 %v1804
    %1860 = vmatpush1.msra.mxu0 %v1803
    %1861 = vmatprep.subr.mxu0 %v1807
    %1862 = vmatpush1.msra.mxu0 %v1806
    %1863 = vmatprep.subr.mxu0 %v1810
    %1864 = vmatpush1.msra.mxu0 %v1809
    %1865 = vmatprep.subr.mxu0 %v1813
    %1866 = vmatpush1.msra.mxu0 %v1812
    %1867 = vmatprep.subr.mxu0 %v1816
    %1868 = vmatpush1.msra.mxu0 %v1815
    %1869 = vmatprep.subr.mxu0 %v1819
    %1870 = vmatpush1.msra.mxu0 %v1818
    %1871 = vmatprep.subr.mxu0 %v1822
    %1872 = vmatpush1.msra.mxu0 %v1821
    %1873 = vmatprep.subr.mxu0 0.0
    %1874 = vmatpush1.msra.mxu0 0.0
    %1875 = vmatprep.subr.mxu0 0.0
    %1876 = vmatpush1.msra.mxu0 0.0
    %1877 = vmatprep.subr.mxu0 0.0
    %1878 = vmatpush1.msra.mxu0 0.0
    %1879 = vmatprep.subr.mxu0 0.0
    %1880 = vmatpush1.msra.mxu0 0.0
    %1881 = vmatprep.subr.mxu0 0.0
    %1882 = vmatpush1.msra.mxu0 0.0
    %1883 = vmatprep.subr.mxu0 0.0
    %1884 = vmatpush1.msra.mxu0 0.0
    %1885 = vmatprep.subr.mxu0 0.0
    %1886 = vmatpush1.msra.mxu0 0.0
    %1887 = vmatprep.subr.mxu0 0.0
    %1888 = vmatpush1.msra.mxu0 0.0
    %1889 = vmatprep.subr.mxu0 0.0
    %1890 = vmatpush1.msra.mxu0 0.0
    %1891 = vmatprep.subr.mxu0 0.0
    %1892 = vmatpush1.msra.mxu0 0.0
    %1893 = vmatprep.subr.mxu0 0.0
    %1894 = vmatpush1.msra.mxu0 0.0
    %1895 = vmatprep.subr.mxu0 0.0
    %1896 = vmatpush1.msra.mxu0 0.0
    %1897 = vmatprep.subr.mxu0 0.0
    %1898 = vmatpush1.msra.mxu0 0.0
    %1899 = vmatprep.subr.mxu0 0.0
    %1900 = vmatpush1.msra.mxu0 0.0
    %1901 = vmatprep.subr.mxu0 0.0
    %1902 = vmatpush1.msra.mxu0 0.0
    %1903 = vmatprep.subr.mxu0 0.0
    %1904 = vmatpush1.msra.mxu0 0.0
    %1905 = vmatprep.mubr.f32.mxu0 0.0
    %1906 = vmatmul.mubr.f32.gmra.mrb[0].mxu0 %v1768
    %v1907 = vpop.f32.mrb[0].mxu0
    %v1908 = vadd.f32 %v1829, %v1907
    %v1909 = vpop.f32.mrb[0].mxu0
    %v1910 = vadd.f32 %v1833, %v1909
    %1911 = vmatprep.mubr.f32.mxu0 0.0
    %1912 = vmatmul.mubr.f32.gmra.mrb[0].mxu0 %v1769
    %v1913 = vpop.f32.mrb[0].mxu0
    %v1914 = vadd.f32 %v1829, %v1913
    %v1915 = vpop.f32.mrb[0].mxu0
    %v1916 = vadd.f32 %v1833, %v1915
    %1917 = vmatprep.mubr.f32.mxu0 0.0
    %1918 = vmatmul.mubr.f32.gmra.mrb[0].mxu0 %v1770
    %v1919 = vpop.f32.mrb[0].mxu0
    %v1920 = vadd.f32 %v1829, %v1919
    %v1921 = vpop.f32.mrb[0].mxu0
    %v1922 = vadd.f32 %v1833, %v1921
    %1923 = vmatprep.mubr.f32.mxu0 0.0
    %1924 = vmatmul.mubr.f32.gmra.mrb[0].mxu0 %v1771
    %v1925 = vpop.f32.mrb[0].mxu0
    %v1926 = vadd.f32 %v1829, %v1925
    %v1927 = vpop.f32.mrb[0].mxu0
    %v1928 = vadd.f32 %v1833, %v1927
    %1929 = vmatprep.mubr.f32.mxu0 0.0
    %1930 = vmatmul.mubr.f32.gmra.mrb[0].mxu0 %v1772
    %v1931 = vpop.f32.mrb[0].mxu0
    %v1932 = vadd.f32 %v1829, %v1931
    %v1933 = vpop.f32.mrb[0].mxu0
    %v1934 = vadd.f32 %v1833, %v1933
    %1935 = vmatprep.mubr.f32.mxu0 0.0
    %1936 = vmatmul.mubr.f32.gmra.mrb[0].mxu0 %v1773
    %v1937 = vpop.f32.mrb[0].mxu0
    %v1938 = vadd.f32 %v1829, %v1937
    %v1939 = vpop.f32.mrb[0].mxu0
    %v1940 = vadd.f32 %v1833, %v1939
    %1941 = vmatprep.mubr.f32.mxu0 0.0
    %1942 = vmatmul.mubr.f32.gmra.mrb[0].mxu0 %v1774
    %v1943 = vpop.f32.mrb[0].mxu0
    %v1944 = vadd.f32 %v1829, %v1943
    %v1945 = vpop.f32.mrb[0].mxu0
    %v1946 = vadd.f32 %v1833, %v1945
    %1947 = vmatprep.mubr.f32.mxu0 0.0
    %1948 = vmatmul.mubr.f32.gmra.mrb[0].mxu0 %v1775
    %v1949 = vpop.f32.mrb[0].mxu0
    %v1950 = vadd.f32 %v1829, %v1949
    %v1951 = vpop.f32.mrb[0].mxu0
    %v1952 = vadd.f32 %v1833, %v1951
    %1953 = vdwg.mxu0
    %1954 = vmatprep.subr.mxu0 0.0
    %1955 = vmatpush1.msra.mxu0 %v1778
    %1956 = vmatprep.subr.mxu0 0.0
    %1957 = vmatpush1.msra.mxu0 %v1781
    %1958 = vmatprep.subr.mxu0 0.0
    %1959 = vmatpush1.msra.mxu0 %v1784
    %1960 = vmatprep.subr.mxu0 0.0
    %1961 = vmatpush1.msra.mxu0 %v1787
    %1962 = vmatprep.subr.mxu0 0.0
    %1963 = vmatpush1.msra.mxu0 %v1790
    %1964 = vmatprep.subr.mxu0 0.0
    %1965 = vmatpush1.msra.mxu0 %v1793
    %1966 = vmatprep.subr.mxu0 0.0
    %1967 = vmatpush1.msra.mxu0 %v1796
    %1968 = vmatprep.subr.mxu0 0.0
    %1969 = vmatpush1.msra.mxu0 %v1799
    %1970 = vmatprep.subr.mxu0 0.0
    %1971 = vmatpush1.msra.mxu0 %v1802
    %1972 = vmatprep.subr.mxu0 0.0
    %1973 = vmatpush1.msra.mxu0 %v1805
    %1974 = vmatprep.subr.mxu0 0.0
    %1975 = vmatpush1.msra.mxu0 %v1808
    %1976 = vmatprep.subr.mxu0 0.0
    %1977 = vmatpush1.msra.mxu0 %v1811
    %1978 = vmatprep.subr.mxu0 0.0
    %1979 = vmatpush1.msra.mxu0 %v1814
    %1980 = vmatprep.subr.mxu0 0.0
    %1981 = vmatpush1.msra.mxu0 %v1817
    %1982 = vmatprep.subr.mxu0 0.0
    %1983 = vmatpush1.msra.mxu0 %v1820
    %1984 = vmatprep.subr.mxu0 0.0
    %1985 = vmatpush1.msra.mxu0 %v1823
    %1986 = vmatprep.subr.mxu0 0.0
    %1987 = vmatpush1.msra.mxu0 0.0
    %1988 = vmatprep.subr.mxu0 0.0
    %1989 = vmatpush1.msra.mxu0 0.0
    %1990 = vmatprep.subr.mxu0 0.0
    %1991 = vmatpush1.msra.mxu0 0.0
    %1992 = vmatprep.subr.mxu0 0.0
    %1993 = vmatpush1.msra.mxu0 0.0
    %1994 = vmatprep.subr.mxu0 0.0
    %1995 = vmatpush1.msra.mxu0 0.0
    %1996 = vmatprep.subr.mxu0 0.0
    %1997 = vmatpush1.msra.mxu0 0.0
    %1998 = vmatprep.subr.mxu0 0.0
    %1999 = vmatpush1.msra.mxu0 0.0
    %2000 = vmatprep.subr.mxu0 0.0
    %2001 = vmatpush1.msra.mxu0 0.0
    %2002 = vmatprep.subr.mxu0 0.0
    %2003 = vmatpush1.msra.mxu0 0.0
    %2004 = vmatprep.subr.mxu0 0.0
    %2005 = vmatpush1.msra.mxu0 0.0
    %2006 = vmatprep.subr.mxu0 0.0
    %2007 = vmatpush1.msra.mxu0 0.0
    %2008 = vmatprep.subr.mxu0 0.0
    %2009 = vmatpush1.msra.mxu0 0.0
    %2010 = vmatprep.subr.mxu0 0.0
    %2011 = vmatpush1.msra.mxu0 0.0
    %2012 = vmatprep.subr.mxu0 0.0
    %2013 = vmatpush1.msra.mxu0 0.0
    %2014 = vmatprep.subr.mxu0 0.0
    %2015 = vmatpush1.msra.mxu0 0.0
    %2016 = vmatprep.subr.mxu0 0.0
    %2017 = vmatpush1.msra.mxu0 0.0
    %2018 = vmatprep.mubr.f32.mxu0 0.0
    %2019 = vmatmul.mubr.f32.gmra.mrb[0].mxu0 %v1768
    %v2020 = vpop.f32.mrb[0].mxu0
    %v2021 = vadd.f32 %v1837, %v2020
    %v2022 = vpop.f32.mrb[0].mxu0
    %2023 = vmatprep.mubr.f32.mxu0 0.0
    %2024 = vmatmul.mubr.f32.gmra.mrb[0].mxu0 %v1769
    %v2025 = vpop.f32.mrb[0].mxu0
    %v2026 = vadd.f32 %v1837, %v2025
    %v2027 = vpop.f32.mrb[0].mxu0
    %2028 = vmatprep.mubr.f32.mxu0 0.0
    %2029 = vmatmul.mubr.f32.gmra.mrb[0].mxu0 %v1770
    %v2030 = vpop.f32.mrb[0].mxu0
    %v2031 = vadd.f32 %v1837, %v2030
    %v2032 = vpop.f32.mrb[0].mxu0
    %2033 = vmatprep.mubr.f32.mxu0 0.0
    %2034 = vmatmul.mubr.f32.gmra.mrb[0].mxu0 %v1771
    %v2035 = vpop.f32.mrb[0].mxu0
    %v2036 = vadd.f32 %v1837, %v2035
    %v2037 = vpop.f32.mrb[0].mxu0
    %2038 = vmatprep.mubr.f32.mxu0 0.0
    %2039 = vmatmul.mubr.f32.gmra.mrb[0].mxu0 %v1772
    %v2040 = vpop.f32.mrb[0].mxu0
    %v2041 = vadd.f32 %v1837, %v2040
    %v2042 = vpop.f32.mrb[0].mxu0
    %2043 = vmatprep.mubr.f32.mxu0 0.0
    %2044 = vmatmul.mubr.f32.gmra.mrb[0].mxu0 %v1773
    %v2045 = vpop.f32.mrb[0].mxu0
    %v2046 = vadd.f32 %v1837, %v2045
    %v2047 = vpop.f32.mrb[0].mxu0
    %2048 = vmatprep.mubr.f32.mxu0 0.0
    %2049 = vmatmul.mubr.f32.gmra.mrb[0].mxu0 %v1774
    %v2050 = vpop.f32.mrb[0].mxu0
    %v2051 = vadd.f32 %v1837, %v2050
    %v2052 = vpop.f32.mrb[0].mxu0
    %2053 = vmatprep.mubr.f32.mxu0 0.0
    %2054 = vmatmul.mubr.f32.gmra.mrb[0].mxu0 %v1775
    %v2055 = vpop.f32.mrb[0].mxu0
    %v2056 = vadd.f32 %v1837, %v2055
    %v2057 = vpop.f32.mrb[0].mxu0
    %2058 = vdwg.mxu0
    %2059 = vst [vmem:[#allocation2] sm:$0xff] %v1908
    %2060 = vst [vmem:[#allocation2 + $0x8] sm:$0xff] %v1910
    %2061 = vst [vmem:[#allocation2 + $0x10] sm:$0xff] %v2021
    %2062 = vst [vmem:[#allocation2 + $0x18] sm:$0xff] %v1914
    %2063 = vst [vmem:[#allocation2 + $0x20] sm:$0xff] %v1916
    %2064 = vst [vmem:[#allocation2 + $0x28] sm:$0xff] %v2026
    %2065 = vst [vmem:[#allocation2 + $0x30] sm:$0xff] %v1920
    %2066 = vst [vmem:[#allocation2 + $0x38] sm:$0xff] %v1922
    %2067 = vst [vmem:[#allocation2 + $0x40] sm:$0xff] %v2031
    %2068 = vst [vmem:[#allocation2 + $0x48] sm:$0xff] %v1926
    %2069 = vst [vmem:[#allocation2 + $0x50] sm:$0xff] %v1928
    %2070 = vst [vmem:[#allocation2 + $0x58] sm:$0xff] %v2036
    %2071 = vst [vmem:[#allocation2 + $0x60] sm:$0xff] %v1932
    %2072 = vst [vmem:[#allocation2 + $0x68] sm:$0xff] %v1934
    %2073 = vst [vmem:[#allocation2 + $0x70] sm:$0xff] %v2041
    %2074 = vst [vmem:[#allocation2 + $0x78] sm:$0xff] %v1938
    %2075 = vst [vmem:[#allocation2 + $0x80] sm:$0xff] %v1940
    %2076 = vst [vmem:[#allocation2 + $0x88] sm:$0xff] %v2046
    %2077 = vst [vmem:[#allocation2 + $0x90] sm:$0xff] %v1944
    %2078 = vst [vmem:[#allocation2 + $0x98] sm:$0xff] %v1946
    %2079 = vst [vmem:[#allocation2 + $0xa0] sm:$0xff] %v2051
    %2080 = vst [vmem:[#allocation2 + $0xa8] sm:$0xff] %v1950
    %2081 = vst [vmem:[#allocation2 + $0xb0] sm:$0xff] %v1952
    %2082 = vst [vmem:[#allocation2 + $0xb8] sm:$0xff] %v2056
    %v2083 = vld [vmem:[#allocation8] sm:$0xff]
    %v2084 = vld [vmem:[#allocation8 + $0x8] sm:$0xff]
    %v2085 = vld [vmem:[#allocation8 + $0x10] sm:$0xff]
    %v2086 = vld [vmem:[#allocation8 + $0x18] sm:$0xff]
    %v2087 = vld [vmem:[#allocation8 + $0x20] sm:$0xff]
    %v2088 = vld [vmem:[#allocation8 + $0x28] sm:$0xff]
    %v2089 = vld [vmem:[#allocation8 + $0x30] sm:$0xff]
    %v2090 = vld [vmem:[#allocation8 + $0x38] sm:$0xff]
    %v2091 = vld [vmem:[#allocation8 + $0x40] sm:$0xff]
    %v2092 = vld [vmem:[#allocation8 + $0x48] sm:$0xff]
    %v2093 = vld [vmem:[#allocation8 + $0x50] sm:$0xff]
    %v2094 = vld [vmem:[#allocation8 + $0x58] sm:$0xff]
    %v2095 = vld [vmem:[#allocation8 + $0x60] sm:$0xff]
    %v2096 = vld [vmem:[#allocation8 + $0x68] sm:$0xff]
    %v2097 = vld [vmem:[#allocation8 + $0x70] sm:$0xff]
    %v2098 = vld [vmem:[#allocation8 + $0x78] sm:$0xff]
    %v2099 = vld [vmem:[#allocation8 + $0x80] sm:$0xff]
    %v2100 = vld [vmem:[#allocation8 + $0x88] sm:$0xff]
    %v2101 = vld [vmem:[#allocation8 + $0x90] sm:$0xff]
    %v2102 = vld [vmem:[#allocation8 + $0x98] sm:$0xff]
    %v2103 = vld [vmem:[#allocation8 + $0xa0] sm:$0xff]
    %v2104 = vld [vmem:[#allocation8 + $0xa8] sm:$0xff]
    %v2105 = vld [vmem:[#allocation8 + $0xb0] sm:$0xff]
    %v2106 = vld [vmem:[#allocation8 + $0xb8] sm:$0xff]
    %v2107 = vld [vmem:[#allocation8 + $0xc0] sm:$0xff]
    %v2108 = vld [vmem:[#allocation8 + $0xc8] sm:$0xff]
    %v2109 = vld [vmem:[#allocation8 + $0xd0] sm:$0xff]
    %v2110 = vld [vmem:[#allocation8 + $0xd8] sm:$0xff]
    %v2111 = vld [vmem:[#allocation8 + $0xe0] sm:$0xff]
    %v2112 = vld [vmem:[#allocation8 + $0xe8] sm:$0xff]
    %v2113 = vld [vmem:[#allocation8 + $0xf0] sm:$0xff]
    %v2114 = vld [vmem:[#allocation8 + $0xf8] sm:$0xff]
    %v2115 = vld [vmem:[#allocation8 + $0x100] sm:$0xff]
    %v2116 = vld [vmem:[#allocation8 + $0x108] sm:$0xff]
    %v2117 = vld [vmem:[#allocation8 + $0x110] sm:$0xff]
    %v2118 = vld [vmem:[#allocation8 + $0x118] sm:$0xff]
    %v2119 = vld [vmem:[#allocation8 + $0x120] sm:$0xff]
    %v2120 = vld [vmem:[#allocation8 + $0x128] sm:$0xff]
    %v2121 = vld [vmem:[#allocation8 + $0x130] sm:$0xff]
    %v2122 = vld [vmem:[#allocation8 + $0x138] sm:$0xff]
    %v2123 = vld [vmem:[#allocation8 + $0x140] sm:$0xff]
    %v2124 = vld [vmem:[#allocation8 + $0x148] sm:$0xff]
    %v2125 = vld [vmem:[#allocation8 + $0x150] sm:$0xff]
    %v2126 = vld [vmem:[#allocation8 + $0x158] sm:$0xff]
    %v2127 = vld [vmem:[#allocation8 + $0x160] sm:$0xff]
    %v2128 = vld [vmem:[#allocation8 + $0x168] sm:$0xff]
    %v2129 = vld [vmem:[#allocation8 + $0x170] sm:$0xff]
    %v2130 = vld [vmem:[#allocation8 + $0x178] sm:$0xff]
    %v2131 = vld [vmem:[%s8] sm:$0x1]
    %v2132 = vld [vmem:[#allocation2] sm:$0xff]
    %v2133 = vld [vmem:[#allocation2 + $0x8] sm:$0xff]
    %v2134 = vld [vmem:[#allocation2 + $0x10] sm:$0xff]
    %2135 = vmatprep.subr.mxu0 %v2084
    %2136 = vmatpush1.msra.mxu0 %v2083
    %2137 = vmatprep.subr.mxu0 %v2087
    %2138 = vmatpush1.msra.mxu0 %v2086
    %2139 = vmatprep.subr.mxu0 %v2090
    %2140 = vmatpush1.msra.mxu0 %v2089
    %2141 = vmatprep.subr.mxu0 %v2093
    %2142 = vmatpush1.msra.mxu0 %v2092
    %2143 = vmatprep.subr.mxu0 %v2096
    %2144 = vmatpush1.msra.mxu0 %v2095
    %2145 = vmatprep.subr.mxu0 %v2099
    %2146 = vmatpush1.msra.mxu0 %v2098
    %2147 = vmatprep.subr.mxu0 %v2102
    %2148 = vmatpush1.msra.mxu0 %v2101
    %2149 = vmatprep.subr.mxu0 %v2105
    %2150 = vmatpush1.msra.mxu0 %v2104
    %2151 = vmatprep.subr.mxu0 %v2108
    %2152 = vmatpush1.msra.mxu0 %v2107
    %2153 = vmatprep.subr.mxu0 %v2111
    %2154 = vmatpush1.msra.mxu0 %v2110
    %2155 = vmatprep.subr.mxu0 %v2114
    %2156 = vmatpush1.msra.mxu0 %v2113
    %2157 = vmatprep.subr.mxu0 %v2117
    %2158 = vmatpush1.msra.mxu0 %v2116
    %2159 = vmatprep.subr.mxu0 %v2120
    %2160 = vmatpush1.msra.mxu0 %v2119
    %2161 = vmatprep.subr.mxu0 %v2123
    %2162 = vmatpush1.msra.mxu0 %v2122
    %2163 = vmatprep.subr.mxu0 %v2126
    %2164 = vmatpush1.msra.mxu0 %v2125
    %2165 = vmatprep.subr.mxu0 %v2129
    %2166 = vmatpush1.msra.mxu0 %v2128
    %2167 = vmatprep.subr.mxu0 0.0
    %2168 = vmatpush1.msra.mxu0 0.0
    %2169 = vmatprep.subr.mxu0 0.0
    %2170 = vmatpush1.msra.mxu0 0.0
    %2171 = vmatprep.subr.mxu0 0.0
    %2172 = vmatpush1.msra.mxu0 0.0
    %2173 = vmatprep.subr.mxu0 0.0
    %2174 = vmatpush1.msra.mxu0 0.0
    %2175 = vmatprep.subr.mxu0 0.0
    %2176 = vmatpush1.msra.mxu0 0.0
    %2177 = vmatprep.subr.mxu0 0.0
    %2178 = vmatpush1.msra.mxu0 0.0
    %2179 = vmatprep.subr.mxu0 0.0
    %2180 = vmatpush1.msra.mxu0 0.0
    %2181 = vmatprep.subr.mxu0 0.0
    %2182 = vmatpush1.msra.mxu0 0.0
    %2183 = vmatprep.subr.mxu0 0.0
    %2184 = vmatpush1.msra.mxu0 0.0
    %2185 = vmatprep.subr.mxu0 0.0
    %2186 = vmatpush1.msra.mxu0 0.0
    %2187 = vmatprep.subr.mxu0 0.0
    %2188 = vmatpush1.msra.mxu0 0.0
    %2189 = vmatprep.subr.mxu0 0.0
    %2190 = vmatpush1.msra.mxu0 0.0
    %2191 = vmatprep.subr.mxu0 0.0
    %2192 = vmatpush1.msra.mxu0 0.0
    %2193 = vmatprep.subr.mxu0 0.0
    %2194 = vmatpush1.msra.mxu0 0.0
    %2195 = vmatprep.subr.mxu0 0.0
    %2196 = vmatpush1.msra.mxu0 0.0
    %2197 = vmatprep.subr.mxu0 0.0
    %2198 = vmatpush1.msra.mxu0 0.0
    %2199 = vmatprep.mubr.f32.mxu0 0.0
    %2200 = vmatmul.mubr.f32.gmra.mrb[0].mxu0 0.0
    %v2201 = vpop.f32.mrb[0].mxu0
    %v2202 = vadd.f32 0.0, %v2201
    %v2203 = vpop.f32.mrb[0].mxu0
    %v2204 = vadd.f32 0.0, %v2203
    %2205 = vdwg.mxu0
    %2206 = vmatprep.subr.mxu0 0.0
    %2207 = vmatpush1.msra.mxu0 %v2085
    %2208 = vmatprep.subr.mxu0 0.0
    %2209 = vmatpush1.msra.mxu0 %v2088
    %2210 = vmatprep.subr.mxu0 0.0
    %2211 = vmatpush1.msra.mxu0 %v2091
    %2212 = vmatprep.subr.mxu0 0.0
    %2213 = vmatpush1.msra.mxu0 %v2094
    %2214 = vmatprep.subr.mxu0 0.0
    %2215 = vmatpush1.msra.mxu0 %v2097
    %2216 = vmatprep.subr.mxu0 0.0
    %2217 = vmatpush1.msra.mxu0 %v2100
    %2218 = vmatprep.subr.mxu0 0.0
    %2219 = vmatpush1.msra.mxu0 %v2103
    %2220 = vmatprep.subr.mxu0 0.0
    %2221 = vmatpush1.msra.mxu0 %v2106
    %2222 = vmatprep.subr.mxu0 0.0
    %2223 = vmatpush1.msra.mxu0 %v2109
    %2224 = vmatprep.subr.mxu0 0.0
    %2225 = vmatpush1.msra.mxu0 %v2112
    %2226 = vmatprep.subr.mxu0 0.0
    %2227 = vmatpush1.msra.mxu0 %v2115
    %2228 = vmatprep.subr.mxu0 0.0
    %2229 = vmatpush1.msra.mxu0 %v2118
    %2230 = vmatprep.subr.mxu0 0.0
    %2231 = vmatpush1.msra.mxu0 %v2121
    %2232 = vmatprep.subr.mxu0 0.0
    %2233 = vmatpush1.msra.mxu0 %v2124
    %2234 = vmatprep.subr.mxu0 0.0
    %2235 = vmatpush1.msra.mxu0 %v2127
    %2236 = vmatprep.subr.mxu0 0.0
    %2237 = vmatpush1.msra.mxu0 %v2130
    %2238 = vmatprep.subr.mxu0 0.0
    %2239 = vmatpush1.msra.mxu0 0.0
    %2240 = vmatprep.subr.mxu0 0.0
    %2241 = vmatpush1.msra.mxu0 0.0
    %2242 = vmatprep.subr.mxu0 0.0
    %2243 = vmatpush1.msra.mxu0 0.0
    %2244 = vmatprep.subr.mxu0 0.0
    %2245 = vmatpush1.msra.mxu0 0.0
    %2246 = vmatprep.subr.mxu0 0.0
    %2247 = vmatpush1.msra.mxu0 0.0
    %2248 = vmatprep.subr.mxu0 0.0
    %2249 = vmatpush1.msra.mxu0 0.0
    %2250 = vmatprep.subr.mxu0 0.0
    %2251 = vmatpush1.msra.mxu0 0.0
    %2252 = vmatprep.subr.mxu0 0.0
    %2253 = vmatpush1.msra.mxu0 0.0
    %2254 = vmatprep.subr.mxu0 0.0
    %2255 = vmatpush1.msra.mxu0 0.0
    %2256 = vmatprep.subr.mxu0 0.0
    %2257 = vmatpush1.msra.mxu0 0.0
    %2258 = vmatprep.subr.mxu0 0.0
    %2259 = vmatpush1.msra.mxu0 0.0
    %2260 = vmatprep.subr.mxu0 0.0
    %2261 = vmatpush1.msra.mxu0 0.0
    %2262 = vmatprep.subr.mxu0 0.0
    %2263 = vmatpush1.msra.mxu0 0.0
    %2264 = vmatprep.subr.mxu0 0.0
    %2265 = vmatpush1.msra.mxu0 0.0
    %2266 = vmatprep.subr.mxu0 0.0
    %2267 = vmatpush1.msra.mxu0 0.0
    %2268 = vmatprep.subr.mxu0 0.0
    %2269 = vmatpush1.msra.mxu0 0.0
    %2270 = vmatprep.mubr.f32.mxu0 0.0
    %2271 = vmatmul.mubr.f32.gmra.mrb[0].mxu0 0.0
    %v2272 = vpop.f32.mrb[0].mxu0
    %v2273 = vadd.f32 0.0, %v2272
    %v2274 = vpop.f32.mrb[0].mxu0
    %2275 = vdwg.mxu0
    %v2276 = vadd.f32 %v2132, %v2202
    %v2277 = vxor.u32 %v2276, 2147483648
    %v2278 = vmul.f32 %v2277, 1.442695
    %v2279 = vpow.pop %v2278
    %v2280 = vadd.f32 %v2279, 1.0
    %v2281 = vrcp.pop %v2280
    %v2282 = vmul.f32 1.0, %v2281
    %v2283 = vadd.f32 %v2133, %v2204
    %v2284 = vxor.u32 %v2283, 2147483648
    %v2285 = vmul.f32 %v2284, 1.442695
    %v2286 = vpow.pop %v2285
    %v2287 = vadd.f32 %v2286, 1.0
    %v2288 = vrcp.pop %v2287
    %v2289 = vmul.f32 1.0, %v2288
    %v2291 = vlaneseq
    %v2292 = vshrl.u32 %v2291, 7
    %v2293 = vsub.s32 0, %v2292
    %v2294 = vrot.slane %v2131, %v2293
    %v2296 = vadd.f32 %v2273, %v2294
    %v2297 = vmul.f32 %v2282, %v2296
    %v2298 = vadd.f32 %v2134, %v2297
    %v2299 = vtanh.pop %v2298
    %v2300 = vsub.f32 1.0, %v2289
    %v2301 = vmul.f32 %v2300, %v2299
    %v2302 = vmul.f32 %v2289, 0.0
    %v2303 = vadd.f32 %v2301, %v2302
    %v2304 = vld [vmem:[#allocation2 + $0x18] sm:$0xff]
    %v2305 = vld [vmem:[#allocation2 + $0x20] sm:$0xff]
    %v2306 = vld [vmem:[#allocation2 + $0x28] sm:$0xff]
    %2307 = vmatprep.subr.mxu0 %v2084
    %2308 = vmatpush1.msra.mxu0 %v2083
    %2309 = vmatprep.subr.mxu0 %v2087
    %2310 = vmatpush1.msra.mxu0 %v2086
    %2311 = vmatprep.subr.mxu0 %v2090
    %2312 = vmatpush1.msra.mxu0 %v2089
    %2313 = vmatprep.subr.mxu0 %v2093
    %2314 = vmatpush1.msra.mxu0 %v2092
    %2315 = vmatprep.subr.mxu0 %v2096
    %2316 = vmatpush1.msra.mxu0 %v2095
    %2317 = vmatprep.subr.mxu0 %v2099
    %2318 = vmatpush1.msra.mxu0 %v2098
    %2319 = vmatprep.subr.mxu0 %v2102
    %2320 = vmatpush1.msra.mxu0 %v2101
    %2321 = vmatprep.subr.mxu0 %v2105
    %2322 = vmatpush1.msra.mxu0 %v2104
    %2323 = vmatprep.subr.mxu0 %v2108
    %2324 = vmatpush1.msra.mxu0 %v2107
    %2325 = vmatprep.subr.mxu0 %v2111
    %2326 = vmatpush1.msra.mxu0 %v2110
    %2327 = vmatprep.subr.mxu0 %v2114
    %2328 = vmatpush1.msra.mxu0 %v2113
    %2329 = vmatprep.subr.mxu0 %v2117
    %2330 = vmatpush1.msra.mxu0 %v2116
    %2331 = vmatprep.subr.mxu0 %v2120
    %2332 = vmatpush1.msra.mxu0 %v2119
    %2333 = vmatprep.subr.mxu0 %v2123
    %2334 = vmatpush1.msra.mxu0 %v2122
    %2335 = vmatprep.subr.mxu0 %v2126
    %2336 = vmatpush1.msra.mxu0 %v2125
    %2337 = vmatprep.subr.mxu0 %v2129
    %2338 = vmatpush1.msra.mxu0 %v2128
    %2339 = vmatprep.subr.mxu0 0.0
    %2340 = vmatpush1.msra.mxu0 0.0
    %2341 = vmatprep.subr.mxu0 0.0
    %2342 = vmatpush1.msra.mxu0 0.0
    %2343 = vmatprep.subr.mxu0 0.0
    %2344 = vmatpush1.msra.mxu0 0.0
    %2345 = vmatprep.subr.mxu0 0.0
    %2346 = vmatpush1.msra.mxu0 0.0
    %2347 = vmatprep.subr.mxu0 0.0
    %2348 = vmatpush1.msra.mxu0 0.0
    %2349 = vmatprep.subr.mxu0 0.0
    %2350 = vmatpush1.msra.mxu0 0.0
    %2351 = vmatprep.subr.mxu0 0.0
    %2352 = vmatpush1.msra.mxu0 0.0
    %2353 = vmatprep.subr.mxu0 0.0
    %2354 = vmatpush1.msra.mxu0 0.0
    %2355 = vmatprep.subr.mxu0 0.0
    %2356 = vmatpush1.msra.mxu0 0.0
    %2357 = vmatprep.subr.mxu0 0.0
    %2358 = vmatpush1.msra.mxu0 0.0
    %2359 = vmatprep.subr.mxu0 0.0
    %2360 = vmatpush1.msra.mxu0 0.0
    %2361 = vmatprep.subr.mxu0 0.0
    %2362 = vmatpush1.msra.mxu0 0.0
    %2363 = vmatprep.subr.mxu0 0.0
    %2364 = vmatpush1.msra.mxu0 0.0
    %2365 = vmatprep.subr.mxu0 0.0
    %2366 = vmatpush1.msra.mxu0 0.0
    %2367 = vmatprep.subr.mxu0 0.0
    %2368 = vmatpush1.msra.mxu0 0.0
    %2369 = vmatprep.subr.mxu0 0.0
    %2370 = vmatpush1.msra.mxu0 0.0
    %2371 = vmatprep.mubr.f32.mxu0 0.0
    %2372 = vmatmul.mubr.f32.gmra.mrb[0].mxu0 %v2303
    %v2373 = vpop.f32.mrb[0].mxu0
    %v2374 = vadd.f32 0.0, %v2373
    %v2375 = vpop.f32.mrb[0].mxu0
    %v2376 = vadd.f32 0.0, %v2375
    %2377 = vdwg.mxu0
    %2378 = vmatprep.subr.mxu0 0.0
    %2379 = vmatpush1.msra.mxu0 %v2085
    %2380 = vmatprep.subr.mxu0 0.0
    %2381 = vmatpush1.msra.mxu0 %v2088
    %2382 = vmatprep.subr.mxu0 0.0
    %2383 = vmatpush1.msra.mxu0 %v2091
    %2384 = vmatprep.subr.mxu0 0.0
    %2385 = vmatpush1.msra.mxu0 %v2094
    %2386 = vmatprep.subr.mxu0 0.0
    %2387 = vmatpush1.msra.mxu0 %v2097
    %2388 = vmatprep.subr.mxu0 0.0
    %2389 = vmatpush1.msra.mxu0 %v2100
    %2390 = vmatprep.subr.mxu0 0.0
    %2391 = vmatpush1.msra.mxu0 %v2103
    %2392 = vmatprep.subr.mxu0 0.0
    %2393 = vmatpush1.msra.mxu0 %v2106
    %2394 = vmatprep.subr.mxu0 0.0
    %2395 = vmatpush1.msra.mxu0 %v2109
    %2396 = vmatprep.subr.mxu0 0.0
    %2397 = vmatpush1.msra.mxu0 %v2112
    %2398 = vmatprep.subr.mxu0 0.0
    %2399 = vmatpush1.msra.mxu0 %v2115
    %2400 = vmatprep.subr.mxu0 0.0
    %2401 = vmatpush1.msra.mxu0 %v2118
    %2402 = vmatprep.subr.mxu0 0.0
    %2403 = vmatpush1.msra.mxu0 %v2121
    %2404 = vmatprep.subr.mxu0 0.0
    %2405 = vmatpush1.msra.mxu0 %v2124
    %2406 = vmatprep.subr.mxu0 0.0
    %2407 = vmatpush1.msra.mxu0 %v2127
    %2408 = vmatprep.subr.mxu0 0.0
    %2409 = vmatpush1.msra.mxu0 %v2130
    %2410 = vmatprep.subr.mxu0 0.0
    %2411 = vmatpush1.msra.mxu0 0.0
    %2412 = vmatprep.subr.mxu0 0.0
    %2413 = vmatpush1.msra.mxu0 0.0
    %2414 = vmatprep.subr.mxu0 0.0
    %2415 = vmatpush1.msra.mxu0 0.0
    %2416 = vmatprep.subr.mxu0 0.0
    %2417 = vmatpush1.msra.mxu0 0.0
    %2418 = vmatprep.subr.mxu0 0.0
    %2419 = vmatpush1.msra.mxu0 0.0
    %2420 = vmatprep.subr.mxu0 0.0
    %2421 = vmatpush1.msra.mxu0 0.0
    %2422 = vmatprep.subr.mxu0 0.0
    %2423 = vmatpush1.msra.mxu0 0.0
    %2424 = vmatprep.subr.mxu0 0.0
    %2425 = vmatpush1.msra.mxu0 0.0
    %2426 = vmatprep.subr.mxu0 0.0
    %2427 = vmatpush1.msra.mxu0 0.0
    %2428 = vmatprep.subr.mxu0 0.0
    %2429 = vmatpush1.msra.mxu0 0.0
    %2430 = vmatprep.subr.mxu0 0.0
    %2431 = vmatpush1.msra.mxu0 0.0
    %2432 = vmatprep.subr.mxu0 0.0
    %2433 = vmatpush1.msra.mxu0 0.0
    %2434 = vmatprep.subr.mxu0 0.0
    %2435 = vmatpush1.msra.mxu0 0.0
    %2436 = vmatprep.subr.mxu0 0.0
    %2437 = vmatpush1.msra.mxu0 0.0
    %2438 = vmatprep.subr.mxu0 0.0
    %2439 = vmatpush1.msra.mxu0 0.0
    %2440 = vmatprep.subr.mxu0 0.0
    %2441 = vmatpush1.msra.mxu0 0.0
    %2442 = vmatprep.mubr.f32.mxu0 0.0
    %2443 = vmatmul.mubr.f32.gmra.mrb[0].mxu0 %v2303
    %v2444 = vpop.f32.mrb[0].mxu0
    %v2445 = vadd.f32 0.0, %v2444
    %v2446 = vpop.f32.mrb[0].mxu0
    %2447 = vdwg.mxu0
    %v2448 = vadd.f32 %v2304, %v2374
    %v2449 = vxor.u32 %v2448, 2147483648
    %v2450 = vmul.f32 %v2449, 1.442695
    %v2451 = vpow.pop %v2450
    %v2452 = vadd.f32 %v2451, 1.0
    %v2453 = vrcp.pop %v2452
    %v2454 = vmul.f32 1.0, %v2453
    %v2455 = vadd.f32 %v2305, %v2376
    %v2456 = vxor.u32 %v2455, 2147483648
    %v2457 = vmul.f32 %v2456, 1.442695
    %v2458 = vpow.pop %v2457
    %v2459 = vadd.f32 %v2458, 1.0
    %v2460 = vrcp.pop %v2459
    %v2461 = vmul.f32 1.0, %v2460
    %v2462 = vadd.f32 %v2445, %v2294
    %v2463 = vmul.f32 %v2454, %v2462
    %v2464 = vadd.f32 %v2306, %v2463
    %v2465 = vtanh.pop %v2464
    %v2466 = vsub.f32 1.0, %v2461
    %v2467 = vmul.f32 %v2466, %v2465
    %v2468 = vmul.f32 %v2461, %v2303
    %v2469 = vadd.f32 %v2467, %v2468
    %v2470 = vld [vmem:[#allocation2 + $0x30] sm:$0xff]
    %v2471 = vld [vmem:[#allocation2 + $0x38] sm:$0xff]
    %v2472 = vld [vmem:[#allocation2 + $0x40] sm:$0xff]
    %2473 = vmatprep.subr.mxu0 %v2084
    %2474 = vmatpush1.msra.mxu0 %v2083
    %2475 = vmatprep.subr.mxu0 %v2087
    %2476 = vmatpush1.msra.mxu0 %v2086
    %2477 = vmatprep.subr.mxu0 %v2090
    %2478 = vmatpush1.msra.mxu0 %v2089
    %2479 = vmatprep.subr.mxu0 %v2093
    %2480 = vmatpush1.msra.mxu0 %v2092
    %2481 = vmatprep.subr.mxu0 %v2096
    %2482 = vmatpush1.msra.mxu0 %v2095
    %2483 = vmatprep.subr.mxu0 %v2099
    %2484 = vmatpush1.msra.mxu0 %v2098
    %2485 = vmatprep.subr.mxu0 %v2102
    %2486 = vmatpush1.msra.mxu0 %v2101
    %2487 = vmatprep.subr.mxu0 %v2105
    %2488 = vmatpush1.msra.mxu0 %v2104
    %2489 = vmatprep.subr.mxu0 %v2108
    %2490 = vmatpush1.msra.mxu0 %v2107
    %2491 = vmatprep.subr.mxu0 %v2111
    %2492 = vmatpush1.msra.mxu0 %v2110
    %2493 = vmatprep.subr.mxu0 %v2114
    %2494 = vmatpush1.msra.mxu0 %v2113
    %2495 = vmatprep.subr.mxu0 %v2117
    %2496 = vmatpush1.msra.mxu0 %v2116
    %2497 = vmatprep.subr.mxu0 %v2120
    %2498 = vmatpush1.msra.mxu0 %v2119
    %2499 = vmatprep.subr.mxu0 %v2123
    %2500 = vmatpush1.msra.mxu0 %v2122
    %2501 = vmatprep.subr.mxu0 %v2126
    %2502 = vmatpush1.msra.mxu0 %v2125
    %2503 = vmatprep.subr.mxu0 %v2129
    %2504 = vmatpush1.msra.mxu0 %v2128
    %2505 = vmatprep.subr.mxu0 0.0
    %2506 = vmatpush1.msra.mxu0 0.0
    %2507 = vmatprep.subr.mxu0 0.0
    %2508 = vmatpush1.msra.mxu0 0.0
    %2509 = vmatprep.subr.mxu0 0.0
    %2510 = vmatpush1.msra.mxu0 0.0
    %2511 = vmatprep.subr.mxu0 0.0
    %2512 = vmatpush1.msra.mxu0 0.0
    %2513 = vmatprep.subr.mxu0 0.0
    %2514 = vmatpush1.msra.mxu0 0.0
    %2515 = vmatprep.subr.mxu0 0.0
    %2516 = vmatpush1.msra.mxu0 0.0
    %2517 = vmatprep.subr.mxu0 0.0
    %2518 = vmatpush1.msra.mxu0 0.0
    %2519 = vmatprep.subr.mxu0 0.0
    %2520 = vmatpush1.msra.mxu0 0.0
    %2521 = vmatprep.subr.mxu0 0.0
    %2522 = vmatpush1.msra.mxu0 0.0
    %2523 = vmatprep.subr.mxu0 0.0
    %2524 = vmatpush1.msra.mxu0 0.0
    %2525 = vmatprep.subr.mxu0 0.0
    %2526 = vmatpush1.msra.mxu0 0.0
    %2527 = vmatprep.subr.mxu0 0.0
    %2528 = vmatpush1.msra.mxu0 0.0
    %2529 = vmatprep.subr.mxu0 0.0
    %2530 = vmatpush1.msra.mxu0 0.0
    %2531 = vmatprep.subr.mxu0 0.0
    %2532 = vmatpush1.msra.mxu0 0.0
    %2533 = vmatprep.subr.mxu0 0.0
    %2534 = vmatpush1.msra.mxu0 0.0
    %2535 = vmatprep.subr.mxu0 0.0
    %2536 = vmatpush1.msra.mxu0 0.0
    %2537 = vmatprep.mubr.f32.mxu0 0.0
    %2538 = vmatmul.mubr.f32.gmra.mrb[0].mxu0 %v2469
    %v2539 = vpop.f32.mrb[0].mxu0
    %v2540 = vadd.f32 0.0, %v2539
    %v2541 = vpop.f32.mrb[0].mxu0
    %v2542 = vadd.f32 0.0, %v2541
    %2543 = vdwg.mxu0
    %2544 = vmatprep.subr.mxu0 0.0
    %2545 = vmatpush1.msra.mxu0 %v2085
    %2546 = vmatprep.subr.mxu0 0.0
    %2547 = vmatpush1.msra.mxu0 %v2088
    %2548 = vmatprep.subr.mxu0 0.0
    %2549 = vmatpush1.msra.mxu0 %v2091
    %2550 = vmatprep.subr.mxu0 0.0
    %2551 = vmatpush1.msra.mxu0 %v2094
    %2552 = vmatprep.subr.mxu0 0.0
    %2553 = vmatpush1.msra.mxu0 %v2097
    %2554 = vmatprep.subr.mxu0 0.0
    %2555 = vmatpush1.msra.mxu0 %v2100
    %2556 = vmatprep.subr.mxu0 0.0
    %2557 = vmatpush1.msra.mxu0 %v2103
    %2558 = vmatprep.subr.mxu0 0.0
    %2559 = vmatpush1.msra.mxu0 %v2106
    %2560 = vmatprep.subr.mxu0 0.0
    %2561 = vmatpush1.msra.mxu0 %v2109
    %2562 = vmatprep.subr.mxu0 0.0
    %2563 = vmatpush1.msra.mxu0 %v2112
    %2564 = vmatprep.subr.mxu0 0.0
    %2565 = vmatpush1.msra.mxu0 %v2115
    %2566 = vmatprep.subr.mxu0 0.0
    %2567 = vmatpush1.msra.mxu0 %v2118
    %2568 = vmatprep.subr.mxu0 0.0
    %2569 = vmatpush1.msra.mxu0 %v2121
    %2570 = vmatprep.subr.mxu0 0.0
    %2571 = vmatpush1.msra.mxu0 %v2124
    %2572 = vmatprep.subr.mxu0 0.0
    %2573 = vmatpush1.msra.mxu0 %v2127
    %2574 = vmatprep.subr.mxu0 0.0
    %2575 = vmatpush1.msra.mxu0 %v2130
    %2576 = vmatprep.subr.mxu0 0.0
    %2577 = vmatpush1.msra.mxu0 0.0
    %2578 = vmatprep.subr.mxu0 0.0
    %2579 = vmatpush1.msra.mxu0 0.0
    %2580 = vmatprep.subr.mxu0 0.0
    %2581 = vmatpush1.msra.mxu0 0.0
    %2582 = vmatprep.subr.mxu0 0.0
    %2583 = vmatpush1.msra.mxu0 0.0
    %2584 = vmatprep.subr.mxu0 0.0
    %2585 = vmatpush1.msra.mxu0 0.0
    %2586 = vmatprep.subr.mxu0 0.0
    %2587 = vmatpush1.msra.mxu0 0.0
    %2588 = vmatprep.subr.mxu0 0.0
    %2589 = vmatpush1.msra.mxu0 0.0
    %2590 = vmatprep.subr.mxu0 0.0
    %2591 = vmatpush1.msra.mxu0 0.0
    %2592 = vmatprep.subr.mxu0 0.0
    %2593 = vmatpush1.msra.mxu0 0.0
    %2594 = vmatprep.subr.mxu0 0.0
    %2595 = vmatpush1.msra.mxu0 0.0
    %2596 = vmatprep.subr.mxu0 0.0
    %2597 = vmatpush1.msra.mxu0 0.0
    %2598 = vmatprep.subr.mxu0 0.0
    %2599 = vmatpush1.msra.mxu0 0.0
    %2600 = vmatprep.subr.mxu0 0.0
    %2601 = vmatpush1.msra.mxu0 0.0
    %2602 = vmatprep.subr.mxu0 0.0
    %2603 = vmatpush1.msra.mxu0 0.0
    %2604 = vmatprep.subr.mxu0 0.0
    %2605 = vmatpush1.msra.mxu0 0.0
    %2606 = vmatprep.subr.mxu0 0.0
    %2607 = vmatpush1.msra.mxu0 0.0
    %2608 = vmatprep.mubr.f32.mxu0 0.0
    %2609 = vmatmul.mubr.f32.gmra.mrb[0].mxu0 %v2469
    %v2610 = vpop.f32.mrb[0].mxu0
    %v2611 = vadd.f32 0.0, %v2610
    %v2612 = vpop.f32.mrb[0].mxu0
    %2613 = vdwg.mxu0
    %v2614 = vadd.f32 %v2470, %v2540
    %v2615 = vxor.u32 %v2614, 2147483648
    %v2616 = vmul.f32 %v2615, 1.442695
    %v2617 = vpow.pop %v2616
    %v2618 = vadd.f32 %v2617, 1.0
    %v2619 = vrcp.pop %v2618
    %v2620 = vmul.f32 1.0, %v2619
    %v2621 = vadd.f32 %v2471, %v2542
    %v2622 = vxor.u32 %v2621, 2147483648
    %v2623 = vmul.f32 %v2622, 1.442695
    %v2624 = vpow.pop %v2623
    %v2625 = vadd.f32 %v2624, 1.0
    %v2626 = vrcp.pop %v2625
    %v2627 = vmul.f32 1.0, %v2626
    %v2628 = vadd.f32 %v2611, %v2294
    %v2629 = vmul.f32 %v2620, %v2628
    %v2630 = vadd.f32 %v2472, %v2629
    %v2631 = vtanh.pop %v2630
    %v2632 = vsub.f32 1.0, %v2627
    %v2633 = vmul.f32 %v2632, %v2631
    %v2634 = vmul.f32 %v2627, %v2469
    %v2635 = vadd.f32 %v2633, %v2634
    %v2636 = vld [vmem:[#allocation2 + $0x48] sm:$0xff]
    %v2637 = vld [vmem:[#allocation2 + $0x50] sm:$0xff]
    %v2638 = vld [vmem:[#allocation2 + $0x58] sm:$0xff]
    %2639 = vmatprep.subr.mxu0 %v2084
    %2640 = vmatpush1.msra.mxu0 %v2083
    %2641 = vmatprep.subr.mxu0 %v2087
    %2642 = vmatpush1.msra.mxu0 %v2086
    %2643 = vmatprep.subr.mxu0 %v2090
    %2644 = vmatpush1.msra.mxu0 %v2089
    %2645 = vmatprep.subr.mxu0 %v2093
    %2646 = vmatpush1.msra.mxu0 %v2092
    %2647 = vmatprep.subr.mxu0 %v2096
    %2648 = vmatpush1.msra.mxu0 %v2095
    %2649 = vmatprep.subr.mxu0 %v2099
    %2650 = vmatpush1.msra.mxu0 %v2098
    %2651 = vmatprep.subr.mxu0 %v2102
    %2652 = vmatpush1.msra.mxu0 %v2101
    %2653 = vmatprep.subr.mxu0 %v2105
    %2654 = vmatpush1.msra.mxu0 %v2104
    %2655 = vmatprep.subr.mxu0 %v2108
    %2656 = vmatpush1.msra.mxu0 %v2107
    %2657 = vmatprep.subr.mxu0 %v2111
    %2658 = vmatpush1.msra.mxu0 %v2110
    %2659 = vmatprep.subr.mxu0 %v2114
    %2660 = vmatpush1.msra.mxu0 %v2113
    %2661 = vmatprep.subr.mxu0 %v2117
    %2662 = vmatpush1.msra.mxu0 %v2116
    %2663 = vmatprep.subr.mxu0 %v2120
    %2664 = vmatpush1.msra.mxu0 %v2119
    %2665 = vmatprep.subr.mxu0 %v2123
    %2666 = vmatpush1.msra.mxu0 %v2122
    %2667 = vmatprep.subr.mxu0 %v2126
    %2668 = vmatpush1.msra.mxu0 %v2125
    %2669 = vmatprep.subr.mxu0 %v2129
    %2670 = vmatpush1.msra.mxu0 %v2128
    %2671 = vmatprep.subr.mxu0 0.0
    %2672 = vmatpush1.msra.mxu0 0.0
    %2673 = vmatprep.subr.mxu0 0.0
    %2674 = vmatpush1.msra.mxu0 0.0
    %2675 = vmatprep.subr.mxu0 0.0
    %2676 = vmatpush1.msra.mxu0 0.0
    %2677 = vmatprep.subr.mxu0 0.0
    %2678 = vmatpush1.msra.mxu0 0.0
    %2679 = vmatprep.subr.mxu0 0.0
    %2680 = vmatpush1.msra.mxu0 0.0
    %2681 = vmatprep.subr.mxu0 0.0
    %2682 = vmatpush1.msra.mxu0 0.0
    %2683 = vmatprep.subr.mxu0 0.0
    %2684 = vmatpush1.msra.mxu0 0.0
    %2685 = vmatprep.subr.mxu0 0.0
    %2686 = vmatpush1.msra.mxu0 0.0
    %2687 = vmatprep.subr.mxu0 0.0
    %2688 = vmatpush1.msra.mxu0 0.0
    %2689 = vmatprep.subr.mxu0 0.0
    %2690 = vmatpush1.msra.mxu0 0.0
    %2691 = vmatprep.subr.mxu0 0.0
    %2692 = vmatpush1.msra.mxu0 0.0
    %2693 = vmatprep.subr.mxu0 0.0
    %2694 = vmatpush1.msra.mxu0 0.0
    %2695 = vmatprep.subr.mxu0 0.0
    %2696 = vmatpush1.msra.mxu0 0.0
    %2697 = vmatprep.subr.mxu0 0.0
    %2698 = vmatpush1.msra.mxu0 0.0
    %2699 = vmatprep.subr.mxu0 0.0
    %2700 = vmatpush1.msra.mxu0 0.0
    %2701 = vmatprep.subr.mxu0 0.0
    %2702 = vmatpush1.msra.mxu0 0.0
    %2703 = vmatprep.mubr.f32.mxu0 0.0
    %2704 = vmatmul.mubr.f32.gmra.mrb[0].mxu0 %v2635
    %v2705 = vpop.f32.mrb[0].mxu0
    %v2706 = vadd.f32 0.0, %v2705
    %v2707 = vpop.f32.mrb[0].mxu0
    %v2708 = vadd.f32 0.0, %v2707
    %2709 = vdwg.mxu0
    %2710 = vmatprep.subr.mxu0 0.0
    %2711 = vmatpush1.msra.mxu0 %v2085
    %2712 = vmatprep.subr.mxu0 0.0
    %2713 = vmatpush1.msra.mxu0 %v2088
    %2714 = vmatprep.subr.mxu0 0.0
    %2715 = vmatpush1.msra.mxu0 %v2091
    %2716 = vmatprep.subr.mxu0 0.0
    %2717 = vmatpush1.msra.mxu0 %v2094
    %2718 = vmatprep.subr.mxu0 0.0
    %2719 = vmatpush1.msra.mxu0 %v2097
    %2720 = vmatprep.subr.mxu0 0.0
    %2721 = vmatpush1.msra.mxu0 %v2100
    %2722 = vmatprep.subr.mxu0 0.0
    %2723 = vmatpush1.msra.mxu0 %v2103
    %2724 = vmatprep.subr.mxu0 0.0
    %2725 = vmatpush1.msra.mxu0 %v2106
    %2726 = vmatprep.subr.mxu0 0.0
    %2727 = vmatpush1.msra.mxu0 %v2109
    %2728 = vmatprep.subr.mxu0 0.0
    %2729 = vmatpush1.msra.mxu0 %v2112
    %2730 = vmatprep.subr.mxu0 0.0
    %2731 = vmatpush1.msra.mxu0 %v2115
    %2732 = vmatprep.subr.mxu0 0.0
    %2733 = vmatpush1.msra.mxu0 %v2118
    %2734 = vmatprep.subr.mxu0 0.0
    %2735 = vmatpush1.msra.mxu0 %v2121
    %2736 = vmatprep.subr.mxu0 0.0
    %2737 = vmatpush1.msra.mxu0 %v2124
    %2738 = vmatprep.subr.mxu0 0.0
    %2739 = vmatpush1.msra.mxu0 %v2127
    %2740 = vmatprep.subr.mxu0 0.0
    %2741 = vmatpush1.msra.mxu0 %v2130
    %2742 = vmatprep.subr.mxu0 0.0
    %2743 = vmatpush1.msra.mxu0 0.0
    %2744 = vmatprep.subr.mxu0 0.0
    %2745 = vmatpush1.msra.mxu0 0.0
    %2746 = vmatprep.subr.mxu0 0.0
    %2747 = vmatpush1.msra.mxu0 0.0
    %2748 = vmatprep.subr.mxu0 0.0
    %2749 = vmatpush1.msra.mxu0 0.0
    %2750 = vmatprep.subr.mxu0 0.0
    %2751 = vmatpush1.msra.mxu0 0.0
    %2752 = vmatprep.subr.mxu0 0.0
    %2753 = vmatpush1.msra.mxu0 0.0
    %2754 = vmatprep.subr.mxu0 0.0
    %2755 = vmatpush1.msra.mxu0 0.0
    %2756 = vmatprep.subr.mxu0 0.0
    %2757 = vmatpush1.msra.mxu0 0.0
    %2758 = vmatprep.subr.mxu0 0.0
    %2759 = vmatpush1.msra.mxu0 0.0
    %2760 = vmatprep.subr.mxu0 0.0
    %2761 = vmatpush1.msra.mxu0 0.0
    %2762 = vmatprep.subr.mxu0 0.0
    %2763 = vmatpush1.msra.mxu0 0.0
    %2764 = vmatprep.subr.mxu0 0.0
    %2765 = vmatpush1.msra.mxu0 0.0
    %2766 = vmatprep.subr.mxu0 0.0
    %2767 = vmatpush1.msra.mxu0 0.0
    %2768 = vmatprep.subr.mxu0 0.0
    %2769 = vmatpush1.msra.mxu0 0.0
    %2770 = vmatprep.subr.mxu0 0.0
    %2771 = vmatpush1.msra.mxu0 0.0
    %2772 = vmatprep.subr.mxu0 0.0
    %2773 = vmatpush1.msra.mxu0 0.0
    %2774 = vmatprep.mubr.f32.mxu0 0.0
    %2775 = vmatmul.mubr.f32.gmra.mrb[0].mxu0 %v2635
    %v2776 = vpop.f32.mrb[0].mxu0
    %v2777 = vadd.f32 0.0, %v2776
    %v2778 = vpop.f32.mrb[0].mxu0
    %2779 = vdwg.mxu0
    %v2780 = vadd.f32 %v2636, %v2706
    %v2781 = vxor.u32 %v2780, 2147483648
    %v2782 = vmul.f32 %v2781, 1.442695
    %v2783 = vpow.pop %v2782
    %v2784 = vadd.f32 %v2783, 1.0
    %v2785 = vrcp.pop %v2784
    %v2786 = vmul.f32 1.0, %v2785
    %v2787 = vadd.f32 %v2637, %v2708
    %v2788 = vxor.u32 %v2787, 2147483648
    %v2789 = vmul.f32 %v2788, 1.442695
    %v2790 = vpow.pop %v2789
    %v2791 = vadd.f32 %v2790, 1.0
    %v2792 = vrcp.pop %v2791
    %v2793 = vmul.f32 1.0, %v2792
    %v2794 = vadd.f32 %v2777, %v2294
    %v2795 = vmul.f32 %v2786, %v2794
    %v2796 = vadd.f32 %v2638, %v2795
    %v2797 = vtanh.pop %v2796
    %v2798 = vsub.f32 1.0, %v2793
    %v2799 = vmul.f32 %v2798, %v2797
    %v2800 = vmul.f32 %v2793, %v2635
    %v2801 = vadd.f32 %v2799, %v2800
    %v2802 = vld [vmem:[#allocation2 + $0x60] sm:$0xff]
    %v2803 = vld [vmem:[#allocation2 + $0x68] sm:$0xff]
    %v2804 = vld [vmem:[#allocation2 + $0x70] sm:$0xff]
    %2805 = vmatprep.subr.mxu0 %v2084
    %2806 = vmatpush1.msra.mxu0 %v2083
    %2807 = vmatprep.subr.mxu0 %v2087
    %2808 = vmatpush1.msra.mxu0 %v2086
    %2809 = vmatprep.subr.mxu0 %v2090
    %2810 = vmatpush1.msra.mxu0 %v2089
    %2811 = vmatprep.subr.mxu0 %v2093
    %2812 = vmatpush1.msra.mxu0 %v2092
    %2813 = vmatprep.subr.mxu0 %v2096
    %2814 = vmatpush1.msra.mxu0 %v2095
    %2815 = vmatprep.subr.mxu0 %v2099
    %2816 = vmatpush1.msra.mxu0 %v2098
    %2817 = vmatprep.subr.mxu0 %v2102
    %2818 = vmatpush1.msra.mxu0 %v2101
    %2819 = vmatprep.subr.mxu0 %v2105
    %2820 = vmatpush1.msra.mxu0 %v2104
    %2821 = vmatprep.subr.mxu0 %v2108
    %2822 = vmatpush1.msra.mxu0 %v2107
    %2823 = vmatprep.subr.mxu0 %v2111
    %2824 = vmatpush1.msra.mxu0 %v2110
    %2825 = vmatprep.subr.mxu0 %v2114
    %2826 = vmatpush1.msra.mxu0 %v2113
    %2827 = vmatprep.subr.mxu0 %v2117
    %2828 = vmatpush1.msra.mxu0 %v2116
    %2829 = vmatprep.subr.mxu0 %v2120
    %2830 = vmatpush1.msra.mxu0 %v2119
    %2831 = vmatprep.subr.mxu0 %v2123
    %2832 = vmatpush1.msra.mxu0 %v2122
    %2833 = vmatprep.subr.mxu0 %v2126
    %2834 = vmatpush1.msra.mxu0 %v2125
    %2835 = vmatprep.subr.mxu0 %v2129
    %2836 = vmatpush1.msra.mxu0 %v2128
    %2837 = vmatprep.subr.mxu0 0.0
    %2838 = vmatpush1.msra.mxu0 0.0
    %2839 = vmatprep.subr.mxu0 0.0
    %2840 = vmatpush1.msra.mxu0 0.0
    %2841 = vmatprep.subr.mxu0 0.0
    %2842 = vmatpush1.msra.mxu0 0.0
    %2843 = vmatprep.subr.mxu0 0.0
    %2844 = vmatpush1.msra.mxu0 0.0
    %2845 = vmatprep.subr.mxu0 0.0
    %2846 = vmatpush1.msra.mxu0 0.0
    %2847 = vmatprep.subr.mxu0 0.0
    %2848 = vmatpush1.msra.mxu0 0.0
    %2849 = vmatprep.subr.mxu0 0.0
    %2850 = vmatpush1.msra.mxu0 0.0
    %2851 = vmatprep.subr.mxu0 0.0
    %2852 = vmatpush1.msra.mxu0 0.0
    %2853 = vmatprep.subr.mxu0 0.0
    %2854 = vmatpush1.msra.mxu0 0.0
    %2855 = vmatprep.subr.mxu0 0.0
    %2856 = vmatpush1.msra.mxu0 0.0
    %2857 = vmatprep.subr.mxu0 0.0
    %2858 = vmatpush1.msra.mxu0 0.0
    %2859 = vmatprep.subr.mxu0 0.0
    %2860 = vmatpush1.msra.mxu0 0.0
    %2861 = vmatprep.subr.mxu0 0.0
    %2862 = vmatpush1.msra.mxu0 0.0
    %2863 = vmatprep.subr.mxu0 0.0
    %2864 = vmatpush1.msra.mxu0 0.0
    %2865 = vmatprep.subr.mxu0 0.0
    %2866 = vmatpush1.msra.mxu0 0.0
    %2867 = vmatprep.subr.mxu0 0.0
    %2868 = vmatpush1.msra.mxu0 0.0
    %2869 = vmatprep.mubr.f32.mxu0 0.0
    %2870 = vmatmul.mubr.f32.gmra.mrb[0].mxu0 %v2801
    %v2871 = vpop.f32.mrb[0].mxu0
    %v2872 = vadd.f32 0.0, %v2871
    %v2873 = vpop.f32.mrb[0].mxu0
    %v2874 = vadd.f32 0.0, %v2873
    %2875 = vdwg.mxu0
    %2876 = vmatprep.subr.mxu0 0.0
    %2877 = vmatpush1.msra.mxu0 %v2085
    %2878 = vmatprep.subr.mxu0 0.0
    %2879 = vmatpush1.msra.mxu0 %v2088
    %2880 = vmatprep.subr.mxu0 0.0
    %2881 = vmatpush1.msra.mxu0 %v2091
    %2882 = vmatprep.subr.mxu0 0.0
    %2883 = vmatpush1.msra.mxu0 %v2094
    %2884 = vmatprep.subr.mxu0 0.0
    %2885 = vmatpush1.msra.mxu0 %v2097
    %2886 = vmatprep.subr.mxu0 0.0
    %2887 = vmatpush1.msra.mxu0 %v2100
    %2888 = vmatprep.subr.mxu0 0.0
    %2889 = vmatpush1.msra.mxu0 %v2103
    %2890 = vmatprep.subr.mxu0 0.0
    %2891 = vmatpush1.msra.mxu0 %v2106
    %2892 = vmatprep.subr.mxu0 0.0
    %2893 = vmatpush1.msra.mxu0 %v2109
    %2894 = vmatprep.subr.mxu0 0.0
    %2895 = vmatpush1.msra.mxu0 %v2112
    %2896 = vmatprep.subr.mxu0 0.0
    %2897 = vmatpush1.msra.mxu0 %v2115
    %2898 = vmatprep.subr.mxu0 0.0
    %2899 = vmatpush1.msra.mxu0 %v2118
    %2900 = vmatprep.subr.mxu0 0.0
    %2901 = vmatpush1.msra.mxu0 %v2121
    %2902 = vmatprep.subr.mxu0 0.0
    %2903 = vmatpush1.msra.mxu0 %v2124
    %2904 = vmatprep.subr.mxu0 0.0
    %2905 = vmatpush1.msra.mxu0 %v2127
    %2906 = vmatprep.subr.mxu0 0.0
    %2907 = vmatpush1.msra.mxu0 %v2130
    %2908 = vmatprep.subr.mxu0 0.0
    %2909 = vmatpush1.msra.mxu0 0.0
    %2910 = vmatprep.subr.mxu0 0.0
    %2911 = vmatpush1.msra.mxu0 0.0
    %2912 = vmatprep.subr.mxu0 0.0
    %2913 = vmatpush1.msra.mxu0 0.0
    %2914 = vmatprep.subr.mxu0 0.0
    %2915 = vmatpush1.msra.mxu0 0.0
    %2916 = vmatprep.subr.mxu0 0.0
    %2917 = vmatpush1.msra.mxu0 0.0
    %2918 = vmatprep.subr.mxu0 0.0
    %2919 = vmatpush1.msra.mxu0 0.0
    %2920 = vmatprep.subr.mxu0 0.0
    %2921 = vmatpush1.msra.mxu0 0.0
    %2922 = vmatprep.subr.mxu0 0.0
    %2923 = vmatpush1.msra.mxu0 0.0
    %2924 = vmatprep.subr.mxu0 0.0
    %2925 = vmatpush1.msra.mxu0 0.0
    %2926 = vmatprep.subr.mxu0 0.0
    %2927 = vmatpush1.msra.mxu0 0.0
    %2928 = vmatprep.subr.mxu0 0.0
    %2929 = vmatpush1.msra.mxu0 0.0
    %2930 = vmatprep.subr.mxu0 0.0
    %2931 = vmatpush1.msra.mxu0 0.0
    %2932 = vmatprep.subr.mxu0 0.0
    %2933 = vmatpush1.msra.mxu0 0.0
    %2934 = vmatprep.subr.mxu0 0.0
    %2935 = vmatpush1.msra.mxu0 0.0
    %2936 = vmatprep.subr.mxu0 0.0
    %2937 = vmatpush1.msra.mxu0 0.0
    %2938 = vmatprep.subr.mxu0 0.0
    %2939 = vmatpush1.msra.mxu0 0.0
    %2940 = vmatprep.mubr.f32.mxu0 0.0
    %2941 = vmatmul.mubr.f32.gmra.mrb[0].mxu0 %v2801
    %v2942 = vpop.f32.mrb[0].mxu0
    %v2943 = vadd.f32 0.0, %v2942
    %v2944 = vpop.f32.mrb[0].mxu0
    %2945 = vdwg.mxu0
    %v2946 = vadd.f32 %v2802, %v2872
    %v2947 = vxor.u32 %v2946, 2147483648
    %v2948 = vmul.f32 %v2947, 1.442695
    %v2949 = vpow.pop %v2948
    %v2950 = vadd.f32 %v2949, 1.0
    %v2951 = vrcp.pop %v2950
    %v2952 = vmul.f32 1.0, %v2951
    %v2953 = vadd.f32 %v2803, %v2874
    %v2954 = vxor.u32 %v2953, 2147483648
    %v2955 = vmul.f32 %v2954, 1.442695
    %v2956 = vpow.pop %v2955
    %v2957 = vadd.f32 %v2956, 1.0
    %v2958 = vrcp.pop %v2957
    %v2959 = vmul.f32 1.0, %v2958
    %v2960 = vadd.f32 %v2943, %v2294
    %v2961 = vmul.f32 %v2952, %v2960
    %v2962 = vadd.f32 %v2804, %v2961
    %v2963 = vtanh.pop %v2962
    %v2964 = vsub.f32 1.0, %v2959
    %v2965 = vmul.f32 %v2964, %v2963
    %v2966 = vmul.f32 %v2959, %v2801
    %v2967 = vadd.f32 %v2965, %v2966
    %v2968 = vld [vmem:[#allocation2 + $0x78] sm:$0xff]
    %v2969 = vld [vmem:[#allocation2 + $0x80] sm:$0xff]
    %v2970 = vld [vmem:[#allocation2 + $0x88] sm:$0xff]
    %2971 = vmatprep.subr.mxu0 %v2084
    %2972 = vmatpush1.msra.mxu0 %v2083
    %2973 = vmatprep.subr.mxu0 %v2087
    %2974 = vmatpush1.msra.mxu0 %v2086
    %2975 = vmatprep.subr.mxu0 %v2090
    %2976 = vmatpush1.msra.mxu0 %v2089
    %2977 = vmatprep.subr.mxu0 %v2093
    %2978 = vmatpush1.msra.mxu0 %v2092
    %2979 = vmatprep.subr.mxu0 %v2096
    %2980 = vmatpush1.msra.mxu0 %v2095
    %2981 = vmatprep.subr.mxu0 %v2099
    %2982 = vmatpush1.msra.mxu0 %v2098
    %2983 = vmatprep.subr.mxu0 %v2102
    %2984 = vmatpush1.msra.mxu0 %v2101
    %2985 = vmatprep.subr.mxu0 %v2105
    %2986 = vmatpush1.msra.mxu0 %v2104
    %2987 = vmatprep.subr.mxu0 %v2108
    %2988 = vmatpush1.msra.mxu0 %v2107
    %2989 = vmatprep.subr.mxu0 %v2111
    %2990 = vmatpush1.msra.mxu0 %v2110
    %2991 = vmatprep.subr.mxu0 %v2114
    %2992 = vmatpush1.msra.mxu0 %v2113
    %2993 = vmatprep.subr.mxu0 %v2117
    %2994 = vmatpush1.msra.mxu0 %v2116
    %2995 = vmatprep.subr.mxu0 %v2120
    %2996 = vmatpush1.msra.mxu0 %v2119
    %2997 = vmatprep.subr.mxu0 %v2123
    %2998 = vmatpush1.msra.mxu0 %v2122
    %2999 = vmatprep.subr.mxu0 %v2126
    %3000 = vmatpush1.msra.mxu0 %v2125
    %3001 = vmatprep.subr.mxu0 %v2129
    %3002 = vmatpush1.msra.mxu0 %v2128
    %3003 = vmatprep.subr.mxu0 0.0
    %3004 = vmatpush1.msra.mxu0 0.0
    %3005 = vmatprep.subr.mxu0 0.0
    %3006 = vmatpush1.msra.mxu0 0.0
    %3007 = vmatprep.subr.mxu0 0.0
    %3008 = vmatpush1.msra.mxu0 0.0
    %3009 = vmatprep.subr.mxu0 0.0
    %3010 = vmatpush1.msra.mxu0 0.0
    %3011 = vmatprep.subr.mxu0 0.0
    %3012 = vmatpush1.msra.mxu0 0.0
    %3013 = vmatprep.subr.mxu0 0.0
    %3014 = vmatpush1.msra.mxu0 0.0
    %3015 = vmatprep.subr.mxu0 0.0
    %3016 = vmatpush1.msra.mxu0 0.0
    %3017 = vmatprep.subr.mxu0 0.0
    %3018 = vmatpush1.msra.mxu0 0.0
    %3019 = vmatprep.subr.mxu0 0.0
    %3020 = vmatpush1.msra.mxu0 0.0
    %3021 = vmatprep.subr.mxu0 0.0
    %3022 = vmatpush1.msra.mxu0 0.0
    %3023 = vmatprep.subr.mxu0 0.0
    %3024 = vmatpush1.msra.mxu0 0.0
    %3025 = vmatprep.subr.mxu0 0.0
    %3026 = vmatpush1.msra.mxu0 0.0
    %3027 = vmatprep.subr.mxu0 0.0
    %3028 = vmatpush1.msra.mxu0 0.0
    %3029 = vmatprep.subr.mxu0 0.0
    %3030 = vmatpush1.msra.mxu0 0.0
    %3031 = vmatprep.subr.mxu0 0.0
    %3032 = vmatpush1.msra.mxu0 0.0
    %3033 = vmatprep.subr.mxu0 0.0
    %3034 = vmatpush1.msra.mxu0 0.0
    %3035 = vmatprep.mubr.f32.mxu0 0.0
    %3036 = vmatmul.mubr.f32.gmra.mrb[0].mxu0 %v2967
    %v3037 = vpop.f32.mrb[0].mxu0
    %v3038 = vadd.f32 0.0, %v3037
    %v3039 = vpop.f32.mrb[0].mxu0
    %v3040 = vadd.f32 0.0, %v3039
    %3041 = vdwg.mxu0
    %3042 = vmatprep.subr.mxu0 0.0
    %3043 = vmatpush1.msra.mxu0 %v2085
    %3044 = vmatprep.subr.mxu0 0.0
    %3045 = vmatpush1.msra.mxu0 %v2088
    %3046 = vmatprep.subr.mxu0 0.0
    %3047 = vmatpush1.msra.mxu0 %v2091
    %3048 = vmatprep.subr.mxu0 0.0
    %3049 = vmatpush1.msra.mxu0 %v2094
    %3050 = vmatprep.subr.mxu0 0.0
    %3051 = vmatpush1.msra.mxu0 %v2097
    %3052 = vmatprep.subr.mxu0 0.0
    %3053 = vmatpush1.msra.mxu0 %v2100
    %3054 = vmatprep.subr.mxu0 0.0
    %3055 = vmatpush1.msra.mxu0 %v2103
    %3056 = vmatprep.subr.mxu0 0.0
    %3057 = vmatpush1.msra.mxu0 %v2106
    %3058 = vmatprep.subr.mxu0 0.0
    %3059 = vmatpush1.msra.mxu0 %v2109
    %3060 = vmatprep.subr.mxu0 0.0
    %3061 = vmatpush1.msra.mxu0 %v2112
    %3062 = vmatprep.subr.mxu0 0.0
    %3063 = vmatpush1.msra.mxu0 %v2115
    %3064 = vmatprep.subr.mxu0 0.0
    %3065 = vmatpush1.msra.mxu0 %v2118
    %3066 = vmatprep.subr.mxu0 0.0
    %3067 = vmatpush1.msra.mxu0 %v2121
    %3068 = vmatprep.subr.mxu0 0.0
    %3069 = vmatpush1.msra.mxu0 %v2124
    %3070 = vmatprep.subr.mxu0 0.0
    %3071 = vmatpush1.msra.mxu0 %v2127
    %3072 = vmatprep.subr.mxu0 0.0
    %3073 = vmatpush1.msra.mxu0 %v2130
    %3074 = vmatprep.subr.mxu0 0.0
    %3075 = vmatpush1.msra.mxu0 0.0
    %3076 = vmatprep.subr.mxu0 0.0
    %3077 = vmatpush1.msra.mxu0 0.0
    %3078 = vmatprep.subr.mxu0 0.0
    %3079 = vmatpush1.msra.mxu0 0.0
    %3080 = vmatprep.subr.mxu0 0.0
    %3081 = vmatpush1.msra.mxu0 0.0
    %3082 = vmatprep.subr.mxu0 0.0
    %3083 = vmatpush1.msra.mxu0 0.0
    %3084 = vmatprep.subr.mxu0 0.0
    %3085 = vmatpush1.msra.mxu0 0.0
    %3086 = vmatprep.subr.mxu0 0.0
    %3087 = vmatpush1.msra.mxu0 0.0
    %3088 = vmatprep.subr.mxu0 0.0
    %3089 = vmatpush1.msra.mxu0 0.0
    %3090 = vmatprep.subr.mxu0 0.0
    %3091 = vmatpush1.msra.mxu0 0.0
    %3092 = vmatprep.subr.mxu0 0.0
    %3093 = vmatpush1.msra.mxu0 0.0
    %3094 = vmatprep.subr.mxu0 0.0
    %3095 = vmatpush1.msra.mxu0 0.0
    %3096 = vmatprep.subr.mxu0 0.0
    %3097 = vmatpush1.msra.mxu0 0.0
    %3098 = vmatprep.subr.mxu0 0.0
    %3099 = vmatpush1.msra.mxu0 0.0
    %3100 = vmatprep.subr.mxu0 0.0
    %3101 = vmatpush1.msra.mxu0 0.0
    %3102 = vmatprep.subr.mxu0 0.0
    %3103 = vmatpush1.msra.mxu0 0.0
    %3104 = vmatprep.subr.mxu0 0.0
    %3105 = vmatpush1.msra.mxu0 0.0
    %3106 = vmatprep.mubr.f32.mxu0 0.0
    %3107 = vmatmul.mubr.f32.gmra.mrb[0].mxu0 %v2967
    %v3108 = vpop.f32.mrb[0].mxu0
    %v3109 = vadd.f32 0.0, %v3108
    %v3110 = vpop.f32.mrb[0].mxu0
    %3111 = vdwg.mxu0
    %v3112 = vadd.f32 %v2968, %v3038
    %v3113 = vxor.u32 %v3112, 2147483648
    %v3114 = vmul.f32 %v3113, 1.442695
    %v3115 = vpow.pop %v3114
    %v3116 = vadd.f32 %v3115, 1.0
    %v3117 = vrcp.pop %v3116
    %v3118 = vmul.f32 1.0, %v3117
    %v3119 = vadd.f32 %v2969, %v3040
    %v3120 = vxor.u32 %v3119, 2147483648
    %v3121 = vmul.f32 %v3120, 1.442695
    %v3122 = vpow.pop %v3121
    %v3123 = vadd.f32 %v3122, 1.0
    %v3124 = vrcp.pop %v3123
    %v3125 = vmul.f32 1.0, %v3124
    %v3126 = vadd.f32 %v3109, %v2294
    %v3127 = vmul.f32 %v3118, %v3126
    %v3128 = vadd.f32 %v2970, %v3127
    %v3129 = vtanh.pop %v3128
    %v3130 = vsub.f32 1.0, %v3125
    %v3131 = vmul.f32 %v3130, %v3129
    %v3132 = vmul.f32 %v3125, %v2967
    %v3133 = vadd.f32 %v3131, %v3132
    %v3134 = vld [vmem:[#allocation2 + $0x90] sm:$0xff]
    %v3135 = vld [vmem:[#allocation2 + $0x98] sm:$0xff]
    %v3136 = vld [vmem:[#allocation2 + $0xa0] sm:$0xff]
    %3137 = vmatprep.subr.mxu0 %v2084
    %3138 = vmatpush1.msra.mxu0 %v2083
    %3139 = vmatprep.subr.mxu0 %v2087
    %3140 = vmatpush1.msra.mxu0 %v2086
    %3141 = vmatprep.subr.mxu0 %v2090
    %3142 = vmatpush1.msra.mxu0 %v2089
    %3143 = vmatprep.subr.mxu0 %v2093
    %3144 = vmatpush1.msra.mxu0 %v2092
    %3145 = vmatprep.subr.mxu0 %v2096
    %3146 = vmatpush1.msra.mxu0 %v2095
    %3147 = vmatprep.subr.mxu0 %v2099
    %3148 = vmatpush1.msra.mxu0 %v2098
    %3149 = vmatprep.subr.mxu0 %v2102
    %3150 = vmatpush1.msra.mxu0 %v2101
    %3151 = vmatprep.subr.mxu0 %v2105
    %3152 = vmatpush1.msra.mxu0 %v2104
    %3153 = vmatprep.subr.mxu0 %v2108
    %3154 = vmatpush1.msra.mxu0 %v2107
    %3155 = vmatprep.subr.mxu0 %v2111
    %3156 = vmatpush1.msra.mxu0 %v2110
    %3157 = vmatprep.subr.mxu0 %v2114
    %3158 = vmatpush1.msra.mxu0 %v2113
    %3159 = vmatprep.subr.mxu0 %v2117
    %3160 = vmatpush1.msra.mxu0 %v2116
    %3161 = vmatprep.subr.mxu0 %v2120
    %3162 = vmatpush1.msra.mxu0 %v2119
    %3163 = vmatprep.subr.mxu0 %v2123
    %3164 = vmatpush1.msra.mxu0 %v2122
    %3165 = vmatprep.subr.mxu0 %v2126
    %3166 = vmatpush1.msra.mxu0 %v2125
    %3167 = vmatprep.subr.mxu0 %v2129
    %3168 = vmatpush1.msra.mxu0 %v2128
    %3169 = vmatprep.subr.mxu0 0.0
    %3170 = vmatpush1.msra.mxu0 0.0
    %3171 = vmatprep.subr.mxu0 0.0
    %3172 = vmatpush1.msra.mxu0 0.0
    %3173 = vmatprep.subr.mxu0 0.0
    %3174 = vmatpush1.msra.mxu0 0.0
    %3175 = vmatprep.subr.mxu0 0.0
    %3176 = vmatpush1.msra.mxu0 0.0
    %3177 = vmatprep.subr.mxu0 0.0
    %3178 = vmatpush1.msra.mxu0 0.0
    %3179 = vmatprep.subr.mxu0 0.0
    %3180 = vmatpush1.msra.mxu0 0.0
    %3181 = vmatprep.subr.mxu0 0.0
    %3182 = vmatpush1.msra.mxu0 0.0
    %3183 = vmatprep.subr.mxu0 0.0
    %3184 = vmatpush1.msra.mxu0 0.0
    %3185 = vmatprep.subr.mxu0 0.0
    %3186 = vmatpush1.msra.mxu0 0.0
    %3187 = vmatprep.subr.mxu0 0.0
    %3188 = vmatpush1.msra.mxu0 0.0
    %3189 = vmatprep.subr.mxu0 0.0
    %3190 = vmatpush1.msra.mxu0 0.0
    %3191 = vmatprep.subr.mxu0 0.0
    %3192 = vmatpush1.msra.mxu0 0.0
    %3193 = vmatprep.subr.mxu0 0.0
    %3194 = vmatpush1.msra.mxu0 0.0
    %3195 = vmatprep.subr.mxu0 0.0
    %3196 = vmatpush1.msra.mxu0 0.0
    %3197 = vmatprep.subr.mxu0 0.0
    %3198 = vmatpush1.msra.mxu0 0.0
    %3199 = vmatprep.subr.mxu0 0.0
    %3200 = vmatpush1.msra.mxu0 0.0
    %3201 = vmatprep.mubr.f32.mxu0 0.0
    %3202 = vmatmul.mubr.f32.gmra.mrb[0].mxu0 %v3133
    %v3203 = vpop.f32.mrb[0].mxu0
    %v3204 = vadd.f32 0.0, %v3203
    %v3205 = vpop.f32.mrb[0].mxu0
    %v3206 = vadd.f32 0.0, %v3205
    %3207 = vdwg.mxu0
    %3208 = vmatprep.subr.mxu0 0.0
    %3209 = vmatpush1.msra.mxu0 %v2085
    %3210 = vmatprep.subr.mxu0 0.0
    %3211 = vmatpush1.msra.mxu0 %v2088
    %3212 = vmatprep.subr.mxu0 0.0
    %3213 = vmatpush1.msra.mxu0 %v2091
    %3214 = vmatprep.subr.mxu0 0.0
    %3215 = vmatpush1.msra.mxu0 %v2094
    %3216 = vmatprep.subr.mxu0 0.0
    %3217 = vmatpush1.msra.mxu0 %v2097
    %3218 = vmatprep.subr.mxu0 0.0
    %3219 = vmatpush1.msra.mxu0 %v2100
    %3220 = vmatprep.subr.mxu0 0.0
    %3221 = vmatpush1.msra.mxu0 %v2103
    %3222 = vmatprep.subr.mxu0 0.0
    %3223 = vmatpush1.msra.mxu0 %v2106
    %3224 = vmatprep.subr.mxu0 0.0
    %3225 = vmatpush1.msra.mxu0 %v2109
    %3226 = vmatprep.subr.mxu0 0.0
    %3227 = vmatpush1.msra.mxu0 %v2112
    %3228 = vmatprep.subr.mxu0 0.0
    %3229 = vmatpush1.msra.mxu0 %v2115
    %3230 = vmatprep.subr.mxu0 0.0
    %3231 = vmatpush1.msra.mxu0 %v2118
    %3232 = vmatprep.subr.mxu0 0.0
    %3233 = vmatpush1.msra.mxu0 %v2121
    %3234 = vmatprep.subr.mxu0 0.0
    %3235 = vmatpush1.msra.mxu0 %v2124
    %3236 = vmatprep.subr.mxu0 0.0
    %3237 = vmatpush1.msra.mxu0 %v2127
    %3238 = vmatprep.subr.mxu0 0.0
    %3239 = vmatpush1.msra.mxu0 %v2130
    %3240 = vmatprep.subr.mxu0 0.0
    %3241 = vmatpush1.msra.mxu0 0.0
    %3242 = vmatprep.subr.mxu0 0.0
    %3243 = vmatpush1.msra.mxu0 0.0
    %3244 = vmatprep.subr.mxu0 0.0
    %3245 = vmatpush1.msra.mxu0 0.0
    %3246 = vmatprep.subr.mxu0 0.0
    %3247 = vmatpush1.msra.mxu0 0.0
    %3248 = vmatprep.subr.mxu0 0.0
    %3249 = vmatpush1.msra.mxu0 0.0
    %3250 = vmatprep.subr.mxu0 0.0
    %3251 = vmatpush1.msra.mxu0 0.0
    %3252 = vmatprep.subr.mxu0 0.0
    %3253 = vmatpush1.msra.mxu0 0.0
    %3254 = vmatprep.subr.mxu0 0.0
    %3255 = vmatpush1.msra.mxu0 0.0
    %3256 = vmatprep.subr.mxu0 0.0
    %3257 = vmatpush1.msra.mxu0 0.0
    %3258 = vmatprep.subr.mxu0 0.0
    %3259 = vmatpush1.msra.mxu0 0.0
    %3260 = vmatprep.subr.mxu0 0.0
    %3261 = vmatpush1.msra.mxu0 0.0
    %3262 = vmatprep.subr.mxu0 0.0
    %3263 = vmatpush1.msra.mxu0 0.0
    %3264 = vmatprep.subr.mxu0 0.0
    %3265 = vmatpush1.msra.mxu0 0.0
    %3266 = vmatprep.subr.mxu0 0.0
    %3267 = vmatpush1.msra.mxu0 0.0
    %3268 = vmatprep.subr.mxu0 0.0
    %3269 = vmatpush1.msra.mxu0 0.0
    %3270 = vmatprep.subr.mxu0 0.0
    %3271 = vmatpush1.msra.mxu0 0.0
    %3272 = vmatprep.mubr.f32.mxu0 0.0
    %3273 = vmatmul.mubr.f32.gmra.mrb[0].mxu0 %v3133
    %v3274 = vpop.f32.mrb[0].mxu0
    %v3275 = vadd.f32 0.0, %v3274
    %v3276 = vpop.f32.mrb[0].mxu0
    %3277 = vdwg.mxu0
    %v3278 = vadd.f32 %v3134, %v3204
    %v3279 = vxor.u32 %v3278, 2147483648
    %v3280 = vmul.f32 %v3279, 1.442695
    %v3281 = vpow.pop %v3280
    %v3282 = vadd.f32 %v3281, 1.0
    %v3283 = vrcp.pop %v3282
    %v3284 = vmul.f32 1.0, %v3283
    %v3285 = vadd.f32 %v3135, %v3206
    %v3286 = vxor.u32 %v3285, 2147483648
    %v3287 = vmul.f32 %v3286, 1.442695
    %v3288 = vpow.pop %v3287
    %v3289 = vadd.f32 %v3288, 1.0
    %v3290 = vrcp.pop %v3289
    %v3291 = vmul.f32 1.0, %v3290
    %v3292 = vadd.f32 %v3275, %v2294
    %v3293 = vmul.f32 %v3284, %v3292
    %v3294 = vadd.f32 %v3136, %v3293
    %v3295 = vtanh.pop %v3294
    %v3296 = vsub.f32 1.0, %v3291
    %v3297 = vmul.f32 %v3296, %v3295
    %v3298 = vmul.f32 %v3291, %v3133
    %v3299 = vadd.f32 %v3297, %v3298
    %v3300 = vld [vmem:[#allocation2 + $0xa8] sm:$0xff]
    %v3301 = vld [vmem:[#allocation2 + $0xb0] sm:$0xff]
    %v3302 = vld [vmem:[#allocation2 + $0xb8] sm:$0xff]
    %3303 = vmatprep.subr.mxu0 %v2084
    %3304 = vmatpush1.msra.mxu0 %v2083
    %3305 = vmatprep.subr.mxu0 %v2087
    %3306 = vmatpush1.msra.mxu0 %v2086
    %3307 = vmatprep.subr.mxu0 %v2090
    %3308 = vmatpush1.msra.mxu0 %v2089
    %3309 = vmatprep.subr.mxu0 %v2093
    %3310 = vmatpush1.msra.mxu0 %v2092
    %3311 = vmatprep.subr.mxu0 %v2096
    %3312 = vmatpush1.msra.mxu0 %v2095
    %3313 = vmatprep.subr.mxu0 %v2099
    %3314 = vmatpush1.msra.mxu0 %v2098
    %3315 = vmatprep.subr.mxu0 %v2102
    %3316 = vmatpush1.msra.mxu0 %v2101
    %3317 = vmatprep.subr.mxu0 %v2105
    %3318 = vmatpush1.msra.mxu0 %v2104
    %3319 = vmatprep.subr.mxu0 %v2108
    %3320 = vmatpush1.msra.mxu0 %v2107
    %3321 = vmatprep.subr.mxu0 %v2111
    %3322 = vmatpush1.msra.mxu0 %v2110
    %3323 = vmatprep.subr.mxu0 %v2114
    %3324 = vmatpush1.msra.mxu0 %v2113
    %3325 = vmatprep.subr.mxu0 %v2117
    %3326 = vmatpush1.msra.mxu0 %v2116
    %3327 = vmatprep.subr.mxu0 %v2120
    %3328 = vmatpush1.msra.mxu0 %v2119
    %3329 = vmatprep.subr.mxu0 %v2123
    %3330 = vmatpush1.msra.mxu0 %v2122
    %3331 = vmatprep.subr.mxu0 %v2126
    %3332 = vmatpush1.msra.mxu0 %v2125
    %3333 = vmatprep.subr.mxu0 %v2129
    %3334 = vmatpush1.msra.mxu0 %v2128
    %3335 = vmatprep.subr.mxu0 0.0
    %3336 = vmatpush1.msra.mxu0 0.0
    %3337 = vmatprep.subr.mxu0 0.0
    %3338 = vmatpush1.msra.mxu0 0.0
    %3339 = vmatprep.subr.mxu0 0.0
    %3340 = vmatpush1.msra.mxu0 0.0
    %3341 = vmatprep.subr.mxu0 0.0
    %3342 = vmatpush1.msra.mxu0 0.0
    %3343 = vmatprep.subr.mxu0 0.0
    %3344 = vmatpush1.msra.mxu0 0.0
    %3345 = vmatprep.subr.mxu0 0.0
    %3346 = vmatpush1.msra.mxu0 0.0
    %3347 = vmatprep.subr.mxu0 0.0
    %3348 = vmatpush1.msra.mxu0 0.0
    %3349 = vmatprep.subr.mxu0 0.0
    %3350 = vmatpush1.msra.mxu0 0.0
    %3351 = vmatprep.subr.mxu0 0.0
    %3352 = vmatpush1.msra.mxu0 0.0
    %3353 = vmatprep.subr.mxu0 0.0
    %3354 = vmatpush1.msra.mxu0 0.0
    %3355 = vmatprep.subr.mxu0 0.0
    %3356 = vmatpush1.msra.mxu0 0.0
    %3357 = vmatprep.subr.mxu0 0.0
    %3358 = vmatpush1.msra.mxu0 0.0
    %3359 = vmatprep.subr.mxu0 0.0
    %3360 = vmatpush1.msra.mxu0 0.0
    %3361 = vmatprep.subr.mxu0 0.0
    %3362 = vmatpush1.msra.mxu0 0.0
    %3363 = vmatprep.subr.mxu0 0.0
    %3364 = vmatpush1.msra.mxu0 0.0
    %3365 = vmatprep.subr.mxu0 0.0
    %3366 = vmatpush1.msra.mxu0 0.0
    %3367 = vmatprep.mubr.f32.mxu0 0.0
    %3368 = vmatmul.mubr.f32.gmra.mrb[0].mxu0 %v3299
    %v3369 = vpop.f32.mrb[0].mxu0
    %v3370 = vadd.f32 0.0, %v3369
    %v3371 = vpop.f32.mrb[0].mxu0
    %v3372 = vadd.f32 0.0, %v3371
    %3373 = vdwg.mxu0
    %3374 = vmatprep.subr.mxu0 0.0
    %3375 = vmatpush1.msra.mxu0 %v2085
    %3376 = vmatprep.subr.mxu0 0.0
    %3377 = vmatpush1.msra.mxu0 %v2088
    %3378 = vmatprep.subr.mxu0 0.0
    %3379 = vmatpush1.msra.mxu0 %v2091
    %3380 = vmatprep.subr.mxu0 0.0
    %3381 = vmatpush1.msra.mxu0 %v2094
    %3382 = vmatprep.subr.mxu0 0.0
    %3383 = vmatpush1.msra.mxu0 %v2097
    %3384 = vmatprep.subr.mxu0 0.0
    %3385 = vmatpush1.msra.mxu0 %v2100
    %3386 = vmatprep.subr.mxu0 0.0
    %3387 = vmatpush1.msra.mxu0 %v2103
    %3388 = vmatprep.subr.mxu0 0.0
    %3389 = vmatpush1.msra.mxu0 %v2106
    %3390 = vmatprep.subr.mxu0 0.0
    %3391 = vmatpush1.msra.mxu0 %v2109
    %3392 = vmatprep.subr.mxu0 0.0
    %3393 = vmatpush1.msra.mxu0 %v2112
    %3394 = vmatprep.subr.mxu0 0.0
    %3395 = vmatpush1.msra.mxu0 %v2115
    %3396 = vmatprep.subr.mxu0 0.0
    %3397 = vmatpush1.msra.mxu0 %v2118
    %3398 = vmatprep.subr.mxu0 0.0
    %3399 = vmatpush1.msra.mxu0 %v2121
    %3400 = vmatprep.subr.mxu0 0.0
    %3401 = vmatpush1.msra.mxu0 %v2124
    %3402 = vmatprep.subr.mxu0 0.0
    %3403 = vmatpush1.msra.mxu0 %v2127
    %3404 = vmatprep.subr.mxu0 0.0
    %3405 = vmatpush1.msra.mxu0 %v2130
    %3406 = vmatprep.subr.mxu0 0.0
    %3407 = vmatpush1.msra.mxu0 0.0
    %3408 = vmatprep.subr.mxu0 0.0
    %3409 = vmatpush1.msra.mxu0 0.0
    %3410 = vmatprep.subr.mxu0 0.0
    %3411 = vmatpush1.msra.mxu0 0.0
    %3412 = vmatprep.subr.mxu0 0.0
    %3413 = vmatpush1.msra.mxu0 0.0
    %3414 = vmatprep.subr.mxu0 0.0
    %3415 = vmatpush1.msra.mxu0 0.0
    %3416 = vmatprep.subr.mxu0 0.0
    %3417 = vmatpush1.msra.mxu0 0.0
    %3418 = vmatprep.subr.mxu0 0.0
    %3419 = vmatpush1.msra.mxu0 0.0
    %3420 = vmatprep.subr.mxu0 0.0
    %3421 = vmatpush1.msra.mxu0 0.0
    %3422 = vmatprep.subr.mxu0 0.0
    %3423 = vmatpush1.msra.mxu0 0.0
    %3424 = vmatprep.subr.mxu0 0.0
    %3425 = vmatpush1.msra.mxu0 0.0
    %3426 = vmatprep.subr.mxu0 0.0
    %3427 = vmatpush1.msra.mxu0 0.0
    %3428 = vmatprep.subr.mxu0 0.0
    %3429 = vmatpush1.msra.mxu0 0.0
    %3430 = vmatprep.subr.mxu0 0.0
    %3431 = vmatpush1.msra.mxu0 0.0
    %3432 = vmatprep.subr.mxu0 0.0
    %3433 = vmatpush1.msra.mxu0 0.0
    %3434 = vmatprep.subr.mxu0 0.0
    %3435 = vmatpush1.msra.mxu0 0.0
    %3436 = vmatprep.subr.mxu0 0.0
    %3437 = vmatpush1.msra.mxu0 0.0
    %3438 = vmatprep.mubr.f32.mxu0 0.0
    %3439 = vmatmul.mubr.f32.gmra.mrb[0].mxu0 %v3299
    %v3440 = vpop.f32.mrb[0].mxu0
    %v3441 = vadd.f32 0.0, %v3440
    %v3442 = vpop.f32.mrb[0].mxu0
    %3443 = vdwg.mxu0
    %v3444 = vadd.f32 %v3300, %v3370
    %v3445 = vxor.u32 %v3444, 2147483648
    %v3446 = vmul.f32 %v3445, 1.442695
    %v3447 = vpow.pop %v3446
    %v3448 = vadd.f32 %v3447, 1.0
    %v3449 = vrcp.pop %v3448
    %v3450 = vmul.f32 1.0, %v3449
    %v3451 = vadd.f32 %v3301, %v3372
    %v3452 = vxor.u32 %v3451, 2147483648
    %v3453 = vmul.f32 %v3452, 1.442695
    %v3454 = vpow.pop %v3453
    %v3455 = vadd.f32 %v3454, 1.0
    %v3456 = vrcp.pop %v3455
    %v3457 = vmul.f32 1.0, %v3456
    %v3458 = vadd.f32 %v3441, %v2294
    %v3459 = vmul.f32 %v3450, %v3458
    %v3460 = vadd.f32 %v3302, %v3459
    %v3461 = vtanh.pop %v3460
    %v3462 = vsub.f32 1.0, %v3457
    %v3463 = vmul.f32 %v3462, %v3461
    %v3464 = vmul.f32 %v3457, %v3299
    %v3465 = vadd.f32 %v3463, %v3464
    %v3466 = vld [vmem:[%s9] sm:$0xff]
    %v3467 = vld [vmem:[%s9 + $0x8] sm:$0xff]
    %v3468 = vld [vmem:[%s9 + $0x10] sm:$0xff]
    %v3469 = vld [vmem:[%s9 + $0x18] sm:$0xff]
    %v3470 = vld [vmem:[%s9 + $0x20] sm:$0xff]
    %v3471 = vld [vmem:[%s9 + $0x28] sm:$0xff]
    %v3472 = vld [vmem:[%s9 + $0x30] sm:$0xff]
    %v3473 = vld [vmem:[%s9 + $0x38] sm:$0xff]
    %v3474 = vld [vmem:[%s9 + $0x40] sm:$0xff]
    %v3475 = vld [vmem:[%s9 + $0x48] sm:$0xff]
    %v3476 = vld [vmem:[%s9 + $0x50] sm:$0xff]
    %v3477 = vld [vmem:[%s9 + $0x58] sm:$0xff]
    %v3478 = vld [vmem:[%s9 + $0x60] sm:$0xff]
    %v3479 = vld [vmem:[%s9 + $0x68] sm:$0xff]
    %v3480 = vld [vmem:[%s9 + $0x70] sm:$0xff]
    %v3481 = vld [vmem:[%s9 + $0x78] sm:$0xff]
    %v3482 = vld [vmem:[%s10] sm:$0x1]
    %v3484 = vlaneseq
    %v3485 = vshrl.u32 %v3484, 7
    %v3486 = vsub.s32 0, %v3485
    %v3487 = vrot.slane %v3482, %v3486
    %3489 = vmatprep.subr.mxu0 0.0
    %3490 = vmatpush1.msra.mxu0 %v3466
    %3491 = vmatprep.subr.mxu0 0.0
    %3492 = vmatpush1.msra.mxu0 %v3467
    %3493 = vmatprep.subr.mxu0 0.0
    %3494 = vmatpush1.msra.mxu0 %v3468
    %3495 = vmatprep.subr.mxu0 0.0
    %3496 = vmatpush1.msra.mxu0 %v3469
    %3497 = vmatprep.subr.mxu0 0.0
    %3498 = vmatpush1.msra.mxu0 %v3470
    %3499 = vmatprep.subr.mxu0 0.0
    %3500 = vmatpush1.msra.mxu0 %v3471
    %3501 = vmatprep.subr.mxu0 0.0
    %3502 = vmatpush1.msra.mxu0 %v3472
    %3503 = vmatprep.subr.mxu0 0.0
    %3504 = vmatpush1.msra.mxu0 %v3473
    %3505 = vmatprep.subr.mxu0 0.0
    %3506 = vmatpush1.msra.mxu0 %v3474
    %3507 = vmatprep.subr.mxu0 0.0
    %3508 = vmatpush1.msra.mxu0 %v3475
    %3509 = vmatprep.subr.mxu0 0.0
    %3510 = vmatpush1.msra.mxu0 %v3476
    %3511 = vmatprep.subr.mxu0 0.0
    %3512 = vmatpush1.msra.mxu0 %v3477
    %3513 = vmatprep.subr.mxu0 0.0
    %3514 = vmatpush1.msra.mxu0 %v3478
    %3515 = vmatprep.subr.mxu0 0.0
    %3516 = vmatpush1.msra.mxu0 %v3479
    %3517 = vmatprep.subr.mxu0 0.0
    %3518 = vmatpush1.msra.mxu0 %v3480
    %3519 = vmatprep.subr.mxu0 0.0
    %3520 = vmatpush1.msra.mxu0 %v3481
    %3521 = vmatprep.subr.mxu0 0.0
    %3522 = vmatpush1.msra.mxu0 0.0
    %3523 = vmatprep.subr.mxu0 0.0
    %3524 = vmatpush1.msra.mxu0 0.0
    %3525 = vmatprep.subr.mxu0 0.0
    %3526 = vmatpush1.msra.mxu0 0.0
    %3527 = vmatprep.subr.mxu0 0.0
    %3528 = vmatpush1.msra.mxu0 0.0
    %3529 = vmatprep.subr.mxu0 0.0
    %3530 = vmatpush1.msra.mxu0 0.0
    %3531 = vmatprep.subr.mxu0 0.0
    %3532 = vmatpush1.msra.mxu0 0.0
    %3533 = vmatprep.subr.mxu0 0.0
    %3534 = vmatpush1.msra.mxu0 0.0
    %3535 = vmatprep.subr.mxu0 0.0
    %3536 = vmatpush1.msra.mxu0 0.0
    %3537 = vmatprep.subr.mxu0 0.0
    %3538 = vmatpush1.msra.mxu0 0.0
    %3539 = vmatprep.subr.mxu0 0.0
    %3540 = vmatpush1.msra.mxu0 0.0
    %3541 = vmatprep.subr.mxu0 0.0
    %3542 = vmatpush1.msra.mxu0 0.0
    %3543 = vmatprep.subr.mxu0 0.0
    %3544 = vmatpush1.msra.mxu0 0.0
    %3545 = vmatprep.subr.mxu0 0.0
    %3546 = vmatpush1.msra.mxu0 0.0
    %3547 = vmatprep.subr.mxu0 0.0
    %3548 = vmatpush1.msra.mxu0 0.0
    %3549 = vmatprep.subr.mxu0 0.0
    %3550 = vmatpush1.msra.mxu0 0.0
    %3551 = vmatprep.subr.mxu0 0.0
    %3552 = vmatpush1.msra.mxu0 0.0
    %3553 = vmatprep.mubr.f32.mxu0 0.0
    %3554 = vmatmul.mubr.f32.gmra.mrb[0].mxu0 %v3465
    %v3555 = vpop.f32.mrb[0].mxu0
    %v3556 = vadd.f32 %v3487, %v3555
    %v3557 = vpop.f32.mrb[0].mxu0
    %3558 = vdwg.mxu0
    %vm3559 = vcmask 31744
    %3560 = vst.msk [vmem:[%s11] sm:$0xff] %vm3559, %v3556
    // Predicated region
    $region58: #{gru_forward.1} parent=1 // pred_check
      _
    $region59: #{gru_forward.1} parent=1 // pred_check_branch
      %3562 = sbr.rel (0) target = $region61
    $region60: #{gru_forward.1} parent=1 // pred_region
      _
    $region61: #{gru_forward.1} parent=1 // pred_fallthru
      _
    // Predicated region
    $region62: #{gru_forward.1} parent=1 // pred_check
      _
    $region63: #{gru_forward.1} parent=1 // pred_check_branch
      %3564 = sbr.rel (0) target = $region65
    $region64: #{gru_forward.1} parent=1 // pred_region
      _
    $region65: #{gru_forward.1} parent=1 // pred_fallthru
      _
    %3565 = vsyncpa [#allocation5], 1
    %3566 = vsyncpa [#allocation7], 1

</llo_original>
